<compile_context>
chip_gen: v7x
topology: tpu7x:2x2x1
jax: 0.10.0
libtpu: 0.0.40
codegen_flags: <defaults>
</compile_context>

<pallas_src>
import functools

import jax
import jax.numpy as jnp
from jax.experimental import pallas as pl
from jax.experimental.pallas import tpu as pltpu


def _round_up(v, m):
    return -(-v // m) * m


# ----------------------------------------------------------------------------
# Pallas kernel: one row-block of the phase-space output per grid step
# ----------------------------------------------------------------------------
def _phase_conv_kernel(x_ref, w_ref, b_ref, o_ref, *, nKh, nKw, Wpad, sub_align):
    # x_ref: (1, Hpad*Wpad, C2)  padded, spatially-flattened image for batch n
    # w_ref: (nTaps, C2, Npad)   per-tap phase-fused weights (N dim zero-padded to 128k)
    # b_ref: (1, Npad)           bias (f32, zero in padding columns)
    # o_ref: (1, M, Npad)        M = rows_per_block * Wpad phase-space pixels
    M = o_ref.shape[1]
    Npad = o_ref.shape[2]
    row_base = pl.program_id(1) * M          # multiple of Wpad (itself sublane-aligned)

    acc = jnp.zeros((M, Npad), jnp.float32)
    k = 0
    for mm in range(nKh):                    # static tap loop: ceil(kH/sH)*ceil(kW/sW) taps
        for ll in range(nKw):
            # row_base + mm*Wpad is a true multiple of sub_align (Wpad is padded to it);
            # only the small per-tap ll offset is unaligned.
            base = pl.multiple_of(row_base + mm * Wpad, sub_align)
            tap = x_ref[0, pl.ds(base + ll, M), :]            # (M, C2) contiguous slice
            acc = acc + jnp.dot(tap, w_ref[k],
                                preferred_element_type=jnp.float32)
            k += 1
    # TODO(synk): for very large Kdim (nTaps*C2 >= 128 with big C2) a packed im2col slab
    # feeding one big-K matmul would raise MXU utilization; not needed at these sizes.
    o_ref[0, :, :] = (acc + b_ref[...]).astype(o_ref.dtype)


# ----------------------------------------------------------------------------
# Weight preparation: phase-decomposed, flipped, per-tap matmul-shaped weights
# ----------------------------------------------------------------------------
def _build_phase_weights(w_comb, b_comb, sH, sW, nKh, nKw, n_pad):
    # w_comb: (C2, O2, kH, kW) -> w_taps: (nTaps, C2, Npad), b_all: (Npad,)
    # Column order within the fused N dim is (phase_y, phase_x, [real|imag], Cout).
    C2, O2, kH, kW = w_comb.shape
    P = sH * sW
    zero = jnp.zeros((C2, O2), w_comb.dtype)
    taps = []
    for mm in range(nKh):
        for ll in range(nKw):
            blocks = []
            for py in range(sH):
                for px in range(sW):
                    kh = py + sH * (nKh - 1 - mm)
                    kw = px + sW * (nKw - 1 - ll)
                    blocks.append(w_comb[:, :, kh, kw]
                                  if (kh < kH and kw < kW) else zero)
            taps.append(jnp.concatenate(blocks, axis=1))       # (C2, P*O2)
    w_taps = jnp.stack(taps, axis=0)                           # (nTaps, C2, P*O2)
    b_all = jnp.tile(b_comb, P)                                # (P*O2,)
    pad = n_pad - P * O2                                       # lane-dense N padding
    if pad:
        w_taps = jnp.pad(w_taps, ((0, 0), (0, 0), (0, pad)))
        b_all = jnp.pad(b_all, (0, pad))
    return w_taps, b_all


# ----------------------------------------------------------------------------
# Wrapper reproducing ComplexConvTrans2D.forward
# ----------------------------------------------------------------------------
def complex_conv_trans2d(x, w_r, b_r, w_i, b_i, stride, out_pad,
                         *, compute_dtype=jnp.bfloat16):
    # x: (N, Cin, H, W, 2) float32
    # w_*: (Cin, Cout, kH, kW)   (PyTorch ConvTranspose2d weight layout),  b_*: (Cout,)
    N, Cin, H, W, _ = x.shape
    Cout = w_r.shape[1]
    kH, kW = w_r.shape[2], w_r.shape[3]
    sH, sW = stride
    opH, opW = out_pad
    Hout = (H - 1) * sH + kH + opH
    Wout = (W - 1) * sW + kW + opW

    C2, O2 = 2 * Cin, 2 * Cout
    P = sH * sW
    nKh, nKw = -(-kH // sH), -(-kW // sW)        # taps per phase (ceil)
    nTaps = nKh * nKw
    Hq, Wq = -(-Hout // sH), -(-Wout // sW)      # phase-space output size

    lane = 128
    sub_align = 16 if jnp.dtype(compute_dtype) == jnp.dtype(jnp.bfloat16) else 8
    Npad = _round_up(P * O2, lane)               # lane-dense fused output channels
    Wpad = _round_up(Wq + nKw - 1, sub_align)    # sublane-aligned tap starts

    # ---- adaptive row blocking under a per-generation VMEM budget ------------
    try:
        vmem_cap = int(getattr(pltpu.get_tpu_info(), "vmem_capacity_bytes", 64 << 20))
    except Exception:                            # conservative fallback (v7x-sized)
        vmem_cap = 64 << 20
    vmem_cap = max(vmem_cap, 64 << 20)
    cbytes = jnp.dtype(compute_dtype).itemsize

    target_m = 1024                              # ~512-2048 rows per store amortizes step cost
    rows_per_block = max(1, min(Hq, max(1, target_m // Wpad)))
    if (N % 2 == 1) and Hq >= 2:
        # v7x: keep >= 2 balanced parallel blocks so neither TensorCore idles.
        rows_per_block = min(rows_per_block, -(-Hq // 2))

    def _vmem_need(rpb):
        nrb = -(-Hq // rpb)
        hpad = nrb * rpb + nKh
        m = rpb * Wpad
        img = hpad * Wpad * lane * cbytes        # image block, lane-padded (C2 < 128)
        outb = m * Npad * 4                      # f32 output block
        wgt = nTaps * _round_up(C2, sub_align) * Npad * cbytes
        acc = m * Npad * 4
        # worst case: image + output double-buffered
        return 2 * img + 2 * outb + acc + wgt + (2 << 20)

    budget = int(0.75 * vmem_cap)
    while rows_per_block > 1 and _vmem_need(rows_per_block) > budget:
        rows_per_block = max(1, rows_per_block // 2)

    n_row_blocks = -(-Hq // rows_per_block)
    HqP = n_row_blocks * rows_per_block
    Hpad = HqP + nKh            # (nKh-1) halo rows + 1 extra so every tap slice is in-bounds
    M = rows_per_block * Wpad
    vmem_limit = int(min(max(_vmem_need(rows_per_block) + (4 << 20), 32 << 20),
                         vmem_cap - (8 << 20)))

    # ---- fuse the four transposed convolutions into one (2Cin -> 2Cout) conv --
    #   real out: real*Wr + imag*Wi   (bias b_r + b_i)
    #   imag out: imag*Wr - real*Wi   (bias b_r - b_i)
    w_comb = jnp.concatenate(
        [jnp.concatenate([w_r, w_i], axis=0),
         jnp.concatenate([-w_i, w_r], axis=0)], axis=1)        # (2Cin, 2Cout, kH, kW)
    b_comb = jnp.concatenate([b_r + b_i, b_r - b_i])           # (2Cout,)
    w_taps, b_all = _build_phase_weights(w_comb, b_comb, sH, sW, nKh, nKw, Npad)
    w_taps = w_taps.astype(compute_dtype)
    b2 = b_all.reshape(1, Npad).astype(jnp.float32)

    # NCHW(+complex) -> NHWC with channels [real..., imag...]; single pad (no dilated
    # intermediate); flatten spatial dims so in-kernel taps are contiguous 2-D slices.
    x_nhwc = jnp.transpose(jnp.concatenate([x[..., 0], x[..., 1]], axis=1),
                           (0, 2, 3, 1)).astype(compute_dtype)              # (N, H, W, C2)
    top, left = nKh - 1, nKw - 1
    xp = jnp.pad(x_nhwc,
                 ((0, 0), (top, Hpad - top - H), (left, Wpad - left - W), (0, 0)))
    xflat = xp.reshape(N, Hpad * Wpad, C2)

    kernel = functools.partial(_phase_conv_kernel, nKh=nKh, nKw=nKw, Wpad=Wpad,
                               sub_align=sub_align)

    # TODO(synk): for images too large for whole-image-in-VMEM, row-tile xflat with a
    # (nKh-1)-row halo via manual DMA (BlockSpec cannot express overlapping blocks).
    def _call(x_spec):
        return pl.pallas_call(
            kernel,
            out_shape=jax.ShapeDtypeStruct((N, HqP * Wpad, Npad), jnp.float32),
            grid=(N, n_row_blocks),
            in_specs=[
                x_spec,
                pl.BlockSpec((nTaps, C2, Npad), lambda n, r: (0, 0, 0)),
                pl.BlockSpec((1, Npad), lambda n, r: (0, 0)),
            ],
            out_specs=pl.BlockSpec((1, M, Npad), lambda n, r: (n, r, 0)),
            compiler_params=pltpu.CompilerParams(
                dimension_semantics=("parallel", "parallel"),
                vmem_limit_bytes=vmem_limit),
        )(xflat, w_taps, b2)

    # The image block index only changes with the batch axis, so single-buffer it
    # (halves its VMEM footprint -- matters most on v7x's 64 MiB).  Fall back to the
    # default double-buffered spec if this jax version rejects pipeline_mode/Buffered(1).
    try:
        res = _call(pl.BlockSpec((1, Hpad * Wpad, C2), lambda n, r: (n, 0, 0),
                                 pipeline_mode=pl.Buffered(1)))
    except Exception:
        res = _call(pl.BlockSpec((1, Hpad * Wpad, C2), lambda n, r: (n, 0, 0)))

    # De-interleave: fused columns are ordered (py, px, real/imag, Cout), so one
    # transpose + reshape yields the PyTorch (N, Cout, Hout, Wout, 2) layout.
    # NOTE: phase-space columns q >= Wq hold halo/row-wrap garbage by construction and
    # MUST be cropped here (the [:, :Hq, :Wq] slice), as must the zero N-padding columns.
    res = res[:, :, :P * O2].reshape(N, HqP, Wpad, sH, sW, 2, Cout)[:, :Hq, :Wq]
    out = jnp.transpose(res, (0, 6, 1, 3, 2, 4, 5)).reshape(N, Cout, Hq * sH, Wq * sW, 2)
    return out[:, :, :Hout, :Wout, :]


# ----------------------------------------------------------------------------
# Pure-JAX reference (lax conv with lhs_dilation == ConvTranspose2d)
# ----------------------------------------------------------------------------
def _convt_ref(x, w, b, stride, out_pad):
    kH, kW = w.shape[2], w.shape[3]
    w_flip = jnp.transpose(w[:, :, ::-1, ::-1], (1, 0, 2, 3))  # (Cout, Cin, kH, kW)
    out = jax.lax.conv_general_dilated(
        x, w_flip,
        window_strides=(1, 1),
        padding=[(kH - 1, kH - 1 + out_pad[0]), (kW - 1, kW - 1 + out_pad[1])],
        lhs_dilation=stride,
        dimension_numbers=("NCHW", "OIHW", "NCHW"),
        precision=jax.lax.Precision.HIGHEST)
    return out + b[None, :, None, None]


def _reference_forward(x, w_r, b_r, w_i, b_i, stride, out_pad):
    real, imag = x[..., 0], x[..., 1]
    f = functools.partial(_convt_ref, stride=stride, out_pad=out_pad)
    x_re = f(real, w_r, b_r) + f(imag, w_i, b_i)
    x_im = f(imag, w_r, b_r) - f(real, w_i, b_i)
    return jnp.stack([x_re, x_im], axis=-1)


if __name__ == "__main__":
    # Module hyper-parameters (small, consistent with the PyTorch module)
    N, Cin, Cout = 2, 4, 3
    H = W = 16
    kernel_size = (3, 3)
    stride = (2, 2)
    out_pad = (1, 1)

    key = jax.random.PRNGKey(0)
    k1, k2, k3, k4, k5 = jax.random.split(key, 5)

    # Deterministic synthetic parameters (ConvTranspose2d weight: (Cin, Cout, kH, kW))
    w_r = 0.1 * jax.random.normal(k1, (Cin, Cout) + kernel_size, jnp.float32)
    b_r = 0.1 * jax.random.normal(k2, (Cout,), jnp.float32)
    w_i = 0.1 * jax.random.normal(k3, (Cin, Cout) + kernel_size, jnp.float32)
    b_i = 0.1 * jax.random.normal(k4, (Cout,), jnp.float32)

    # Input: (N, Cin, H, W, 2) — NCHW with trailing real/imag dim, like the PyTorch module.
    x = jax.random.normal(k5, (N, Cin, H, W, 2), jnp.float32)

    Hout = (H - 1) * stride[0] + kernel_size[0] + out_pad[0]
    Wout = (W - 1) * stride[1] + kernel_size[1] + out_pad[1]

    ref = jax.block_until_ready(
        _reference_forward(x, w_r, b_r, w_i, b_i, stride, out_pad))

    # Float32 compute path: tight tolerance against the lax reference.
    out_f32 = jax.block_until_ready(
        complex_conv_trans2d(x, w_r, b_r, w_i, b_i, stride, out_pad,
                             compute_dtype=jnp.float32))
    assert out_f32.shape == (N, Cout, Hout, Wout, 2), out_f32.shape
    assert jnp.allclose(out_f32, ref, atol=1e-3, rtol=1e-3), \
        float(jnp.max(jnp.abs(out_f32 - ref)))

    # Default bfloat16 compute path (MXU-rate inputs, f32 accumulation): looser tolerance.
    out_bf16 = jax.block_until_ready(
        complex_conv_trans2d(x, w_r, b_r, w_i, b_i, stride, out_pad))
    assert out_bf16.shape == (N, Cout, Hout, Wout, 2), out_bf16.shape
    assert jnp.allclose(out_bf16, ref, atol=6e-2, rtol=6e-2), \
        float(jnp.max(jnp.abs(out_bf16 - ref)))

    print("KERNEL_OK")
</pallas_src>

<mosaic_0001>
module attributes {stable_mosaic.version = 11 : i64} {
  func.func @_phase_conv_kernel(%arg0: i32, %arg1: i32, %arg2: memref<1x456x8xf32, #tpu.memory_space<vmem>>, %arg3: memref<4x8x128xf32, #tpu.memory_space<vmem>>, %arg4: memref<1x128xf32, #tpu.memory_space<vmem>>, %arg5: memref<1x408x128xf32, #tpu.memory_space<vmem>>) attributes {dimension_semantics = [#tpu.dimension_semantics<parallel>, #tpu.dimension_semantics<parallel>], iteration_bounds = array<i64: 2, 1>, scalar_prefetch = 0 : i64, scratch_operands = 0 : i64, tpu.core_type = #tpu.core_type<tc>, window_params = [{pipeline_mode = #tpu.pipeline_mode<synchronous>, transform_indices = @transform_0, window_bounds = array<i64: 1, 456, 8>}, {pipeline_mode = #tpu.pipeline_mode<synchronous>, transform_indices = @transform_1, window_bounds = array<i64: 4, 8, 128>}, {pipeline_mode = #tpu.pipeline_mode<synchronous>, transform_indices = @transform_2, window_bounds = array<i64: 1, 128>}, {transform_indices = @transform_3, window_bounds = array<i64: 1, 408, 128>}]} {
    %c408_i32 = arith.constant 408 : i32
    %0 = arith.muli %arg1, %c408_i32 : i32
    %cst = arith.constant 0.000000e+00 : f32
    %1 = vector.broadcast %cst : f32 to vector<408x128xf32>
    %c0_i32 = arith.constant 0 : i32
    %2 = arith.addi %0, %c0_i32 : i32
    %3 = tpu.assume_multiple %2, 8 : i32
    %c0_i32_0 = arith.constant 0 : i32
    %4 = arith.addi %3, %c0_i32_0 : i32
    %c0 = arith.constant 0 : index
    %5 = arith.index_cast %4 : i32 to index
    %c0_1 = arith.constant 0 : index
    %6 = vector.load %arg2[%c0, %5, %c0_1] : memref<1x456x8xf32, #tpu.memory_space<vmem>>, vector<1x408x8xf32>
    %7 = vector.shape_cast %6 : vector<1x408x8xf32> to vector<408x8xf32>
    %c0_2 = arith.constant 0 : index
    %c0_3 = arith.constant 0 : index
    %c0_4 = arith.constant 0 : index
    %8 = vector.load %arg3[%c0_2, %c0_3, %c0_4] : memref<4x8x128xf32, #tpu.memory_space<vmem>>, vector<1x8x128xf32>
    %9 = vector.shape_cast %8 : vector<1x8x128xf32> to vector<8x128xf32>
    %cst_5 = arith.constant dense<0.000000e+00> : vector<408x128xf32>
    %10 = tpu.matmul %7, %9, %cst_5 {dimension_numbers = #tpu.dot_dimension_numbers<[1], [0], [0], [1], [0, 0, 1, 1], [], []>} : vector<408x8xf32>, vector<8x128xf32>, vector<408x128xf32> -> vector<408x128xf32>
    %11 = arith.addf %1, %10 : vector<408x128xf32>
    %c0_i32_6 = arith.constant 0 : i32
    %12 = arith.addi %0, %c0_i32_6 : i32
    %13 = tpu.assume_multiple %12, 8 : i32
    %c1_i32 = arith.constant 1 : i32
    %14 = arith.addi %13, %c1_i32 : i32
    %c0_7 = arith.constant 0 : index
    %15 = arith.index_cast %14 : i32 to index
    %c0_8 = arith.constant 0 : index
    %16 = vector.load %arg2[%c0_7, %15, %c0_8] : memref<1x456x8xf32, #tpu.memory_space<vmem>>, vector<1x408x8xf32>
    %17 = vector.shape_cast %16 : vector<1x408x8xf32> to vector<408x8xf32>
    %c1 = arith.constant 1 : index
    %c0_9 = arith.constant 0 : index
    %c0_10 = arith.constant 0 : index
    %18 = vector.load %arg3[%c1, %c0_9, %c0_10] : memref<4x8x128xf32, #tpu.memory_space<vmem>>, vector<1x8x128xf32>
    %19 = vector.shape_cast %18 : vector<1x8x128xf32> to vector<8x128xf32>
    %cst_11 = arith.constant dense<0.000000e+00> : vector<408x128xf32>
    %20 = tpu.matmul %17, %19, %cst_11 {dimension_numbers = #tpu.dot_dimension_numbers<[1], [0], [0], [1], [0, 0, 1, 1], [], []>} : vector<408x8xf32>, vector<8x128xf32>, vector<408x128xf32> -> vector<408x128xf32>
    %21 = arith.addf %11, %20 : vector<408x128xf32>
    %c24_i32 = arith.constant 24 : i32
    %22 = arith.addi %0, %c24_i32 : i32
    %23 = tpu.assume_multiple %22, 8 : i32
    %c0_i32_12 = arith.constant 0 : i32
    %24 = arith.addi %23, %c0_i32_12 : i32
    %c0_13 = arith.constant 0 : index
    %25 = arith.index_cast %24 : i32 to index
    %c0_14 = arith.constant 0 : index
    %26 = vector.load %arg2[%c0_13, %25, %c0_14] : memref<1x456x8xf32, #tpu.memory_space<vmem>>, vector<1x408x8xf32>
    %27 = vector.shape_cast %26 : vector<1x408x8xf32> to vector<408x8xf32>
    %c2 = arith.constant 2 : index
    %c0_15 = arith.constant 0 : index
    %c0_16 = arith.constant 0 : index
    %28 = vector.load %arg3[%c2, %c0_15, %c0_16] : memref<4x8x128xf32, #tpu.memory_space<vmem>>, vector<1x8x128xf32>
    %29 = vector.shape_cast %28 : vector<1x8x128xf32> to vector<8x128xf32>
    %cst_17 = arith.constant dense<0.000000e+00> : vector<408x128xf32>
    %30 = tpu.matmul %27, %29, %cst_17 {dimension_numbers = #tpu.dot_dimension_numbers<[1], [0], [0], [1], [0, 0, 1, 1], [], []>} : vector<408x8xf32>, vector<8x128xf32>, vector<408x128xf32> -> vector<408x128xf32>
    %31 = arith.addf %21, %30 : vector<408x128xf32>
    %c24_i32_18 = arith.constant 24 : i32
    %32 = arith.addi %0, %c24_i32_18 : i32
    %33 = tpu.assume_multiple %32, 8 : i32
    %c1_i32_19 = arith.constant 1 : i32
    %34 = arith.addi %33, %c1_i32_19 : i32
    %c0_20 = arith.constant 0 : index
    %35 = arith.index_cast %34 : i32 to index
    %c0_21 = arith.constant 0 : index
    %36 = vector.load %arg2[%c0_20, %35, %c0_21] : memref<1x456x8xf32, #tpu.memory_space<vmem>>, vector<1x408x8xf32>
    %37 = vector.shape_cast %36 : vector<1x408x8xf32> to vector<408x8xf32>
    %c3 = arith.constant 3 : index
    %c0_22 = arith.constant 0 : index
    %c0_23 = arith.constant 0 : index
    %38 = vector.load %arg3[%c3, %c0_22, %c0_23] : memref<4x8x128xf32, #tpu.memory_space<vmem>>, vector<1x8x128xf32>
    %39 = vector.shape_cast %38 : vector<1x8x128xf32> to vector<8x128xf32>
    %cst_24 = arith.constant dense<0.000000e+00> : vector<408x128xf32>
    %40 = tpu.matmul %37, %39, %cst_24 {dimension_numbers = #tpu.dot_dimension_numbers<[1], [0], [0], [1], [0, 0, 1, 1], [], []>} : vector<408x8xf32>, vector<8x128xf32>, vector<408x128xf32> -> vector<408x128xf32>
    %41 = arith.addf %31, %40 : vector<408x128xf32>
    %c0_25 = arith.constant 0 : index
    %c0_26 = arith.constant 0 : index
    %42 = vector.load %arg4[%c0_25, %c0_26] : memref<1x128xf32, #tpu.memory_space<vmem>>, vector<1x128xf32>
    %43 = vector.broadcast %42 : vector<1x128xf32> to vector<408x128xf32>
    %44 = arith.addf %41, %43 : vector<408x128xf32>
    %c0_27 = arith.constant 0 : index
    %c0_28 = arith.constant 0 : index
    %c0_29 = arith.constant 0 : index
    %45 = vector.load %arg5[%c0_27, %c0_28, %c0_29] : memref<1x408x128xf32, #tpu.memory_space<vmem>>, vector<1x408x128xf32>
    %46 = vector.shape_cast %45 : vector<1x408x128xf32> to vector<408x128xf32>
    %47 = vector.shape_cast %44 : vector<408x128xf32> to vector<1x408x128xf32>
    tpu.vector_store %arg5[%c0_27, %c0_28, %c0_29], %47 {strides = array<i32>} : memref<1x408x128xf32, #tpu.memory_space<vmem>>, vector<1x408x128xf32>,
    return
  }
  func.func @transform_0(%arg0: i32, %arg1: i32) -> (i32, i32, i32) {
    %c0_i32 = arith.constant 0 : i32
    %c0_i32_0 = arith.constant 0 : i32
    %c0_i32_1 = arith.constant 0 : i32
    return %arg0, %c0_i32, %c0_i32_0 : i32, i32, i32
  }
  func.func @transform_1(%arg0: i32, %arg1: i32) -> (i32, i32, i32) {
    %c0_i32 = arith.constant 0 : i32
    %c0_i32_0 = arith.constant 0 : i32
    %c0_i32_1 = arith.constant 0 : i32
    %c0_i32_2 = arith.constant 0 : i32
    return %c0_i32, %c0_i32_0, %c0_i32_1 : i32, i32, i32
  }
  func.func @transform_2(%arg0: i32, %arg1: i32) -> (i32, i32) {
    %c0_i32 = arith.constant 0 : i32
    %c0_i32_0 = arith.constant 0 : i32
    %c0_i32_1 = arith.constant 0 : i32
    return %c0_i32, %c0_i32_0 : i32, i32
  }
  func.func @transform_3(%arg0: i32, %arg1: i32) -> (i32, i32, i32) {
    %c0_i32 = arith.constant 0 : i32
    %c0_i32_0 = arith.constant 0 : i32
    return %arg0, %arg1, %c0_i32 : i32, i32, i32
  }
}

module attributes {stable_mosaic.version = 11 : i64} {
  func.func @_phase_conv_kernel(%arg0: i32, %arg1: i32, %arg2: memref<1x456x8xf32, #tpu.memory_space<vmem>>, %arg3: memref<4x8x128xf32, #tpu.memory_space<vmem>>, %arg4: memref<1x128xf32, #tpu.memory_space<vmem>>, %arg5: memref<1x408x128xf32, #tpu.memory_space<vmem>>) attributes {dimension_semantics = [#tpu.dimension_semantics<parallel>, #tpu.dimension_semantics<parallel>], iteration_bounds = array<i64: 2, 1>, scalar_prefetch = 0 : i64, scratch_operands = 0 : i64, tpu.core_type = #tpu.core_type<tc>, window_params = [{transform_indices = @transform_0, window_bounds = array<i64: 1, 456, 8>}, {pipeline_mode = #tpu.pipeline_mode<synchronous>, transform_indices = @transform_1, window_bounds = array<i64: 4, 8, 128>}, {pipeline_mode = #tpu.pipeline_mode<synchronous>, transform_indices = @transform_2, window_bounds = array<i64: 1, 128>}, {transform_indices = @transform_3, window_bounds = array<i64: 1, 408, 128>}]} {
    %c408_i32 = arith.constant 408 : i32
    %0 = arith.muli %arg1, %c408_i32 : i32
    %cst = arith.constant 0.000000e+00 : f32
    %1 = vector.broadcast %cst : f32 to vector<408x128xf32>
    %c0_i32 = arith.constant 0 : i32
    %2 = arith.addi %0, %c0_i32 : i32
    %3 = tpu.assume_multiple %2, 8 : i32
    %c0_i32_0 = arith.constant 0 : i32
    %4 = arith.addi %3, %c0_i32_0 : i32
    %c0 = arith.constant 0 : index
    %5 = arith.index_cast %4 : i32 to index
    %c0_1 = arith.constant 0 : index
    %6 = vector.load %arg2[%c0, %5, %c0_1] : memref<1x456x8xf32, #tpu.memory_space<vmem>>, vector<1x408x8xf32>
    %7 = vector.shape_cast %6 : vector<1x408x8xf32> to vector<408x8xf32>
    %c0_2 = arith.constant 0 : index
    %c0_3 = arith.constant 0 : index
    %c0_4 = arith.constant 0 : index
    %8 = vector.load %arg3[%c0_2, %c0_3, %c0_4] : memref<4x8x128xf32, #tpu.memory_space<vmem>>, vector<1x8x128xf32>
    %9 = vector.shape_cast %8 : vector<1x8x128xf32> to vector<8x128xf32>
    %cst_5 = arith.constant dense<0.000000e+00> : vector<408x128xf32>
    %10 = tpu.matmul %7, %9, %cst_5 {dimension_numbers = #tpu.dot_dimension_numbers<[1], [0], [0], [1], [0, 0, 1, 1], [], []>} : vector<408x8xf32>, vector<8x128xf32>, vector<408x128xf32> -> vector<408x128xf32>
    %11 = arith.addf %1, %10 : vector<408x128xf32>
    %c0_i32_6 = arith.constant 0 : i32
    %12 = arith.addi %0, %c0_i32_6 : i32
    %13 = tpu.assume_multiple %12, 8 : i32
    %c1_i32 = arith.constant 1 : i32
    %14 = arith.addi %13, %c1_i32 : i32
    %c0_7 = arith.constant 0 : index
    %15 = arith.index_cast %14 : i32 to index
    %c0_8 = arith.constant 0 : index
    %16 = vector.load %arg2[%c0_7, %15, %c0_8] : memref<1x456x8xf32, #tpu.memory_space<vmem>>, vector<1x408x8xf32>
    %17 = vector.shape_cast %16 : vector<1x408x8xf32> to vector<408x8xf32>
    %c1 = arith.constant 1 : index
    %c0_9 = arith.constant 0 : index
    %c0_10 = arith.constant 0 : index
    %18 = vector.load %arg3[%c1, %c0_9, %c0_10] : memref<4x8x128xf32, #tpu.memory_space<vmem>>, vector<1x8x128xf32>
    %19 = vector.shape_cast %18 : vector<1x8x128xf32> to vector<8x128xf32>
    %cst_11 = arith.constant dense<0.000000e+00> : vector<408x128xf32>
    %20 = tpu.matmul %17, %19, %cst_11 {dimension_numbers = #tpu.dot_dimension_numbers<[1], [0], [0], [1], [0, 0, 1, 1], [], []>} : vector<408x8xf32>, vector<8x128xf32>, vector<408x128xf32> -> vector<408x128xf32>
    %21 = arith.addf %11, %20 : vector<408x128xf32>
    %c24_i32 = arith.constant 24 : i32
    %22 = arith.addi %0, %c24_i32 : i32
    %23 = tpu.assume_multiple %22, 8 : i32
    %c0_i32_12 = arith.constant 0 : i32
    %24 = arith.addi %23, %c0_i32_12 : i32
    %c0_13 = arith.constant 0 : index
    %25 = arith.index_cast %24 : i32 to index
    %c0_14 = arith.constant 0 : index
    %26 = vector.load %arg2[%c0_13, %25, %c0_14] : memref<1x456x8xf32, #tpu.memory_space<vmem>>, vector<1x408x8xf32>
    %27 = vector.shape_cast %26 : vector<1x408x8xf32> to vector<408x8xf32>
    %c2 = arith.constant 2 : index
    %c0_15 = arith.constant 0 : index
    %c0_16 = arith.constant 0 : index
    %28 = vector.load %arg3[%c2, %c0_15, %c0_16] : memref<4x8x128xf32, #tpu.memory_space<vmem>>, vector<1x8x128xf32>
    %29 = vector.shape_cast %28 : vector<1x8x128xf32> to vector<8x128xf32>
    %cst_17 = arith.constant dense<0.000000e+00> : vector<408x128xf32>
    %30 = tpu.matmul %27, %29, %cst_17 {dimension_numbers = #tpu.dot_dimension_numbers<[1], [0], [0], [1], [0, 0, 1, 1], [], []>} : vector<408x8xf32>, vector<8x128xf32>, vector<408x128xf32> -> vector<408x128xf32>
    %31 = arith.addf %21, %30 : vector<408x128xf32>
    %c24_i32_18 = arith.constant 24 : i32
    %32 = arith.addi %0, %c24_i32_18 : i32
    %33 = tpu.assume_multiple %32, 8 : i32
    %c1_i32_19 = arith.constant 1 : i32
    %34 = arith.addi %33, %c1_i32_19 : i32
    %c0_20 = arith.constant 0 : index
    %35 = arith.index_cast %34 : i32 to index
    %c0_21 = arith.constant 0 : index
    %36 = vector.load %arg2[%c0_20, %35, %c0_21] : memref<1x456x8xf32, #tpu.memory_space<vmem>>, vector<1x408x8xf32>
    %37 = vector.shape_cast %36 : vector<1x408x8xf32> to vector<408x8xf32>
    %c3 = arith.constant 3 : index
    %c0_22 = arith.constant 0 : index
    %c0_23 = arith.constant 0 : index
    %38 = vector.load %arg3[%c3, %c0_22, %c0_23] : memref<4x8x128xf32, #tpu.memory_space<vmem>>, vector<1x8x128xf32>
    %39 = vector.shape_cast %38 : vector<1x8x128xf32> to vector<8x128xf32>
    %cst_24 = arith.constant dense<0.000000e+00> : vector<408x128xf32>
    %40 = tpu.matmul %37, %39, %cst_24 {dimension_numbers = #tpu.dot_dimension_numbers<[1], [0], [0], [1], [0, 0, 1, 1], [], []>} : vector<408x8xf32>, vector<8x128xf32>, vector<408x128xf32> -> vector<408x128xf32>
    %41 = arith.addf %31, %40 : vector<408x128xf32>
    %c0_25 = arith.constant 0 : index
    %c0_26 = arith.constant 0 : index
    %42 = vector.load %arg4[%c0_25, %c0_26] : memref<1x128xf32, #tpu.memory_space<vmem>>, vector<1x128xf32>
    %43 = vector.broadcast %42 : vector<1x128xf32> to vector<408x128xf32>
    %44 = arith.addf %41, %43 : vector<408x128xf32>
    %c0_27 = arith.constant 0 : index
    %c0_28 = arith.constant 0 : index
    %c0_29 = arith.constant 0 : index
    %45 = vector.load %arg5[%c0_27, %c0_28, %c0_29] : memref<1x408x128xf32, #tpu.memory_space<vmem>>, vector<1x408x128xf32>
    %46 = vector.shape_cast %45 : vector<1x408x128xf32> to vector<408x128xf32>
    %47 = vector.shape_cast %44 : vector<408x128xf32> to vector<1x408x128xf32>
    tpu.vector_store %arg5[%c0_27, %c0_28, %c0_29], %47 {strides = array<i32>} : memref<1x408x128xf32, #tpu.memory_space<vmem>>, vector<1x408x128xf32>,
    return
  }
  func.func @transform_0(%arg0: i32, %arg1: i32) -> (i32, i32, i32) {
    %c0_i32 = arith.constant 0 : i32
    %c0_i32_0 = arith.constant 0 : i32
    %c0_i32_1 = arith.constant 0 : i32
    return %arg0, %c0_i32, %c0_i32_0 : i32, i32, i32
  }
  func.func @transform_1(%arg0: i32, %arg1: i32) -> (i32, i32, i32) {
    %c0_i32 = arith.constant 0 : i32
    %c0_i32_0 = arith.constant 0 : i32
    %c0_i32_1 = arith.constant 0 : i32
    %c0_i32_2 = arith.constant 0 : i32
    return %c0_i32, %c0_i32_0, %c0_i32_1 : i32, i32, i32
  }
  func.func @transform_2(%arg0: i32, %arg1: i32) -> (i32, i32) {
    %c0_i32 = arith.constant 0 : i32
    %c0_i32_0 = arith.constant 0 : i32
    %c0_i32_1 = arith.constant 0 : i32
    return %c0_i32, %c0_i32_0 : i32, i32
  }
  func.func @transform_3(%arg0: i32, %arg1: i32) -> (i32, i32, i32) {
    %c0_i32 = arith.constant 0 : i32
    %c0_i32_0 = arith.constant 0 : i32
    return %arg0, %arg1, %c0_i32 : i32, i32, i32
  }
}

</mosaic_0001>

<llo_original>
// kernel: tpu_custom_call.1
$region0: #{tpu_custom_call.1}
  #allocation0 [shape = 'u32[]', space=smem, size = 0x4, offset = 0x4, fixed_abs, tag = 'smem constant byte address 0x4 - core index']
  #allocation1 [shape = 'u32[144,128]{1,0:T(1,128)}', space=vmem, size = 0x12000, scoped, tag = 'internal scratch']
  %s0 = inlined_call_operand.vmem [shape: f32[2,456,8], index: 0, kind: input, shape index: {}]
  %s1 = inlined_call_operand.vmem [shape: f32[4,8,128], index: 1, kind: input, shape index: {}]
  %s2 = inlined_call_operand.vmem [shape: f32[1,128], index: 2, kind: input, shape index: {}]
  %s3 = inlined_call_operand.hbm [shape: f32[2,408,128], index: 3, kind: output, shape index: {}]
  %s4 = sld [smem:[#allocation0]]
  $region45: #{tpu_custom_call.1} parent=0
    _
  %s6 = ssub.s32 1, %s4
  %s7 = scalar_select 0, %s6, %s4
  $region1: #{tpu_custom_call.1} parent=0
    #allocation2 [shape = 'u8[417792]{0}', space=vmem, size = 0x66000, scoped, tag = 'output window, operand 0']
    #allocation3 [shape = 's32[2]{0}', space=sflag, size = 0x8, scoped, tag = 'scoped memory for tpu_custom_call.1']
    %8 = vsyncpa [#allocation3], 0
    %s9 = scalar_lea.sflag [#allocation3], 1
    %10 = vsyncpa %s9, 0
    loop: start=0, step=1, limit=4
    $region2: #{tpu_custom_call.1} parent=1 // loop_pre_header
      _
    $region3: #{tpu_custom_call.1} parent=1 // loop_header
      %s12 = sphi 0, %s16
      %p13 = scmp.ge.s32.totalorder %s12, 4
      %s19 = sphi 0, %s31
      %s20 = sphi 0, %s27
      %s21 = sphi 0, %s19
      %s22 = sphi 0, %s20
      %s23 = sphi 0, %s21
      %s24 = sphi 0, %s22
      %s34 = sphi 0, %s36
      %s37 = sphi 0, %s34
      %s38 = sphi 0, %s37
      %s54 = sphi 0, %s38
      %s58 = sphi 0, %s58
      %s60 = sphi 0, %s58
      %s61 = sphi 0, %s60
      %s75 = sphi 0, %s61
      %s79 = sphi 0, %s79
      %s81 = sphi 0, %s79
      %s82 = sphi 0, %s81
      %s96 = sphi 0, %s82
      %s104 = sphi 0, %s106
      %s107 = sphi 0, %s104
      %s108 = sphi 0, %s107
      %s124 = sphi 0, %s108
    $region4: #{tpu_custom_call.1} parent=1 // loop_header_branch
      %15 = sbr.rel (%p13) target = $region8
    $region5: #{tpu_custom_call.1} parent=1 // loop_body
      %s17 = ssub.s32 %s12, 1
      %s18 = ssub.s32 %s12, 2
      %s25 = sadd.s32 1, %s20
      %p26 = scmp.ge.s32.totalorder %s25, 1
      %s27 = scalar_select %p26, 0, %s25
      %s28 = sadd.s32 1, %s19
      %s29 = scalar_select %p26, %s28, %s19
      %p30 = scmp.ge.s32.totalorder %s29, 2
      %s31 = scalar_select %p30, 0, %s29
      %s32 = ssub.s32 %s19, %s31
      %p33 = scmp.eq.s32.totalorder %s32, 0
      %s35 = sadd.s32 %s34, 1
      %s36 = scalar_select %p33, %s34, %s35
      %p39 = pneg %p33
      %p40 = scmp.eq.s32.totalorder %s12, 1
      %p41 = por %p39, %p40
      %p42 = scmp.ne.s32.totalorder %s34, %s37
      %p43 = scmp.eq.s32.totalorder %s12, 0
      %p44 = por %p42, %p43
      %p45 = scmp.ne.s32.totalorder %s34, %s37
      %p46 = scmp.eq.s32.totalorder %s17, 1
      %p47 = por %p45, %p46
      %p48 = scmp.ne.s32.totalorder %s37, %s38
      %p49 = scmp.eq.s32.totalorder %s17, 0
      %p50 = por %p48, %p49
      %p51 = scmp.ne.s32.totalorder %s37, %s38
      %p52 = scmp.eq.s32.totalorder %s18, 1
      %p53 = por %p51, %p52
      %p55 = scmp.ne.s32.totalorder %s38, %s54
      %p56 = scmp.eq.s32.totalorder %s18, 0
      %p57 = por %p55, %p56
      %s59 = sadd.s32 %s58, 1
      %p62 = scmp.eq.s32.totalorder %s12, 1
      %p63 = scmp.ne.s32.totalorder %s58, %s60
      %p64 = scmp.eq.s32.totalorder %s12, 0
      %p65 = por %p63, %p64
      %p66 = scmp.ne.s32.totalorder %s58, %s60
      %p67 = scmp.eq.s32.totalorder %s17, 1
      %p68 = por %p66, %p67
      %p69 = scmp.ne.s32.totalorder %s60, %s61
      %p70 = scmp.eq.s32.totalorder %s17, 0
      %p71 = por %p69, %p70
      %p72 = scmp.ne.s32.totalorder %s60, %s61
      %p73 = scmp.eq.s32.totalorder %s18, 1
      %p74 = por %p72, %p73
      %p76 = scmp.ne.s32.totalorder %s61, %s75
      %p77 = scmp.eq.s32.totalorder %s18, 0
      %p78 = por %p76, %p77
      %s80 = sadd.s32 %s79, 1
      %p83 = scmp.eq.s32.totalorder %s12, 1
      %p84 = scmp.ne.s32.totalorder %s79, %s81
      %p85 = scmp.eq.s32.totalorder %s12, 0
      %p86 = por %p84, %p85
      %p87 = scmp.ne.s32.totalorder %s79, %s81
      %p88 = scmp.eq.s32.totalorder %s17, 1
      %p89 = por %p87, %p88
      %p90 = scmp.ne.s32.totalorder %s81, %s82
      %p91 = scmp.eq.s32.totalorder %s17, 0
      %p92 = por %p90, %p91
      %p93 = scmp.ne.s32.totalorder %s81, %s82
      %p94 = scmp.eq.s32.totalorder %s18, 1
      %p95 = por %p93, %p94
      %p97 = scmp.ne.s32.totalorder %s82, %s96
      %p98 = scmp.eq.s32.totalorder %s18, 0
      %p99 = por %p97, %p98
      %s100 = ssub.s32 %s19, %s31
      %s101 = ssub.s32 %s20, %s27
      %s102 = sor.u32 %s100, %s101
      %p103 = scmp.eq.s32.totalorder %s102, 0
      %s105 = sadd.s32 %s104, 1
      %s106 = scalar_select %p103, %s104, %s105
      %p109 = pneg %p103
      %p110 = scmp.eq.s32.totalorder %s12, 1
      %p111 = por %p109, %p110
      %p112 = scmp.ne.s32.totalorder %s104, %s107
      %p113 = scmp.eq.s32.totalorder %s12, 0
      %p114 = por %p112, %p113
      %p115 = scmp.ne.s32.totalorder %s104, %s107
      %p116 = scmp.eq.s32.totalorder %s17, 1
      %p117 = por %p115, %p116
      %p118 = scmp.ne.s32.totalorder %s107, %s108
      %p119 = scmp.eq.s32.totalorder %s17, 0
      %p120 = por %p118, %p119
      %p121 = scmp.ne.s32.totalorder %s107, %s108
      %p122 = scmp.eq.s32.totalorder %s18, 1
      %p123 = por %p121, %p122
      %p125 = scmp.ne.s32.totalorder %s108, %s124
      %p126 = scmp.eq.s32.totalorder %s18, 0
      %p127 = por %p125, %p126
      %p128 = scmp.le.s32.totalorder 1, %s12
      %p129 = scmp.lt.s32.totalorder %s12, 3
      %p130 = pnand %p128, %p129
      %p131 = pneg %p130
      // Predicated region
      $region9: #{tpu_custom_call.1} parent=5 // pred_check
        _
      $region10: #{tpu_custom_call.1} parent=5 // pred_check_branch
        %133 = sbr.rel (%p130) target = $region12
      $region11: #{tpu_custom_call.1} parent=5 // pred_region
        %s134 = ssub.s32 %s12, 1
        // Predicated region
        $region13: #{tpu_custom_call.1} parent=11 // pred_check
          %p135 = pneg %p50
        $region14: #{tpu_custom_call.1} parent=11 // pred_check_branch
          %137 = sbr.rel (%p135) target = $region16
        $region15: #{tpu_custom_call.1} parent=11 // pred_region
          %p138 = scmp.lt.s32.totalorder %s21, 1
          %s139 = scalar_select %p138, %s21, 1
          %s140 = smul.addr %s139, 57
          %s141 = smul.addr %s140, 8
          %s142 = scalar_lea.vmem %s0, %s141
        $region16: #{tpu_custom_call.1} parent=11 // pred_fallthru
          _
        // Predicated region
        $region17: #{tpu_custom_call.1} parent=11 // pred_check
          %p143 = pneg %p71
        $region18: #{tpu_custom_call.1} parent=11 // pred_check_branch
          %145 = sbr.rel (%p143) target = $region20
        $region19: #{tpu_custom_call.1} parent=11 // pred_region
          _
        $region20: #{tpu_custom_call.1} parent=11 // pred_fallthru
          _
        // Predicated region
        $region21: #{tpu_custom_call.1} parent=11 // pred_check
          %p146 = pneg %p92
        $region22: #{tpu_custom_call.1} parent=11 // pred_check_branch
          %148 = sbr.rel (%p146) target = $region24
        $region23: #{tpu_custom_call.1} parent=11 // pred_region
          _
        $region24: #{tpu_custom_call.1} parent=11 // pred_fallthru
          _
      $region12: #{tpu_custom_call.1} parent=5 // pred_fallthru
        _
      %p149 = scmp.lt.s32.totalorder %s12, 2
      // Predicated region
      $region25: #{tpu_custom_call.1} parent=5 // pred_check
        %p150 = pneg %p149
      $region26: #{tpu_custom_call.1} parent=5 // pred_check_branch
        %152 = sbr.rel (%p150) target = $region28
      $region27: #{tpu_custom_call.1} parent=5 // pred_region
        _
      $region28: #{tpu_custom_call.1} parent=5 // pred_fallthru
        _
      %p153 = scmp.le.s32.totalorder 1, %s12
      %p154 = scmp.lt.s32.totalorder %s12, 3
      %p155 = pnand %p153, %p154
      %p156 = pneg %p155
      // Predicated region
      $region29: #{tpu_custom_call.1} parent=5 // pred_check
        _
      $region30: #{tpu_custom_call.1} parent=5 // pred_check_branch
        %158 = sbr.rel (%p155) target = $region32
      $region31: #{tpu_custom_call.1} parent=5 // pred_region
        %s159 = ssub.s32 %s12, 1
        %p160 = scmp.lt.s32.totalorder %s21, 1
        %s161 = scalar_select %p160, %s21, 1
        %s162 = smul.addr %s161, 57
        %s163 = smul.addr %s162, 8
        %s164 = scalar_lea.vmem %s0, %s163
        %p165 = pneg %p50
        %p166 = pneg %p47
        %p167 = pneg %p71
        %p168 = pneg %p68
        %p169 = pneg %p92
        %p170 = pneg %p89
        %p171 = pneg %p120
        %p172 = pneg %p117
        %s173 = sand.u32 %s107, 1
        %s174 = scalar_lea.sflag [#allocation3], %s173
        %s175 = sand.u32 %s107, 1
        %s176 = smul.addr %s175, 408
        %s177 = scalar_lea.vmem [#allocation2], %s176
        %p178 = scmp.lt.s32.totalorder %s21, 1
        %s179 = scalar_select %p178, %s21, 1
        %s180 = smul.addr %s179, 57
        %s181 = smul.addr %s180, 8
        %s182 = scalar_lea.vmem %s0, %s181
        %s183 = smul.u32 51, %s22
        %s184 = smul.u32 %s22, 408
        %s185 = scalar_lea.vmem %s182, %s184
        %v186 = vld [vmem:[%s185] sm:$0xff]
        %v187 = vld [vmem:[%s185 + $0x8] sm:$0xff]
        %v188 = vld [vmem:[%s185 + $0x10] sm:$0xff]
        %v189 = vld [vmem:[%s185 + $0x18] sm:$0xff]
        %v190 = vld [vmem:[%s185 + $0x20] sm:$0xff]
        %v191 = vld [vmem:[%s185 + $0x28] sm:$0xff]
        %v192 = vld [vmem:[%s185 + $0x30] sm:$0xff]
        %v193 = vld [vmem:[%s185 + $0x38] sm:$0xff]
        %v194 = vld [vmem:[%s185 + $0x40] sm:$0xff]
        %v195 = vld [vmem:[%s185 + $0x48] sm:$0xff]
        %v196 = vld [vmem:[%s185 + $0x50] sm:$0xff]
        %v197 = vld [vmem:[%s185 + $0x58] sm:$0xff]
        %v198 = vld [vmem:[%s185 + $0x60] sm:$0xff]
        %v199 = vld [vmem:[%s185 + $0x68] sm:$0xff]
        %v200 = vld [vmem:[%s185 + $0x70] sm:$0xff]
        %v201 = vld [vmem:[%s185 + $0x78] sm:$0xff]
        %v202 = vld [vmem:[%s185 + $0x80] sm:$0xff]
        %v203 = vld [vmem:[%s185 + $0x88] sm:$0xff]
        %v204 = vld [vmem:[%s185 + $0x90] sm:$0xff]
        %v205 = vld [vmem:[%s185 + $0x98] sm:$0xff]
        %v206 = vld [vmem:[%s185 + $0xa0] sm:$0xff]
        %v207 = vld [vmem:[%s185 + $0xa8] sm:$0xff]
        %v208 = vld [vmem:[%s185 + $0xb0] sm:$0xff]
        %v209 = vld [vmem:[%s185 + $0xb8] sm:$0xff]
        %v210 = vld [vmem:[%s185 + $0xc0] sm:$0xff]
        %v211 = vld [vmem:[%s185 + $0xc8] sm:$0xff]
        %v212 = vld [vmem:[%s185 + $0xd0] sm:$0xff]
        %v213 = vld [vmem:[%s185 + $0xd8] sm:$0xff]
        %v214 = vld [vmem:[%s185 + $0xe0] sm:$0xff]
        %v215 = vld [vmem:[%s185 + $0xe8] sm:$0xff]
        %v216 = vld [vmem:[%s185 + $0xf0] sm:$0xff]
        %v217 = vld [vmem:[%s185 + $0xf8] sm:$0xff]
        %v218 = vld [vmem:[%s185 + $0x100] sm:$0xff]
        %v219 = vld [vmem:[%s185 + $0x108] sm:$0xff]
        %v220 = vld [vmem:[%s185 + $0x110] sm:$0xff]
        %v221 = vld [vmem:[%s185 + $0x118] sm:$0xff]
        %v222 = vld [vmem:[%s185 + $0x120] sm:$0xff]
        %v223 = vld [vmem:[%s185 + $0x128] sm:$0xff]
        %v224 = vld [vmem:[%s185 + $0x130] sm:$0xff]
        %v225 = vld [vmem:[%s185 + $0x138] sm:$0xff]
        %v226 = vld [vmem:[%s185 + $0x140] sm:$0xff]
        %v227 = vld [vmem:[%s185 + $0x148] sm:$0xff]
        %v228 = vld [vmem:[%s185 + $0x150] sm:$0xff]
        %v229 = vld [vmem:[%s185 + $0x158] sm:$0xff]
        %v230 = vld [vmem:[%s185 + $0x160] sm:$0xff]
        %v231 = vld [vmem:[%s185 + $0x168] sm:$0xff]
        %v232 = vld [vmem:[%s185 + $0x170] sm:$0xff]
        %v233 = vld [vmem:[%s185 + $0x178] sm:$0xff]
        %v234 = vld [vmem:[%s185 + $0x180] sm:$0xff]
        %v235 = vld [vmem:[%s185 + $0x188] sm:$0xff]
        %v236 = vld [vmem:[%s185 + $0x190] sm:$0xff]
        %v237 = vld [vmem:[%s1] sm:$0xff]
        %s238 = sadd.s32 %s184, 1
        %s239 = scalar_lea.vmem %s182, %s238
        %v240 = vld [vmem:[%s239] sm:$0xff]
        %v241 = vld [vmem:[%s239 + $0x8] sm:$0xff]
        %v242 = vld [vmem:[%s239 + $0x10] sm:$0xff]
        %v243 = vld [vmem:[%s239 + $0x18] sm:$0xff]
        %v244 = vld [vmem:[%s239 + $0x20] sm:$0xff]
        %v245 = vld [vmem:[%s239 + $0x28] sm:$0xff]
        %v246 = vld [vmem:[%s239 + $0x30] sm:$0xff]
        %v247 = vld [vmem:[%s239 + $0x38] sm:$0xff]
        %v248 = vld [vmem:[%s239 + $0x40] sm:$0xff]
        %v249 = vld [vmem:[%s239 + $0x48] sm:$0xff]
        %v250 = vld [vmem:[%s239 + $0x50] sm:$0xff]
        %v251 = vld [vmem:[%s239 + $0x58] sm:$0xff]
        %v252 = vld [vmem:[%s239 + $0x60] sm:$0xff]
        %v253 = vld [vmem:[%s239 + $0x68] sm:$0xff]
        %v254 = vld [vmem:[%s239 + $0x70] sm:$0xff]
        %v255 = vld [vmem:[%s239 + $0x78] sm:$0xff]
        %v256 = vld [vmem:[%s239 + $0x80] sm:$0xff]
        %v257 = vld [vmem:[%s239 + $0x88] sm:$0xff]
        %v258 = vld [vmem:[%s239 + $0x90] sm:$0xff]
        %v259 = vld [vmem:[%s239 + $0x98] sm:$0xff]
        %v260 = vld [vmem:[%s239 + $0xa0] sm:$0xff]
        %v261 = vld [vmem:[%s239 + $0xa8] sm:$0xff]
        %v262 = vld [vmem:[%s239 + $0xb0] sm:$0xff]
        %v263 = vld [vmem:[%s239 + $0xb8] sm:$0xff]
        %v264 = vld [vmem:[%s239 + $0xc0] sm:$0xff]
        %v265 = vld [vmem:[%s239 + $0xc8] sm:$0xff]
        %v266 = vld [vmem:[%s239 + $0xd0] sm:$0xff]
        %v267 = vld [vmem:[%s239 + $0xd8] sm:$0xff]
        %v268 = vld [vmem:[%s239 + $0xe0] sm:$0xff]
        %v269 = vld [vmem:[%s239 + $0xe8] sm:$0xff]
        %v270 = vld [vmem:[%s239 + $0xf0] sm:$0xff]
        %v271 = vld [vmem:[%s239 + $0xf8] sm:$0xff]
        %v272 = vld [vmem:[%s239 + $0x100] sm:$0xff]
        %v273 = vld [vmem:[%s239 + $0x108] sm:$0xff]
        %v274 = vld [vmem:[%s239 + $0x110] sm:$0xff]
        %v275 = vld [vmem:[%s239 + $0x118] sm:$0xff]
        %v276 = vld [vmem:[%s239 + $0x120] sm:$0xff]
        %v277 = vld [vmem:[%s239 + $0x128] sm:$0xff]
        %v278 = vld [vmem:[%s239 + $0x130] sm:$0xff]
        %v279 = vld [vmem:[%s239 + $0x138] sm:$0xff]
        %v280 = vld [vmem:[%s239 + $0x140] sm:$0xff]
        %v281 = vld [vmem:[%s239 + $0x148] sm:$0xff]
        %v282 = vld [vmem:[%s239 + $0x150] sm:$0xff]
        %v283 = vld [vmem:[%s239 + $0x158] sm:$0xff]
        %v284 = vld [vmem:[%s239 + $0x160] sm:$0xff]
        %v285 = vld [vmem:[%s239 + $0x168] sm:$0xff]
        %v286 = vld [vmem:[%s239 + $0x170] sm:$0xff]
        %v287 = vld [vmem:[%s239 + $0x178] sm:$0xff]
        %v288 = vld [vmem:[%s239 + $0x180] sm:$0xff]
        %v289 = vld [vmem:[%s239 + $0x188] sm:$0xff]
        %v290 = vld [vmem:[%s239 + $0x190] sm:$0xff]
        %s291 = scalar_lea.vmem %s1, 8
        %v292 = vld [vmem:[%s291] sm:$0xff]
        %vm293 = vcmask 64512
        %v295 = vsel %vm293, %v240, 0
        %v298 = vsel %vm293, %v241, 0
        %v301 = vsel %vm293, %v242, 0
        %v304 = vsel %vm293, %v243, 0
        %v307 = vsel %vm293, %v244, 0
        %v310 = vsel %vm293, %v245, 0
        %v313 = vsel %vm293, %v246, 0
        %v316 = vsel %vm293, %v247, 0
        %v319 = vsel %vm293, %v248, 0
        %v322 = vsel %vm293, %v249, 0
        %v325 = vsel %vm293, %v250, 0
        %v328 = vsel %vm293, %v251, 0
        %v331 = vsel %vm293, %v252, 0
        %v334 = vsel %vm293, %v253, 0
        %v337 = vsel %vm293, %v254, 0
        %v340 = vsel %vm293, %v255, 0
        %v343 = vsel %vm293, %v256, 0
        %v346 = vsel %vm293, %v257, 0
        %v349 = vsel %vm293, %v258, 0
        %v352 = vsel %vm293, %v259, 0
        %v355 = vsel %vm293, %v260, 0
        %v358 = vsel %vm293, %v261, 0
        %v361 = vsel %vm293, %v262, 0
        %v364 = vsel %vm293, %v263, 0
        %v367 = vsel %vm293, %v264, 0
        %v370 = vsel %vm293, %v265, 0
        %v373 = vsel %vm293, %v266, 0
        %v376 = vsel %vm293, %v267, 0
        %v379 = vsel %vm293, %v268, 0
        %v382 = vsel %vm293, %v269, 0
        %v385 = vsel %vm293, %v270, 0
        %v388 = vsel %vm293, %v271, 0
        %v391 = vsel %vm293, %v272, 0
        %v394 = vsel %vm293, %v273, 0
        %v397 = vsel %vm293, %v274, 0
        %v400 = vsel %vm293, %v275, 0
        %v403 = vsel %vm293, %v276, 0
        %v406 = vsel %vm293, %v277, 0
        %v409 = vsel %vm293, %v278, 0
        %v412 = vsel %vm293, %v279, 0
        %v415 = vsel %vm293, %v280, 0
        %v418 = vsel %vm293, %v281, 0
        %v421 = vsel %vm293, %v282, 0
        %v424 = vsel %vm293, %v283, 0
        %v427 = vsel %vm293, %v284, 0
        %v430 = vsel %vm293, %v285, 0
        %v433 = vsel %vm293, %v286, 0
        %v436 = vsel %vm293, %v287, 0
        %v439 = vsel %vm293, %v288, 0
        %v442 = vsel %vm293, %v289, 0
        %v445 = vsel %vm293, %v290, 0
        %447 = vmatprep.subr.mxu0 0.0
        %448 = vmatpush1.msra.mxu0 %v292
        %449 = vmatprep.subr.mxu0 0.0
        %450 = vmatpush1.msra.mxu0 0.0
        %451 = vmatprep.subr.mxu0 0.0
        %452 = vmatpush1.msra.mxu0 0.0
        %453 = vmatprep.subr.mxu0 0.0
        %454 = vmatpush1.msra.mxu0 0.0
        %455 = vmatprep.subr.mxu0 0.0
        %456 = vmatpush1.msra.mxu0 0.0
        %457 = vmatprep.subr.mxu0 0.0
        %458 = vmatpush1.msra.mxu0 0.0
        %459 = vmatprep.subr.mxu0 0.0
        %460 = vmatpush1.msra.mxu0 0.0
        %461 = vmatprep.subr.mxu0 0.0
        %462 = vmatpush1.msra.mxu0 0.0
        %463 = vmatprep.subr.mxu0 0.0
        %464 = vmatpush1.msra.mxu0 0.0
        %465 = vmatprep.subr.mxu0 0.0
        %466 = vmatpush1.msra.mxu0 0.0
        %467 = vmatprep.subr.mxu0 0.0
        %468 = vmatpush1.msra.mxu0 0.0
        %469 = vmatprep.subr.mxu0 0.0
        %470 = vmatpush1.msra.mxu0 0.0
        %471 = vmatprep.subr.mxu0 0.0
        %472 = vmatpush1.msra.mxu0 0.0
        %473 = vmatprep.subr.mxu0 0.0
        %474 = vmatpush1.msra.mxu0 0.0
        %475 = vmatprep.subr.mxu0 0.0
        %476 = vmatpush1.msra.mxu0 0.0
        %477 = vmatprep.subr.mxu0 0.0
        %478 = vmatpush1.msra.mxu0 0.0
        %479 = vmatprep.subr.mxu0 0.0
        %480 = vmatpush1.msra.mxu0 0.0
        %481 = vmatprep.subr.mxu0 0.0
        %482 = vmatpush1.msra.mxu0 0.0
        %483 = vmatprep.subr.mxu0 0.0
        %484 = vmatpush1.msra.mxu0 0.0
        %485 = vmatprep.subr.mxu0 0.0
        %486 = vmatpush1.msra.mxu0 0.0
        %487 = vmatprep.subr.mxu0 0.0
        %488 = vmatpush1.msra.mxu0 0.0
        %489 = vmatprep.subr.mxu0 0.0
        %490 = vmatpush1.msra.mxu0 0.0
        %491 = vmatprep.subr.mxu0 0.0
        %492 = vmatpush1.msra.mxu0 0.0
        %493 = vmatprep.subr.mxu0 0.0
        %494 = vmatpush1.msra.mxu0 0.0
        %495 = vmatprep.subr.mxu0 0.0
        %496 = vmatpush1.msra.mxu0 0.0
        %497 = vmatprep.subr.mxu0 0.0
        %498 = vmatpush1.msra.mxu0 0.0
        %499 = vmatprep.subr.mxu0 0.0
        %500 = vmatpush1.msra.mxu0 0.0
        %501 = vmatprep.subr.mxu0 0.0
        %502 = vmatpush1.msra.mxu0 0.0
        %503 = vmatprep.subr.mxu0 0.0
        %504 = vmatpush1.msra.mxu0 0.0
        %505 = vmatprep.subr.mxu0 0.0
        %506 = vmatpush1.msra.mxu0 0.0
        %507 = vmatprep.subr.mxu0 0.0
        %508 = vmatpush1.msra.mxu0 0.0
        %509 = vmatprep.subr.mxu0 0.0
        %510 = vmatpush1.msra.mxu0 0.0
        %511 = vmatprep.mubr.f32.mxu0 0.0
        %512 = vmatmul.mubr.f32.gmra.mrb[0].mxu0 %v295
        %v513 = vpop.f32.mrb[0].mxu0
        %v514 = vadd.f32 0.0, %v513
        %v515 = vpop.f32.mrb[0].mxu0
        %516 = vmatprep.mubr.f32.mxu0 0.0
        %517 = vmatmul.mubr.f32.gmra.mrb[0].mxu0 %v298
        %v518 = vpop.f32.mrb[0].mxu0
        %v519 = vadd.f32 0.0, %v518
        %v520 = vpop.f32.mrb[0].mxu0
        %521 = vmatprep.mubr.f32.mxu0 0.0
        %522 = vmatmul.mubr.f32.gmra.mrb[0].mxu0 %v301
        %v523 = vpop.f32.mrb[0].mxu0
        %v524 = vadd.f32 0.0, %v523
        %v525 = vpop.f32.mrb[0].mxu0
        %526 = vmatprep.mubr.f32.mxu0 0.0
        %527 = vmatmul.mubr.f32.gmra.mrb[0].mxu0 %v304
        %v528 = vpop.f32.mrb[0].mxu0
        %v529 = vadd.f32 0.0, %v528
        %v530 = vpop.f32.mrb[0].mxu0
        %531 = vmatprep.mubr.f32.mxu0 0.0
        %532 = vmatmul.mubr.f32.gmra.mrb[0].mxu0 %v307
        %v533 = vpop.f32.mrb[0].mxu0
        %v534 = vadd.f32 0.0, %v533
        %v535 = vpop.f32.mrb[0].mxu0
        %536 = vmatprep.mubr.f32.mxu0 0.0
        %537 = vmatmul.mubr.f32.gmra.mrb[0].mxu0 %v310
        %v538 = vpop.f32.mrb[0].mxu0
        %v539 = vadd.f32 0.0, %v538
        %v540 = vpop.f32.mrb[0].mxu0
        %541 = vmatprep.mubr.f32.mxu0 0.0
        %542 = vmatmul.mubr.f32.gmra.mrb[0].mxu0 %v313
        %v543 = vpop.f32.mrb[0].mxu0
        %v544 = vadd.f32 0.0, %v543
        %v545 = vpop.f32.mrb[0].mxu0
        %546 = vmatprep.mubr.f32.mxu0 0.0
        %547 = vmatmul.mubr.f32.gmra.mrb[0].mxu0 %v316
        %v548 = vpop.f32.mrb[0].mxu0
        %v549 = vadd.f32 0.0, %v548
        %v550 = vpop.f32.mrb[0].mxu0
        %551 = vmatprep.mubr.f32.mxu0 0.0
        %552 = vmatmul.mubr.f32.gmra.mrb[0].mxu0 %v319
        %v553 = vpop.f32.mrb[0].mxu0
        %v554 = vadd.f32 0.0, %v553
        %v555 = vpop.f32.mrb[0].mxu0
        %556 = vmatprep.mubr.f32.mxu0 0.0
        %557 = vmatmul.mubr.f32.gmra.mrb[0].mxu0 %v322
        %v558 = vpop.f32.mrb[0].mxu0
        %v559 = vadd.f32 0.0, %v558
        %v560 = vpop.f32.mrb[0].mxu0
        %561 = vmatprep.mubr.f32.mxu0 0.0
        %562 = vmatmul.mubr.f32.gmra.mrb[0].mxu0 %v325
        %v563 = vpop.f32.mrb[0].mxu0
        %v564 = vadd.f32 0.0, %v563
        %v565 = vpop.f32.mrb[0].mxu0
        %566 = vmatprep.mubr.f32.mxu0 0.0
        %567 = vmatmul.mubr.f32.gmra.mrb[0].mxu0 %v328
        %v568 = vpop.f32.mrb[0].mxu0
        %v569 = vadd.f32 0.0, %v568
        %v570 = vpop.f32.mrb[0].mxu0
        %571 = vmatprep.mubr.f32.mxu0 0.0
        %572 = vmatmul.mubr.f32.gmra.mrb[0].mxu0 %v331
        %v573 = vpop.f32.mrb[0].mxu0
        %v574 = vadd.f32 0.0, %v573
        %v575 = vpop.f32.mrb[0].mxu0
        %576 = vmatprep.mubr.f32.mxu0 0.0
        %577 = vmatmul.mubr.f32.gmra.mrb[0].mxu0 %v334
        %v578 = vpop.f32.mrb[0].mxu0
        %v579 = vadd.f32 0.0, %v578
        %v580 = vpop.f32.mrb[0].mxu0
        %581 = vmatprep.mubr.f32.mxu0 0.0
        %582 = vmatmul.mubr.f32.gmra.mrb[0].mxu0 %v337
        %v583 = vpop.f32.mrb[0].mxu0
        %v584 = vadd.f32 0.0, %v583
        %v585 = vpop.f32.mrb[0].mxu0
        %586 = vmatprep.mubr.f32.mxu0 0.0
        %587 = vmatmul.mubr.f32.gmra.mrb[0].mxu0 %v340
        %v588 = vpop.f32.mrb[0].mxu0
        %v589 = vadd.f32 0.0, %v588
        %v590 = vpop.f32.mrb[0].mxu0
        %591 = vmatprep.mubr.f32.mxu0 0.0
        %592 = vmatmul.mubr.f32.gmra.mrb[0].mxu0 %v343
        %v593 = vpop.f32.mrb[0].mxu0
        %v594 = vadd.f32 0.0, %v593
        %v595 = vpop.f32.mrb[0].mxu0
        %596 = vmatprep.mubr.f32.mxu0 0.0
        %597 = vmatmul.mubr.f32.gmra.mrb[0].mxu0 %v346
        %v598 = vpop.f32.mrb[0].mxu0
        %v599 = vadd.f32 0.0, %v598
        %v600 = vpop.f32.mrb[0].mxu0
        %601 = vmatprep.mubr.f32.mxu0 0.0
        %602 = vmatmul.mubr.f32.gmra.mrb[0].mxu0 %v349
        %v603 = vpop.f32.mrb[0].mxu0
        %v604 = vadd.f32 0.0, %v603
        %v605 = vpop.f32.mrb[0].mxu0
        %606 = vmatprep.mubr.f32.mxu0 0.0
        %607 = vmatmul.mubr.f32.gmra.mrb[0].mxu0 %v352
        %v608 = vpop.f32.mrb[0].mxu0
        %v609 = vadd.f32 0.0, %v608
        %v610 = vpop.f32.mrb[0].mxu0
        %611 = vmatprep.mubr.f32.mxu0 0.0
        %612 = vmatmul.mubr.f32.gmra.mrb[0].mxu0 %v355
        %v613 = vpop.f32.mrb[0].mxu0
        %v614 = vadd.f32 0.0, %v613
        %v615 = vpop.f32.mrb[0].mxu0
        %616 = vmatprep.mubr.f32.mxu0 0.0
        %617 = vmatmul.mubr.f32.gmra.mrb[0].mxu0 %v358
        %v618 = vpop.f32.mrb[0].mxu0
        %v619 = vadd.f32 0.0, %v618
        %v620 = vpop.f32.mrb[0].mxu0
        %621 = vmatprep.mubr.f32.mxu0 0.0
        %622 = vmatmul.mubr.f32.gmra.mrb[0].mxu0 %v361
        %v623 = vpop.f32.mrb[0].mxu0
        %v624 = vadd.f32 0.0, %v623
        %v625 = vpop.f32.mrb[0].mxu0
        %626 = vmatprep.mubr.f32.mxu0 0.0
        %627 = vmatmul.mubr.f32.gmra.mrb[0].mxu0 %v364
        %v628 = vpop.f32.mrb[0].mxu0
        %v629 = vadd.f32 0.0, %v628
        %v630 = vpop.f32.mrb[0].mxu0
        %631 = vmatprep.mubr.f32.mxu0 0.0
        %632 = vmatmul.mubr.f32.gmra.mrb[0].mxu0 %v367
        %v633 = vpop.f32.mrb[0].mxu0
        %v634 = vadd.f32 0.0, %v633
        %v635 = vpop.f32.mrb[0].mxu0
        %636 = vmatprep.mubr.f32.mxu0 0.0
        %637 = vmatmul.mubr.f32.gmra.mrb[0].mxu0 %v370
        %v638 = vpop.f32.mrb[0].mxu0
        %v639 = vadd.f32 0.0, %v638
        %v640 = vpop.f32.mrb[0].mxu0
        %641 = vmatprep.mubr.f32.mxu0 0.0
        %642 = vmatmul.mubr.f32.gmra.mrb[0].mxu0 %v373
        %v643 = vpop.f32.mrb[0].mxu0
        %v644 = vadd.f32 0.0, %v643
        %v645 = vpop.f32.mrb[0].mxu0
        %646 = vmatprep.mubr.f32.mxu0 0.0
        %647 = vmatmul.mubr.f32.gmra.mrb[0].mxu0 %v376
        %v648 = vpop.f32.mrb[0].mxu0
        %v649 = vadd.f32 0.0, %v648
        %v650 = vpop.f32.mrb[0].mxu0
        %651 = vmatprep.mubr.f32.mxu0 0.0
        %652 = vmatmul.mubr.f32.gmra.mrb[0].mxu0 %v379
        %v653 = vpop.f32.mrb[0].mxu0
        %v654 = vadd.f32 0.0, %v653
        %v655 = vpop.f32.mrb[0].mxu0
        %656 = vmatprep.mubr.f32.mxu0 0.0
        %657 = vmatmul.mubr.f32.gmra.mrb[0].mxu0 %v382
        %v658 = vpop.f32.mrb[0].mxu0
        %v659 = vadd.f32 0.0, %v658
        %v660 = vpop.f32.mrb[0].mxu0
        %661 = vmatprep.mubr.f32.mxu0 0.0
        %662 = vmatmul.mubr.f32.gmra.mrb[0].mxu0 %v385
        %v663 = vpop.f32.mrb[0].mxu0
        %v664 = vadd.f32 0.0, %v663
        %v665 = vpop.f32.mrb[0].mxu0
        %666 = vmatprep.mubr.f32.mxu0 0.0
        %667 = vmatmul.mubr.f32.gmra.mrb[0].mxu0 %v388
        %v668 = vpop.f32.mrb[0].mxu0
        %v669 = vadd.f32 0.0, %v668
        %v670 = vpop.f32.mrb[0].mxu0
        %671 = vmatprep.mubr.f32.mxu0 0.0
        %672 = vmatmul.mubr.f32.gmra.mrb[0].mxu0 %v391
        %v673 = vpop.f32.mrb[0].mxu0
        %v674 = vadd.f32 0.0, %v673
        %v675 = vpop.f32.mrb[0].mxu0
        %676 = vmatprep.mubr.f32.mxu0 0.0
        %677 = vmatmul.mubr.f32.gmra.mrb[0].mxu0 %v394
        %v678 = vpop.f32.mrb[0].mxu0
        %v679 = vadd.f32 0.0, %v678
        %v680 = vpop.f32.mrb[0].mxu0
        %681 = vmatprep.mubr.f32.mxu0 0.0
        %682 = vmatmul.mubr.f32.gmra.mrb[0].mxu0 %v397
        %v683 = vpop.f32.mrb[0].mxu0
        %v684 = vadd.f32 0.0, %v683
        %v685 = vpop.f32.mrb[0].mxu0
        %686 = vmatprep.mubr.f32.mxu0 0.0
        %687 = vmatmul.mubr.f32.gmra.mrb[0].mxu0 %v400
        %v688 = vpop.f32.mrb[0].mxu0
        %v689 = vadd.f32 0.0, %v688
        %v690 = vpop.f32.mrb[0].mxu0
        %691 = vmatprep.mubr.f32.mxu0 0.0
        %692 = vmatmul.mubr.f32.gmra.mrb[0].mxu0 %v403
        %v693 = vpop.f32.mrb[0].mxu0
        %v694 = vadd.f32 0.0, %v693
        %v695 = vpop.f32.mrb[0].mxu0
        %696 = vmatprep.mubr.f32.mxu0 0.0
        %697 = vmatmul.mubr.f32.gmra.mrb[0].mxu0 %v406
        %v698 = vpop.f32.mrb[0].mxu0
        %v699 = vadd.f32 0.0, %v698
        %v700 = vpop.f32.mrb[0].mxu0
        %701 = vmatprep.mubr.f32.mxu0 0.0
        %702 = vmatmul.mubr.f32.gmra.mrb[0].mxu0 %v409
        %v703 = vpop.f32.mrb[0].mxu0
        %v704 = vadd.f32 0.0, %v703
        %v705 = vpop.f32.mrb[0].mxu0
        %706 = vmatprep.mubr.f32.mxu0 0.0
        %707 = vmatmul.mubr.f32.gmra.mrb[0].mxu0 %v412
        %v708 = vpop.f32.mrb[0].mxu0
        %v709 = vadd.f32 0.0, %v708
        %v710 = vpop.f32.mrb[0].mxu0
        %711 = vmatprep.mubr.f32.mxu0 0.0
        %712 = vmatmul.mubr.f32.gmra.mrb[0].mxu0 %v415
        %v713 = vpop.f32.mrb[0].mxu0
        %v714 = vadd.f32 0.0, %v713
        %v715 = vpop.f32.mrb[0].mxu0
        %716 = vmatprep.mubr.f32.mxu0 0.0
        %717 = vmatmul.mubr.f32.gmra.mrb[0].mxu0 %v418
        %v718 = vpop.f32.mrb[0].mxu0
        %v719 = vadd.f32 0.0, %v718
        %v720 = vpop.f32.mrb[0].mxu0
        %721 = vmatprep.mubr.f32.mxu0 0.0
        %722 = vmatmul.mubr.f32.gmra.mrb[0].mxu0 %v421
        %v723 = vpop.f32.mrb[0].mxu0
        %v724 = vadd.f32 0.0, %v723
        %v725 = vpop.f32.mrb[0].mxu0
        %726 = vmatprep.mubr.f32.mxu0 0.0
        %727 = vmatmul.mubr.f32.gmra.mrb[0].mxu0 %v424
        %v728 = vpop.f32.mrb[0].mxu0
        %v729 = vadd.f32 0.0, %v728
        %v730 = vpop.f32.mrb[0].mxu0
        %731 = vmatprep.mubr.f32.mxu0 0.0
        %732 = vmatmul.mubr.f32.gmra.mrb[0].mxu0 %v427
        %v733 = vpop.f32.mrb[0].mxu0
        %v734 = vadd.f32 0.0, %v733
        %v735 = vpop.f32.mrb[0].mxu0
        %736 = vmatprep.mubr.f32.mxu0 0.0
        %737 = vmatmul.mubr.f32.gmra.mrb[0].mxu0 %v430
        %v738 = vpop.f32.mrb[0].mxu0
        %v739 = vadd.f32 0.0, %v738
        %v740 = vpop.f32.mrb[0].mxu0
        %741 = vmatprep.mubr.f32.mxu0 0.0
        %742 = vmatmul.mubr.f32.gmra.mrb[0].mxu0 %v433
        %v743 = vpop.f32.mrb[0].mxu0
        %v744 = vadd.f32 0.0, %v743
        %v745 = vpop.f32.mrb[0].mxu0
        %746 = vmatprep.mubr.f32.mxu0 0.0
        %747 = vmatmul.mubr.f32.gmra.mrb[0].mxu0 %v436
        %v748 = vpop.f32.mrb[0].mxu0
        %v749 = vadd.f32 0.0, %v748
        %v750 = vpop.f32.mrb[0].mxu0
        %751 = vmatprep.mubr.f32.mxu0 0.0
        %752 = vmatmul.mubr.f32.gmra.mrb[0].mxu0 %v439
        %v753 = vpop.f32.mrb[0].mxu0
        %v754 = vadd.f32 0.0, %v753
        %v755 = vpop.f32.mrb[0].mxu0
        %756 = vmatprep.mubr.f32.mxu0 0.0
        %757 = vmatmul.mubr.f32.gmra.mrb[0].mxu0 %v442
        %v758 = vpop.f32.mrb[0].mxu0
        %v759 = vadd.f32 0.0, %v758
        %v760 = vpop.f32.mrb[0].mxu0
        %761 = vmatprep.mubr.f32.mxu0 0.0
        %762 = vmatmul.mubr.f32.gmra.mrb[0].mxu0 %v445
        %v763 = vpop.f32.mrb[0].mxu0
        %v764 = vadd.f32 0.0, %v763
        %v765 = vpop.f32.mrb[0].mxu0
        %766 = vdwg.mxu0
        %v768 = vsel %vm293, %v186, 0
        %v771 = vsel %vm293, %v187, 0
        %v774 = vsel %vm293, %v188, 0
        %v777 = vsel %vm293, %v189, 0
        %v780 = vsel %vm293, %v190, 0
        %v783 = vsel %vm293, %v191, 0
        %v786 = vsel %vm293, %v192, 0
        %v789 = vsel %vm293, %v193, 0
        %v792 = vsel %vm293, %v194, 0
        %v795 = vsel %vm293, %v195, 0
        %v798 = vsel %vm293, %v196, 0
        %v801 = vsel %vm293, %v197, 0
        %v804 = vsel %vm293, %v198, 0
        %v807 = vsel %vm293, %v199, 0
        %v810 = vsel %vm293, %v200, 0
        %v813 = vsel %vm293, %v201, 0
        %v816 = vsel %vm293, %v202, 0
        %v819 = vsel %vm293, %v203, 0
        %v822 = vsel %vm293, %v204, 0
        %v825 = vsel %vm293, %v205, 0
        %v828 = vsel %vm293, %v206, 0
        %v831 = vsel %vm293, %v207, 0
        %v834 = vsel %vm293, %v208, 0
        %v837 = vsel %vm293, %v209, 0
        %v840 = vsel %vm293, %v210, 0
        %v843 = vsel %vm293, %v211, 0
        %v846 = vsel %vm293, %v212, 0
        %v849 = vsel %vm293, %v213, 0
        %v852 = vsel %vm293, %v214, 0
        %v855 = vsel %vm293, %v215, 0
        %v858 = vsel %vm293, %v216, 0
        %v861 = vsel %vm293, %v217, 0
        %v864 = vsel %vm293, %v218, 0
        %v867 = vsel %vm293, %v219, 0
        %v870 = vsel %vm293, %v220, 0
        %v873 = vsel %vm293, %v221, 0
        %v876 = vsel %vm293, %v222, 0
        %v879 = vsel %vm293, %v223, 0
        %v882 = vsel %vm293, %v224, 0
        %v885 = vsel %vm293, %v225, 0
        %v888 = vsel %vm293, %v226, 0
        %v891 = vsel %vm293, %v227, 0
        %v894 = vsel %vm293, %v228, 0
        %v897 = vsel %vm293, %v229, 0
        %v900 = vsel %vm293, %v230, 0
        %v903 = vsel %vm293, %v231, 0
        %v906 = vsel %vm293, %v232, 0
        %v909 = vsel %vm293, %v233, 0
        %v912 = vsel %vm293, %v234, 0
        %v915 = vsel %vm293, %v235, 0
        %v918 = vsel %vm293, %v236, 0
        %920 = vmatprep.subr.mxu0 0.0
        %921 = vmatpush1.msra.mxu0 %v237
        %922 = vmatprep.subr.mxu0 0.0
        %923 = vmatpush1.msra.mxu0 0.0
        %924 = vmatprep.subr.mxu0 0.0
        %925 = vmatpush1.msra.mxu0 0.0
        %926 = vmatprep.subr.mxu0 0.0
        %927 = vmatpush1.msra.mxu0 0.0
        %928 = vmatprep.subr.mxu0 0.0
        %929 = vmatpush1.msra.mxu0 0.0
        %930 = vmatprep.subr.mxu0 0.0
        %931 = vmatpush1.msra.mxu0 0.0
        %932 = vmatprep.subr.mxu0 0.0
        %933 = vmatpush1.msra.mxu0 0.0
        %934 = vmatprep.subr.mxu0 0.0
        %935 = vmatpush1.msra.mxu0 0.0
        %936 = vmatprep.subr.mxu0 0.0
        %937 = vmatpush1.msra.mxu0 0.0
        %938 = vmatprep.subr.mxu0 0.0
        %939 = vmatpush1.msra.mxu0 0.0
        %940 = vmatprep.subr.mxu0 0.0
        %941 = vmatpush1.msra.mxu0 0.0
        %942 = vmatprep.subr.mxu0 0.0
        %943 = vmatpush1.msra.mxu0 0.0
        %944 = vmatprep.subr.mxu0 0.0
        %945 = vmatpush1.msra.mxu0 0.0
        %946 = vmatprep.subr.mxu0 0.0
        %947 = vmatpush1.msra.mxu0 0.0
        %948 = vmatprep.subr.mxu0 0.0
        %949 = vmatpush1.msra.mxu0 0.0
        %950 = vmatprep.subr.mxu0 0.0
        %951 = vmatpush1.msra.mxu0 0.0
        %952 = vmatprep.subr.mxu0 0.0
        %953 = vmatpush1.msra.mxu0 0.0
        %954 = vmatprep.subr.mxu0 0.0
        %955 = vmatpush1.msra.mxu0 0.0
        %956 = vmatprep.subr.mxu0 0.0
        %957 = vmatpush1.msra.mxu0 0.0
        %958 = vmatprep.subr.mxu0 0.0
        %959 = vmatpush1.msra.mxu0 0.0
        %960 = vmatprep.subr.mxu0 0.0
        %961 = vmatpush1.msra.mxu0 0.0
        %962 = vmatprep.subr.mxu0 0.0
        %963 = vmatpush1.msra.mxu0 0.0
        %964 = vmatprep.subr.mxu0 0.0
        %965 = vmatpush1.msra.mxu0 0.0
        %966 = vmatprep.subr.mxu0 0.0
        %967 = vmatpush1.msra.mxu0 0.0
        %968 = vmatprep.subr.mxu0 0.0
        %969 = vmatpush1.msra.mxu0 0.0
        %970 = vmatprep.subr.mxu0 0.0
        %971 = vmatpush1.msra.mxu0 0.0
        %972 = vmatprep.subr.mxu0 0.0
        %973 = vmatpush1.msra.mxu0 0.0
        %974 = vmatprep.subr.mxu0 0.0
        %975 = vmatpush1.msra.mxu0 0.0
        %976 = vmatprep.subr.mxu0 0.0
        %977 = vmatpush1.msra.mxu0 0.0
        %978 = vmatprep.subr.mxu0 0.0
        %979 = vmatpush1.msra.mxu0 0.0
        %980 = vmatprep.subr.mxu0 0.0
        %981 = vmatpush1.msra.mxu0 0.0
        %982 = vmatprep.subr.mxu0 0.0
        %983 = vmatpush1.msra.mxu0 0.0
        %984 = vmatprep.mubr.f32.mxu0 0.0
        %985 = vmatmul.mubr.f32.gmra.mrb[0].mxu0 %v768
        %v986 = vpop.f32.mrb[0].mxu0
        %v987 = vadd.f32 %v514, %v986
        %v988 = vpop.f32.mrb[0].mxu0
        %989 = vmatprep.mubr.f32.mxu0 0.0
        %990 = vmatmul.mubr.f32.gmra.mrb[0].mxu0 %v771
        %v991 = vpop.f32.mrb[0].mxu0
        %v992 = vadd.f32 %v519, %v991
        %v993 = vpop.f32.mrb[0].mxu0
        %994 = vmatprep.mubr.f32.mxu0 0.0
        %995 = vmatmul.mubr.f32.gmra.mrb[0].mxu0 %v774
        %v996 = vpop.f32.mrb[0].mxu0
        %v997 = vadd.f32 %v524, %v996
        %v998 = vpop.f32.mrb[0].mxu0
        %999 = vmatprep.mubr.f32.mxu0 0.0
        %1000 = vmatmul.mubr.f32.gmra.mrb[0].mxu0 %v777
        %v1001 = vpop.f32.mrb[0].mxu0
        %v1002 = vadd.f32 %v529, %v1001
        %v1003 = vpop.f32.mrb[0].mxu0
        %1004 = vmatprep.mubr.f32.mxu0 0.0
        %1005 = vmatmul.mubr.f32.gmra.mrb[0].mxu0 %v780
        %v1006 = vpop.f32.mrb[0].mxu0
        %v1007 = vadd.f32 %v534, %v1006
        %v1008 = vpop.f32.mrb[0].mxu0
        %1009 = vmatprep.mubr.f32.mxu0 0.0
        %1010 = vmatmul.mubr.f32.gmra.mrb[0].mxu0 %v783
        %v1011 = vpop.f32.mrb[0].mxu0
        %v1012 = vadd.f32 %v539, %v1011
        %v1013 = vpop.f32.mrb[0].mxu0
        %1014 = vmatprep.mubr.f32.mxu0 0.0
        %1015 = vmatmul.mubr.f32.gmra.mrb[0].mxu0 %v786
        %v1016 = vpop.f32.mrb[0].mxu0
        %v1017 = vadd.f32 %v544, %v1016
        %v1018 = vpop.f32.mrb[0].mxu0
        %1019 = vmatprep.mubr.f32.mxu0 0.0
        %1020 = vmatmul.mubr.f32.gmra.mrb[0].mxu0 %v789
        %v1021 = vpop.f32.mrb[0].mxu0
        %v1022 = vadd.f32 %v549, %v1021
        %v1023 = vpop.f32.mrb[0].mxu0
        %1024 = vmatprep.mubr.f32.mxu0 0.0
        %1025 = vmatmul.mubr.f32.gmra.mrb[0].mxu0 %v792
        %v1026 = vpop.f32.mrb[0].mxu0
        %v1027 = vadd.f32 %v554, %v1026
        %v1028 = vpop.f32.mrb[0].mxu0
        %1029 = vmatprep.mubr.f32.mxu0 0.0
        %1030 = vmatmul.mubr.f32.gmra.mrb[0].mxu0 %v795
        %v1031 = vpop.f32.mrb[0].mxu0
        %v1032 = vadd.f32 %v559, %v1031
        %v1033 = vpop.f32.mrb[0].mxu0
        %1034 = vmatprep.mubr.f32.mxu0 0.0
        %1035 = vmatmul.mubr.f32.gmra.mrb[0].mxu0 %v798
        %v1036 = vpop.f32.mrb[0].mxu0
        %v1037 = vadd.f32 %v564, %v1036
        %v1038 = vpop.f32.mrb[0].mxu0
        %1039 = vmatprep.mubr.f32.mxu0 0.0
        %1040 = vmatmul.mubr.f32.gmra.mrb[0].mxu0 %v801
        %v1041 = vpop.f32.mrb[0].mxu0
        %v1042 = vadd.f32 %v569, %v1041
        %v1043 = vpop.f32.mrb[0].mxu0
        %1044 = vmatprep.mubr.f32.mxu0 0.0
        %1045 = vmatmul.mubr.f32.gmra.mrb[0].mxu0 %v804
        %v1046 = vpop.f32.mrb[0].mxu0
        %v1047 = vadd.f32 %v574, %v1046
        %v1048 = vpop.f32.mrb[0].mxu0
        %1049 = vmatprep.mubr.f32.mxu0 0.0
        %1050 = vmatmul.mubr.f32.gmra.mrb[0].mxu0 %v807
        %v1051 = vpop.f32.mrb[0].mxu0
        %v1052 = vadd.f32 %v579, %v1051
        %v1053 = vpop.f32.mrb[0].mxu0
        %1054 = vmatprep.mubr.f32.mxu0 0.0
        %1055 = vmatmul.mubr.f32.gmra.mrb[0].mxu0 %v810
        %v1056 = vpop.f32.mrb[0].mxu0
        %v1057 = vadd.f32 %v584, %v1056
        %v1058 = vpop.f32.mrb[0].mxu0
        %1059 = vmatprep.mubr.f32.mxu0 0.0
        %1060 = vmatmul.mubr.f32.gmra.mrb[0].mxu0 %v813
        %v1061 = vpop.f32.mrb[0].mxu0
        %v1062 = vadd.f32 %v589, %v1061
        %v1063 = vpop.f32.mrb[0].mxu0
        %1064 = vmatprep.mubr.f32.mxu0 0.0
        %1065 = vmatmul.mubr.f32.gmra.mrb[0].mxu0 %v816
        %v1066 = vpop.f32.mrb[0].mxu0
        %v1067 = vadd.f32 %v594, %v1066
        %v1068 = vpop.f32.mrb[0].mxu0
        %1069 = vmatprep.mubr.f32.mxu0 0.0
        %1070 = vmatmul.mubr.f32.gmra.mrb[0].mxu0 %v819
        %v1071 = vpop.f32.mrb[0].mxu0
        %v1072 = vadd.f32 %v599, %v1071
        %v1073 = vpop.f32.mrb[0].mxu0
        %1074 = vmatprep.mubr.f32.mxu0 0.0
        %1075 = vmatmul.mubr.f32.gmra.mrb[0].mxu0 %v822
        %v1076 = vpop.f32.mrb[0].mxu0
        %v1077 = vadd.f32 %v604, %v1076
        %v1078 = vpop.f32.mrb[0].mxu0
        %1079 = vmatprep.mubr.f32.mxu0 0.0
        %1080 = vmatmul.mubr.f32.gmra.mrb[0].mxu0 %v825
        %v1081 = vpop.f32.mrb[0].mxu0
        %v1082 = vadd.f32 %v609, %v1081
        %v1083 = vpop.f32.mrb[0].mxu0
        %1084 = vmatprep.mubr.f32.mxu0 0.0
        %1085 = vmatmul.mubr.f32.gmra.mrb[0].mxu0 %v828
        %v1086 = vpop.f32.mrb[0].mxu0
        %v1087 = vadd.f32 %v614, %v1086
        %v1088 = vpop.f32.mrb[0].mxu0
        %1089 = vmatprep.mubr.f32.mxu0 0.0
        %1090 = vmatmul.mubr.f32.gmra.mrb[0].mxu0 %v831
        %v1091 = vpop.f32.mrb[0].mxu0
        %v1092 = vadd.f32 %v619, %v1091
        %v1093 = vpop.f32.mrb[0].mxu0
        %1094 = vmatprep.mubr.f32.mxu0 0.0
        %1095 = vmatmul.mubr.f32.gmra.mrb[0].mxu0 %v834
        %v1096 = vpop.f32.mrb[0].mxu0
        %v1097 = vadd.f32 %v624, %v1096
        %v1098 = vpop.f32.mrb[0].mxu0
        %1099 = vmatprep.mubr.f32.mxu0 0.0
        %1100 = vmatmul.mubr.f32.gmra.mrb[0].mxu0 %v837
        %v1101 = vpop.f32.mrb[0].mxu0
        %v1102 = vadd.f32 %v629, %v1101
        %v1103 = vpop.f32.mrb[0].mxu0
        %1104 = vmatprep.mubr.f32.mxu0 0.0
        %1105 = vmatmul.mubr.f32.gmra.mrb[0].mxu0 %v840
        %v1106 = vpop.f32.mrb[0].mxu0
        %v1107 = vadd.f32 %v634, %v1106
        %v1108 = vpop.f32.mrb[0].mxu0
        %1109 = vmatprep.mubr.f32.mxu0 0.0
        %1110 = vmatmul.mubr.f32.gmra.mrb[0].mxu0 %v843
        %v1111 = vpop.f32.mrb[0].mxu0
        %v1112 = vadd.f32 %v639, %v1111
        %v1113 = vpop.f32.mrb[0].mxu0
        %1114 = vmatprep.mubr.f32.mxu0 0.0
        %1115 = vmatmul.mubr.f32.gmra.mrb[0].mxu0 %v846
        %v1116 = vpop.f32.mrb[0].mxu0
        %v1117 = vadd.f32 %v644, %v1116
        %v1118 = vpop.f32.mrb[0].mxu0
        %1119 = vmatprep.mubr.f32.mxu0 0.0
        %1120 = vmatmul.mubr.f32.gmra.mrb[0].mxu0 %v849
        %v1121 = vpop.f32.mrb[0].mxu0
        %v1122 = vadd.f32 %v649, %v1121
        %v1123 = vpop.f32.mrb[0].mxu0
        %1124 = vmatprep.mubr.f32.mxu0 0.0
        %1125 = vmatmul.mubr.f32.gmra.mrb[0].mxu0 %v852
        %v1126 = vpop.f32.mrb[0].mxu0
        %v1127 = vadd.f32 %v654, %v1126
        %v1128 = vpop.f32.mrb[0].mxu0
        %1129 = vmatprep.mubr.f32.mxu0 0.0
        %1130 = vmatmul.mubr.f32.gmra.mrb[0].mxu0 %v855
        %v1131 = vpop.f32.mrb[0].mxu0
        %v1132 = vadd.f32 %v659, %v1131
        %v1133 = vpop.f32.mrb[0].mxu0
        %1134 = vmatprep.mubr.f32.mxu0 0.0
        %1135 = vmatmul.mubr.f32.gmra.mrb[0].mxu0 %v858
        %v1136 = vpop.f32.mrb[0].mxu0
        %v1137 = vadd.f32 %v664, %v1136
        %v1138 = vpop.f32.mrb[0].mxu0
        %1139 = vmatprep.mubr.f32.mxu0 0.0
        %1140 = vmatmul.mubr.f32.gmra.mrb[0].mxu0 %v861
        %v1141 = vpop.f32.mrb[0].mxu0
        %v1142 = vadd.f32 %v669, %v1141
        %v1143 = vpop.f32.mrb[0].mxu0
        %1144 = vmatprep.mubr.f32.mxu0 0.0
        %1145 = vmatmul.mubr.f32.gmra.mrb[0].mxu0 %v864
        %v1146 = vpop.f32.mrb[0].mxu0
        %v1147 = vadd.f32 %v674, %v1146
        %v1148 = vpop.f32.mrb[0].mxu0
        %1149 = vmatprep.mubr.f32.mxu0 0.0
        %1150 = vmatmul.mubr.f32.gmra.mrb[0].mxu0 %v867
        %v1151 = vpop.f32.mrb[0].mxu0
        %v1152 = vadd.f32 %v679, %v1151
        %v1153 = vpop.f32.mrb[0].mxu0
        %1154 = vmatprep.mubr.f32.mxu0 0.0
        %1155 = vmatmul.mubr.f32.gmra.mrb[0].mxu0 %v870
        %v1156 = vpop.f32.mrb[0].mxu0
        %v1157 = vadd.f32 %v684, %v1156
        %v1158 = vpop.f32.mrb[0].mxu0
        %1159 = vmatprep.mubr.f32.mxu0 0.0
        %1160 = vmatmul.mubr.f32.gmra.mrb[0].mxu0 %v873
        %v1161 = vpop.f32.mrb[0].mxu0
        %v1162 = vadd.f32 %v689, %v1161
        %v1163 = vpop.f32.mrb[0].mxu0
        %1164 = vmatprep.mubr.f32.mxu0 0.0
        %1165 = vmatmul.mubr.f32.gmra.mrb[0].mxu0 %v876
        %v1166 = vpop.f32.mrb[0].mxu0
        %v1167 = vadd.f32 %v694, %v1166
        %v1168 = vpop.f32.mrb[0].mxu0
        %1169 = vmatprep.mubr.f32.mxu0 0.0
        %1170 = vmatmul.mubr.f32.gmra.mrb[0].mxu0 %v879
        %v1171 = vpop.f32.mrb[0].mxu0
        %v1172 = vadd.f32 %v699, %v1171
        %v1173 = vpop.f32.mrb[0].mxu0
        %1174 = vmatprep.mubr.f32.mxu0 0.0
        %1175 = vmatmul.mubr.f32.gmra.mrb[0].mxu0 %v882
        %v1176 = vpop.f32.mrb[0].mxu0
        %v1177 = vadd.f32 %v704, %v1176
        %v1178 = vpop.f32.mrb[0].mxu0
        %1179 = vmatprep.mubr.f32.mxu0 0.0
        %1180 = vmatmul.mubr.f32.gmra.mrb[0].mxu0 %v885
        %v1181 = vpop.f32.mrb[0].mxu0
        %v1182 = vadd.f32 %v709, %v1181
        %v1183 = vpop.f32.mrb[0].mxu0
        %1184 = vmatprep.mubr.f32.mxu0 0.0
        %1185 = vmatmul.mubr.f32.gmra.mrb[0].mxu0 %v888
        %v1186 = vpop.f32.mrb[0].mxu0
        %v1187 = vadd.f32 %v714, %v1186
        %v1188 = vpop.f32.mrb[0].mxu0
        %1189 = vmatprep.mubr.f32.mxu0 0.0
        %1190 = vmatmul.mubr.f32.gmra.mrb[0].mxu0 %v891
        %v1191 = vpop.f32.mrb[0].mxu0
        %v1192 = vadd.f32 %v719, %v1191
        %v1193 = vpop.f32.mrb[0].mxu0
        %1194 = vmatprep.mubr.f32.mxu0 0.0
        %1195 = vmatmul.mubr.f32.gmra.mrb[0].mxu0 %v894
        %v1196 = vpop.f32.mrb[0].mxu0
        %v1197 = vadd.f32 %v724, %v1196
        %v1198 = vpop.f32.mrb[0].mxu0
        %1199 = vmatprep.mubr.f32.mxu0 0.0
        %1200 = vmatmul.mubr.f32.gmra.mrb[0].mxu0 %v897
        %v1201 = vpop.f32.mrb[0].mxu0
        %v1202 = vadd.f32 %v729, %v1201
        %v1203 = vpop.f32.mrb[0].mxu0
        %1204 = vmatprep.mubr.f32.mxu0 0.0
        %1205 = vmatmul.mubr.f32.gmra.mrb[0].mxu0 %v900
        %v1206 = vpop.f32.mrb[0].mxu0
        %v1207 = vadd.f32 %v734, %v1206
        %v1208 = vpop.f32.mrb[0].mxu0
        %1209 = vmatprep.mubr.f32.mxu0 0.0
        %1210 = vmatmul.mubr.f32.gmra.mrb[0].mxu0 %v903
        %v1211 = vpop.f32.mrb[0].mxu0
        %v1212 = vadd.f32 %v739, %v1211
        %v1213 = vpop.f32.mrb[0].mxu0
        %1214 = vmatprep.mubr.f32.mxu0 0.0
        %1215 = vmatmul.mubr.f32.gmra.mrb[0].mxu0 %v906
        %v1216 = vpop.f32.mrb[0].mxu0
        %v1217 = vadd.f32 %v744, %v1216
        %v1218 = vpop.f32.mrb[0].mxu0
        %1219 = vmatprep.mubr.f32.mxu0 0.0
        %1220 = vmatmul.mubr.f32.gmra.mrb[0].mxu0 %v909
        %v1221 = vpop.f32.mrb[0].mxu0
        %v1222 = vadd.f32 %v749, %v1221
        %v1223 = vpop.f32.mrb[0].mxu0
        %1224 = vmatprep.mubr.f32.mxu0 0.0
        %1225 = vmatmul.mubr.f32.gmra.mrb[0].mxu0 %v912
        %v1226 = vpop.f32.mrb[0].mxu0
        %v1227 = vadd.f32 %v754, %v1226
        %v1228 = vpop.f32.mrb[0].mxu0
        %1229 = vmatprep.mubr.f32.mxu0 0.0
        %1230 = vmatmul.mubr.f32.gmra.mrb[0].mxu0 %v915
        %v1231 = vpop.f32.mrb[0].mxu0
        %v1232 = vadd.f32 %v759, %v1231
        %v1233 = vpop.f32.mrb[0].mxu0
        %1234 = vmatprep.mubr.f32.mxu0 0.0
        %1235 = vmatmul.mubr.f32.gmra.mrb[0].mxu0 %v918
        %v1236 = vpop.f32.mrb[0].mxu0
        %v1237 = vadd.f32 %v764, %v1236
        %v1238 = vpop.f32.mrb[0].mxu0
        %1239 = vdwg.mxu0
        %s1240 = sadd.s32 %s184, 24
        %s1241 = scalar_lea.vmem %s182, %s1240
        %v1242 = vld [vmem:[%s1241] sm:$0xff]
        %v1243 = vld [vmem:[%s1241 + $0x8] sm:$0xff]
        %v1244 = vld [vmem:[%s1241 + $0x10] sm:$0xff]
        %v1245 = vld [vmem:[%s1241 + $0x18] sm:$0xff]
        %v1246 = vld [vmem:[%s1241 + $0x20] sm:$0xff]
        %v1247 = vld [vmem:[%s1241 + $0x28] sm:$0xff]
        %v1248 = vld [vmem:[%s1241 + $0x30] sm:$0xff]
        %v1249 = vld [vmem:[%s1241 + $0x38] sm:$0xff]
        %v1250 = vld [vmem:[%s1241 + $0x40] sm:$0xff]
        %v1251 = vld [vmem:[%s1241 + $0x48] sm:$0xff]
        %v1252 = vld [vmem:[%s1241 + $0x50] sm:$0xff]
        %v1253 = vld [vmem:[%s1241 + $0x58] sm:$0xff]
        %v1254 = vld [vmem:[%s1241 + $0x60] sm:$0xff]
        %v1255 = vld [vmem:[%s1241 + $0x68] sm:$0xff]
        %v1256 = vld [vmem:[%s1241 + $0x70] sm:$0xff]
        %v1257 = vld [vmem:[%s1241 + $0x78] sm:$0xff]
        %v1258 = vld [vmem:[%s1241 + $0x80] sm:$0xff]
        %v1259 = vld [vmem:[%s1241 + $0x88] sm:$0xff]
        %v1260 = vld [vmem:[%s1241 + $0x90] sm:$0xff]
        %v1261 = vld [vmem:[%s1241 + $0x98] sm:$0xff]
        %v1262 = vld [vmem:[%s1241 + $0xa0] sm:$0xff]
        %v1263 = vld [vmem:[%s1241 + $0xa8] sm:$0xff]
        %v1264 = vld [vmem:[%s1241 + $0xb0] sm:$0xff]
        %v1265 = vld [vmem:[%s1241 + $0xb8] sm:$0xff]
        %v1266 = vld [vmem:[%s1241 + $0xc0] sm:$0xff]
        %v1267 = vld [vmem:[%s1241 + $0xc8] sm:$0xff]
        %v1268 = vld [vmem:[%s1241 + $0xd0] sm:$0xff]
        %v1269 = vld [vmem:[%s1241 + $0xd8] sm:$0xff]
        %v1270 = vld [vmem:[%s1241 + $0xe0] sm:$0xff]
        %v1271 = vld [vmem:[%s1241 + $0xe8] sm:$0xff]
        %v1272 = vld [vmem:[%s1241 + $0xf0] sm:$0xff]
        %v1273 = vld [vmem:[%s1241 + $0xf8] sm:$0xff]
        %v1274 = vld [vmem:[%s1241 + $0x100] sm:$0xff]
        %v1275 = vld [vmem:[%s1241 + $0x108] sm:$0xff]
        %v1276 = vld [vmem:[%s1241 + $0x110] sm:$0xff]
        %v1277 = vld [vmem:[%s1241 + $0x118] sm:$0xff]
        %v1278 = vld [vmem:[%s1241 + $0x120] sm:$0xff]
        %v1279 = vld [vmem:[%s1241 + $0x128] sm:$0xff]
        %v1280 = vld [vmem:[%s1241 + $0x130] sm:$0xff]
        %v1281 = vld [vmem:[%s1241 + $0x138] sm:$0xff]
        %v1282 = vld [vmem:[%s1241 + $0x140] sm:$0xff]
        %v1283 = vld [vmem:[%s1241 + $0x148] sm:$0xff]
        %v1284 = vld [vmem:[%s1241 + $0x150] sm:$0xff]
        %v1285 = vld [vmem:[%s1241 + $0x158] sm:$0xff]
        %v1286 = vld [vmem:[%s1241 + $0x160] sm:$0xff]
        %v1287 = vld [vmem:[%s1241 + $0x168] sm:$0xff]
        %v1288 = vld [vmem:[%s1241 + $0x170] sm:$0xff]
        %v1289 = vld [vmem:[%s1241 + $0x178] sm:$0xff]
        %v1290 = vld [vmem:[%s1241 + $0x180] sm:$0xff]
        %v1291 = vld [vmem:[%s1241 + $0x188] sm:$0xff]
        %v1292 = vld [vmem:[%s1241 + $0x190] sm:$0xff]
        %s1293 = scalar_lea.vmem %s1, 16
        %v1294 = vld [vmem:[%s1293] sm:$0xff]
        %v1296 = vsel %vm293, %v1242, 0
        %v1299 = vsel %vm293, %v1243, 0
        %v1302 = vsel %vm293, %v1244, 0
        %v1305 = vsel %vm293, %v1245, 0
        %v1308 = vsel %vm293, %v1246, 0
        %v1311 = vsel %vm293, %v1247, 0
        %v1314 = vsel %vm293, %v1248, 0
        %v1317 = vsel %vm293, %v1249, 0
        %v1320 = vsel %vm293, %v1250, 0
        %v1323 = vsel %vm293, %v1251, 0
        %v1326 = vsel %vm293, %v1252, 0
        %v1329 = vsel %vm293, %v1253, 0
        %v1332 = vsel %vm293, %v1254, 0
        %v1335 = vsel %vm293, %v1255, 0
        %v1338 = vsel %vm293, %v1256, 0
        %v1341 = vsel %vm293, %v1257, 0
        %v1344 = vsel %vm293, %v1258, 0
        %v1347 = vsel %vm293, %v1259, 0
        %v1350 = vsel %vm293, %v1260, 0
        %v1353 = vsel %vm293, %v1261, 0
        %v1356 = vsel %vm293, %v1262, 0
        %v1359 = vsel %vm293, %v1263, 0
        %v1362 = vsel %vm293, %v1264, 0
        %v1365 = vsel %vm293, %v1265, 0
        %v1368 = vsel %vm293, %v1266, 0
        %v1371 = vsel %vm293, %v1267, 0
        %v1374 = vsel %vm293, %v1268, 0
        %v1377 = vsel %vm293, %v1269, 0
        %v1380 = vsel %vm293, %v1270, 0
        %v1383 = vsel %vm293, %v1271, 0
        %v1386 = vsel %vm293, %v1272, 0
        %v1389 = vsel %vm293, %v1273, 0
        %v1392 = vsel %vm293, %v1274, 0
        %v1395 = vsel %vm293, %v1275, 0
        %v1398 = vsel %vm293, %v1276, 0
        %v1401 = vsel %vm293, %v1277, 0
        %v1404 = vsel %vm293, %v1278, 0
        %v1407 = vsel %vm293, %v1279, 0
        %v1410 = vsel %vm293, %v1280, 0
        %v1413 = vsel %vm293, %v1281, 0
        %v1416 = vsel %vm293, %v1282, 0
        %v1419 = vsel %vm293, %v1283, 0
        %v1422 = vsel %vm293, %v1284, 0
        %v1425 = vsel %vm293, %v1285, 0
        %v1428 = vsel %vm293, %v1286, 0
        %v1431 = vsel %vm293, %v1287, 0
        %v1434 = vsel %vm293, %v1288, 0
        %v1437 = vsel %vm293, %v1289, 0
        %v1440 = vsel %vm293, %v1290, 0
        %v1443 = vsel %vm293, %v1291, 0
        %v1446 = vsel %vm293, %v1292, 0
        %1448 = vmatprep.subr.mxu0 0.0
        %1449 = vmatpush1.msra.mxu0 %v1294
        %1450 = vmatprep.subr.mxu0 0.0
        %1451 = vmatpush1.msra.mxu0 0.0
        %1452 = vmatprep.subr.mxu0 0.0
        %1453 = vmatpush1.msra.mxu0 0.0
        %1454 = vmatprep.subr.mxu0 0.0
        %1455 = vmatpush1.msra.mxu0 0.0
        %1456 = vmatprep.subr.mxu0 0.0
        %1457 = vmatpush1.msra.mxu0 0.0
        %1458 = vmatprep.subr.mxu0 0.0
        %1459 = vmatpush1.msra.mxu0 0.0
        %1460 = vmatprep.subr.mxu0 0.0
        %1461 = vmatpush1.msra.mxu0 0.0
        %1462 = vmatprep.subr.mxu0 0.0
        %1463 = vmatpush1.msra.mxu0 0.0
        %1464 = vmatprep.subr.mxu0 0.0
        %1465 = vmatpush1.msra.mxu0 0.0
        %1466 = vmatprep.subr.mxu0 0.0
        %1467 = vmatpush1.msra.mxu0 0.0
        %1468 = vmatprep.subr.mxu0 0.0
        %1469 = vmatpush1.msra.mxu0 0.0
        %1470 = vmatprep.subr.mxu0 0.0
        %1471 = vmatpush1.msra.mxu0 0.0
        %1472 = vmatprep.subr.mxu0 0.0
        %1473 = vmatpush1.msra.mxu0 0.0
        %1474 = vmatprep.subr.mxu0 0.0
        %1475 = vmatpush1.msra.mxu0 0.0
        %1476 = vmatprep.subr.mxu0 0.0
        %1477 = vmatpush1.msra.mxu0 0.0
        %1478 = vmatprep.subr.mxu0 0.0
        %1479 = vmatpush1.msra.mxu0 0.0
        %1480 = vmatprep.subr.mxu0 0.0
        %1481 = vmatpush1.msra.mxu0 0.0
        %1482 = vmatprep.subr.mxu0 0.0
        %1483 = vmatpush1.msra.mxu0 0.0
        %1484 = vmatprep.subr.mxu0 0.0
        %1485 = vmatpush1.msra.mxu0 0.0
        %1486 = vmatprep.subr.mxu0 0.0
        %1487 = vmatpush1.msra.mxu0 0.0
        %1488 = vmatprep.subr.mxu0 0.0
        %1489 = vmatpush1.msra.mxu0 0.0
        %1490 = vmatprep.subr.mxu0 0.0
        %1491 = vmatpush1.msra.mxu0 0.0
        %1492 = vmatprep.subr.mxu0 0.0
        %1493 = vmatpush1.msra.mxu0 0.0
        %1494 = vmatprep.subr.mxu0 0.0
        %1495 = vmatpush1.msra.mxu0 0.0
        %1496 = vmatprep.subr.mxu0 0.0
        %1497 = vmatpush1.msra.mxu0 0.0
        %1498 = vmatprep.subr.mxu0 0.0
        %1499 = vmatpush1.msra.mxu0 0.0
        %1500 = vmatprep.subr.mxu0 0.0
        %1501 = vmatpush1.msra.mxu0 0.0
        %1502 = vmatprep.subr.mxu0 0.0
        %1503 = vmatpush1.msra.mxu0 0.0
        %1504 = vmatprep.subr.mxu0 0.0
        %1505 = vmatpush1.msra.mxu0 0.0
        %1506 = vmatprep.subr.mxu0 0.0
        %1507 = vmatpush1.msra.mxu0 0.0
        %1508 = vmatprep.subr.mxu0 0.0
        %1509 = vmatpush1.msra.mxu0 0.0
        %1510 = vmatprep.subr.mxu0 0.0
        %1511 = vmatpush1.msra.mxu0 0.0
        %1512 = vmatprep.mubr.f32.mxu0 0.0
        %1513 = vmatmul.mubr.f32.gmra.mrb[0].mxu0 %v1296
        %v1514 = vpop.f32.mrb[0].mxu0
        %v1515 = vadd.f32 0.0, %v1514
        %v1516 = vpop.f32.mrb[0].mxu0
        %1517 = vmatprep.mubr.f32.mxu0 0.0
        %1518 = vmatmul.mubr.f32.gmra.mrb[0].mxu0 %v1299
        %v1519 = vpop.f32.mrb[0].mxu0
        %v1520 = vadd.f32 0.0, %v1519
        %v1521 = vpop.f32.mrb[0].mxu0
        %1522 = vmatprep.mubr.f32.mxu0 0.0
        %1523 = vmatmul.mubr.f32.gmra.mrb[0].mxu0 %v1302
        %v1524 = vpop.f32.mrb[0].mxu0
        %v1525 = vadd.f32 0.0, %v1524
        %v1526 = vpop.f32.mrb[0].mxu0
        %1527 = vmatprep.mubr.f32.mxu0 0.0
        %1528 = vmatmul.mubr.f32.gmra.mrb[0].mxu0 %v1305
        %v1529 = vpop.f32.mrb[0].mxu0
        %v1530 = vadd.f32 0.0, %v1529
        %v1531 = vpop.f32.mrb[0].mxu0
        %1532 = vmatprep.mubr.f32.mxu0 0.0
        %1533 = vmatmul.mubr.f32.gmra.mrb[0].mxu0 %v1308
        %v1534 = vpop.f32.mrb[0].mxu0
        %v1535 = vadd.f32 0.0, %v1534
        %v1536 = vpop.f32.mrb[0].mxu0
        %1537 = vmatprep.mubr.f32.mxu0 0.0
        %1538 = vmatmul.mubr.f32.gmra.mrb[0].mxu0 %v1311
        %v1539 = vpop.f32.mrb[0].mxu0
        %v1540 = vadd.f32 0.0, %v1539
        %v1541 = vpop.f32.mrb[0].mxu0
        %1542 = vmatprep.mubr.f32.mxu0 0.0
        %1543 = vmatmul.mubr.f32.gmra.mrb[0].mxu0 %v1314
        %v1544 = vpop.f32.mrb[0].mxu0
        %v1545 = vadd.f32 0.0, %v1544
        %v1546 = vpop.f32.mrb[0].mxu0
        %1547 = vmatprep.mubr.f32.mxu0 0.0
        %1548 = vmatmul.mubr.f32.gmra.mrb[0].mxu0 %v1317
        %v1549 = vpop.f32.mrb[0].mxu0
        %v1550 = vadd.f32 0.0, %v1549
        %v1551 = vpop.f32.mrb[0].mxu0
        %1552 = vmatprep.mubr.f32.mxu0 0.0
        %1553 = vmatmul.mubr.f32.gmra.mrb[0].mxu0 %v1320
        %v1554 = vpop.f32.mrb[0].mxu0
        %v1555 = vadd.f32 0.0, %v1554
        %v1556 = vpop.f32.mrb[0].mxu0
        %1557 = vmatprep.mubr.f32.mxu0 0.0
        %1558 = vmatmul.mubr.f32.gmra.mrb[0].mxu0 %v1323
        %v1559 = vpop.f32.mrb[0].mxu0
        %v1560 = vadd.f32 0.0, %v1559
        %v1561 = vpop.f32.mrb[0].mxu0
        %1562 = vmatprep.mubr.f32.mxu0 0.0
        %1563 = vmatmul.mubr.f32.gmra.mrb[0].mxu0 %v1326
        %v1564 = vpop.f32.mrb[0].mxu0
        %v1565 = vadd.f32 0.0, %v1564
        %v1566 = vpop.f32.mrb[0].mxu0
        %1567 = vmatprep.mubr.f32.mxu0 0.0
        %1568 = vmatmul.mubr.f32.gmra.mrb[0].mxu0 %v1329
        %v1569 = vpop.f32.mrb[0].mxu0
        %v1570 = vadd.f32 0.0, %v1569
        %v1571 = vpop.f32.mrb[0].mxu0
        %1572 = vmatprep.mubr.f32.mxu0 0.0
        %1573 = vmatmul.mubr.f32.gmra.mrb[0].mxu0 %v1332
        %v1574 = vpop.f32.mrb[0].mxu0
        %v1575 = vadd.f32 0.0, %v1574
        %v1576 = vpop.f32.mrb[0].mxu0
        %1577 = vmatprep.mubr.f32.mxu0 0.0
        %1578 = vmatmul.mubr.f32.gmra.mrb[0].mxu0 %v1335
        %v1579 = vpop.f32.mrb[0].mxu0
        %v1580 = vadd.f32 0.0, %v1579
        %v1581 = vpop.f32.mrb[0].mxu0
        %1582 = vmatprep.mubr.f32.mxu0 0.0
        %1583 = vmatmul.mubr.f32.gmra.mrb[0].mxu0 %v1338
        %v1584 = vpop.f32.mrb[0].mxu0
        %v1585 = vadd.f32 0.0, %v1584
        %v1586 = vpop.f32.mrb[0].mxu0
        %1587 = vmatprep.mubr.f32.mxu0 0.0
        %1588 = vmatmul.mubr.f32.gmra.mrb[0].mxu0 %v1341
        %v1589 = vpop.f32.mrb[0].mxu0
        %v1590 = vadd.f32 0.0, %v1589
        %v1591 = vpop.f32.mrb[0].mxu0
        %1592 = vmatprep.mubr.f32.mxu0 0.0
        %1593 = vmatmul.mubr.f32.gmra.mrb[0].mxu0 %v1344
        %v1594 = vpop.f32.mrb[0].mxu0
        %v1595 = vadd.f32 0.0, %v1594
        %v1596 = vpop.f32.mrb[0].mxu0
        %1597 = vmatprep.mubr.f32.mxu0 0.0
        %1598 = vmatmul.mubr.f32.gmra.mrb[0].mxu0 %v1347
        %v1599 = vpop.f32.mrb[0].mxu0
        %v1600 = vadd.f32 0.0, %v1599
        %v1601 = vpop.f32.mrb[0].mxu0
        %1602 = vmatprep.mubr.f32.mxu0 0.0
        %1603 = vmatmul.mubr.f32.gmra.mrb[0].mxu0 %v1350
        %v1604 = vpop.f32.mrb[0].mxu0
        %v1605 = vadd.f32 0.0, %v1604
        %v1606 = vpop.f32.mrb[0].mxu0
        %1607 = vmatprep.mubr.f32.mxu0 0.0
        %1608 = vmatmul.mubr.f32.gmra.mrb[0].mxu0 %v1353
        %v1609 = vpop.f32.mrb[0].mxu0
        %v1610 = vadd.f32 0.0, %v1609
        %v1611 = vpop.f32.mrb[0].mxu0
        %1612 = vmatprep.mubr.f32.mxu0 0.0
        %1613 = vmatmul.mubr.f32.gmra.mrb[0].mxu0 %v1356
        %v1614 = vpop.f32.mrb[0].mxu0
        %v1615 = vadd.f32 0.0, %v1614
        %v1616 = vpop.f32.mrb[0].mxu0
        %1617 = vmatprep.mubr.f32.mxu0 0.0
        %1618 = vmatmul.mubr.f32.gmra.mrb[0].mxu0 %v1359
        %v1619 = vpop.f32.mrb[0].mxu0
        %v1620 = vadd.f32 0.0, %v1619
        %v1621 = vpop.f32.mrb[0].mxu0
        %1622 = vmatprep.mubr.f32.mxu0 0.0
        %1623 = vmatmul.mubr.f32.gmra.mrb[0].mxu0 %v1362
        %v1624 = vpop.f32.mrb[0].mxu0
        %v1625 = vadd.f32 0.0, %v1624
        %v1626 = vpop.f32.mrb[0].mxu0
        %1627 = vmatprep.mubr.f32.mxu0 0.0
        %1628 = vmatmul.mubr.f32.gmra.mrb[0].mxu0 %v1365
        %v1629 = vpop.f32.mrb[0].mxu0
        %v1630 = vadd.f32 0.0, %v1629
        %v1631 = vpop.f32.mrb[0].mxu0
        %1632 = vmatprep.mubr.f32.mxu0 0.0
        %1633 = vmatmul.mubr.f32.gmra.mrb[0].mxu0 %v1368
        %v1634 = vpop.f32.mrb[0].mxu0
        %v1635 = vadd.f32 0.0, %v1634
        %v1636 = vpop.f32.mrb[0].mxu0
        %1637 = vmatprep.mubr.f32.mxu0 0.0
        %1638 = vmatmul.mubr.f32.gmra.mrb[0].mxu0 %v1371
        %v1639 = vpop.f32.mrb[0].mxu0
        %v1640 = vadd.f32 0.0, %v1639
        %v1641 = vpop.f32.mrb[0].mxu0
        %1642 = vmatprep.mubr.f32.mxu0 0.0
        %1643 = vmatmul.mubr.f32.gmra.mrb[0].mxu0 %v1374
        %v1644 = vpop.f32.mrb[0].mxu0
        %v1645 = vadd.f32 0.0, %v1644
        %v1646 = vpop.f32.mrb[0].mxu0
        %1647 = vmatprep.mubr.f32.mxu0 0.0
        %1648 = vmatmul.mubr.f32.gmra.mrb[0].mxu0 %v1377
        %v1649 = vpop.f32.mrb[0].mxu0
        %v1650 = vadd.f32 0.0, %v1649
        %v1651 = vpop.f32.mrb[0].mxu0
        %1652 = vmatprep.mubr.f32.mxu0 0.0
        %1653 = vmatmul.mubr.f32.gmra.mrb[0].mxu0 %v1380
        %v1654 = vpop.f32.mrb[0].mxu0
        %v1655 = vadd.f32 0.0, %v1654
        %v1656 = vpop.f32.mrb[0].mxu0
        %1657 = vmatprep.mubr.f32.mxu0 0.0
        %1658 = vmatmul.mubr.f32.gmra.mrb[0].mxu0 %v1383
        %v1659 = vpop.f32.mrb[0].mxu0
        %v1660 = vadd.f32 0.0, %v1659
        %v1661 = vpop.f32.mrb[0].mxu0
        %1662 = vmatprep.mubr.f32.mxu0 0.0
        %1663 = vmatmul.mubr.f32.gmra.mrb[0].mxu0 %v1386
        %v1664 = vpop.f32.mrb[0].mxu0
        %v1665 = vadd.f32 0.0, %v1664
        %v1666 = vpop.f32.mrb[0].mxu0
        %1667 = vmatprep.mubr.f32.mxu0 0.0
        %1668 = vmatmul.mubr.f32.gmra.mrb[0].mxu0 %v1389
        %v1669 = vpop.f32.mrb[0].mxu0
        %v1670 = vadd.f32 0.0, %v1669
        %v1671 = vpop.f32.mrb[0].mxu0
        %1672 = vmatprep.mubr.f32.mxu0 0.0
        %1673 = vmatmul.mubr.f32.gmra.mrb[0].mxu0 %v1392
        %v1674 = vpop.f32.mrb[0].mxu0
        %v1675 = vadd.f32 0.0, %v1674
        %v1676 = vpop.f32.mrb[0].mxu0
        %1677 = vmatprep.mubr.f32.mxu0 0.0
        %1678 = vmatmul.mubr.f32.gmra.mrb[0].mxu0 %v1395
        %v1679 = vpop.f32.mrb[0].mxu0
        %v1680 = vadd.f32 0.0, %v1679
        %v1681 = vpop.f32.mrb[0].mxu0
        %1682 = vmatprep.mubr.f32.mxu0 0.0
        %1683 = vmatmul.mubr.f32.gmra.mrb[0].mxu0 %v1398
        %v1684 = vpop.f32.mrb[0].mxu0
        %v1685 = vadd.f32 0.0, %v1684
        %v1686 = vpop.f32.mrb[0].mxu0
        %1687 = vmatprep.mubr.f32.mxu0 0.0
        %1688 = vmatmul.mubr.f32.gmra.mrb[0].mxu0 %v1401
        %v1689 = vpop.f32.mrb[0].mxu0
        %v1690 = vadd.f32 0.0, %v1689
        %v1691 = vpop.f32.mrb[0].mxu0
        %1692 = vmatprep.mubr.f32.mxu0 0.0
        %1693 = vmatmul.mubr.f32.gmra.mrb[0].mxu0 %v1404
        %v1694 = vpop.f32.mrb[0].mxu0
        %v1695 = vadd.f32 0.0, %v1694
        %v1696 = vpop.f32.mrb[0].mxu0
        %1697 = vmatprep.mubr.f32.mxu0 0.0
        %1698 = vmatmul.mubr.f32.gmra.mrb[0].mxu0 %v1407
        %v1699 = vpop.f32.mrb[0].mxu0
        %v1700 = vadd.f32 0.0, %v1699
        %v1701 = vpop.f32.mrb[0].mxu0
        %1702 = vmatprep.mubr.f32.mxu0 0.0
        %1703 = vmatmul.mubr.f32.gmra.mrb[0].mxu0 %v1410
        %v1704 = vpop.f32.mrb[0].mxu0
        %v1705 = vadd.f32 0.0, %v1704
        %v1706 = vpop.f32.mrb[0].mxu0
        %1707 = vmatprep.mubr.f32.mxu0 0.0
        %1708 = vmatmul.mubr.f32.gmra.mrb[0].mxu0 %v1413
        %v1709 = vpop.f32.mrb[0].mxu0
        %v1710 = vadd.f32 0.0, %v1709
        %v1711 = vpop.f32.mrb[0].mxu0
        %1712 = vmatprep.mubr.f32.mxu0 0.0
        %1713 = vmatmul.mubr.f32.gmra.mrb[0].mxu0 %v1416
        %v1714 = vpop.f32.mrb[0].mxu0
        %v1715 = vadd.f32 0.0, %v1714
        %v1716 = vpop.f32.mrb[0].mxu0
        %1717 = vmatprep.mubr.f32.mxu0 0.0
        %1718 = vmatmul.mubr.f32.gmra.mrb[0].mxu0 %v1419
        %v1719 = vpop.f32.mrb[0].mxu0
        %v1720 = vadd.f32 0.0, %v1719
        %v1721 = vpop.f32.mrb[0].mxu0
        %1722 = vmatprep.mubr.f32.mxu0 0.0
        %1723 = vmatmul.mubr.f32.gmra.mrb[0].mxu0 %v1422
        %v1724 = vpop.f32.mrb[0].mxu0
        %v1725 = vadd.f32 0.0, %v1724
        %v1726 = vpop.f32.mrb[0].mxu0
        %1727 = vmatprep.mubr.f32.mxu0 0.0
        %1728 = vmatmul.mubr.f32.gmra.mrb[0].mxu0 %v1425
        %v1729 = vpop.f32.mrb[0].mxu0
        %v1730 = vadd.f32 0.0, %v1729
        %v1731 = vpop.f32.mrb[0].mxu0
        %1732 = vmatprep.mubr.f32.mxu0 0.0
        %1733 = vmatmul.mubr.f32.gmra.mrb[0].mxu0 %v1428
        %v1734 = vpop.f32.mrb[0].mxu0
        %v1735 = vadd.f32 0.0, %v1734
        %v1736 = vpop.f32.mrb[0].mxu0
        %1737 = vmatprep.mubr.f32.mxu0 0.0
        %1738 = vmatmul.mubr.f32.gmra.mrb[0].mxu0 %v1431
        %v1739 = vpop.f32.mrb[0].mxu0
        %v1740 = vadd.f32 0.0, %v1739
        %v1741 = vpop.f32.mrb[0].mxu0
        %1742 = vmatprep.mubr.f32.mxu0 0.0
        %1743 = vmatmul.mubr.f32.gmra.mrb[0].mxu0 %v1434
        %v1744 = vpop.f32.mrb[0].mxu0
        %v1745 = vadd.f32 0.0, %v1744
        %v1746 = vpop.f32.mrb[0].mxu0
        %1747 = vmatprep.mubr.f32.mxu0 0.0
        %1748 = vmatmul.mubr.f32.gmra.mrb[0].mxu0 %v1437
        %v1749 = vpop.f32.mrb[0].mxu0
        %v1750 = vadd.f32 0.0, %v1749
        %v1751 = vpop.f32.mrb[0].mxu0
        %1752 = vmatprep.mubr.f32.mxu0 0.0
        %1753 = vmatmul.mubr.f32.gmra.mrb[0].mxu0 %v1440
        %v1754 = vpop.f32.mrb[0].mxu0
        %v1755 = vadd.f32 0.0, %v1754
        %v1756 = vpop.f32.mrb[0].mxu0
        %1757 = vmatprep.mubr.f32.mxu0 0.0
        %1758 = vmatmul.mubr.f32.gmra.mrb[0].mxu0 %v1443
        %v1759 = vpop.f32.mrb[0].mxu0
        %v1760 = vadd.f32 0.0, %v1759
        %v1761 = vpop.f32.mrb[0].mxu0
        %1762 = vmatprep.mubr.f32.mxu0 0.0
        %1763 = vmatmul.mubr.f32.gmra.mrb[0].mxu0 %v1446
        %v1764 = vpop.f32.mrb[0].mxu0
        %v1765 = vadd.f32 0.0, %v1764
        %v1766 = vpop.f32.mrb[0].mxu0
        %1767 = vdwg.mxu0
        %v1768 = vadd.f32 %v987, %v1515
        %v1769 = vadd.f32 %v992, %v1520
        %v1770 = vadd.f32 %v997, %v1525
        %v1771 = vadd.f32 %v1002, %v1530
        %v1772 = vadd.f32 %v1007, %v1535
        %v1773 = vadd.f32 %v1012, %v1540
        %v1774 = vadd.f32 %v1017, %v1545
        %v1775 = vadd.f32 %v1022, %v1550
        %v1776 = vadd.f32 %v1027, %v1555
        %v1777 = vadd.f32 %v1032, %v1560
        %v1778 = vadd.f32 %v1037, %v1565
        %v1779 = vadd.f32 %v1042, %v1570
        %v1780 = vadd.f32 %v1047, %v1575
        %v1781 = vadd.f32 %v1052, %v1580
        %v1782 = vadd.f32 %v1057, %v1585
        %v1783 = vadd.f32 %v1062, %v1590
        %v1784 = vadd.f32 %v1067, %v1595
        %v1785 = vadd.f32 %v1072, %v1600
        %v1786 = vadd.f32 %v1077, %v1605
        %v1787 = vadd.f32 %v1082, %v1610
        %v1788 = vadd.f32 %v1087, %v1615
        %v1789 = vadd.f32 %v1092, %v1620
        %v1790 = vadd.f32 %v1097, %v1625
        %v1791 = vadd.f32 %v1102, %v1630
        %v1792 = vadd.f32 %v1107, %v1635
        %v1793 = vadd.f32 %v1112, %v1640
        %v1794 = vadd.f32 %v1117, %v1645
        %v1795 = vadd.f32 %v1122, %v1650
        %v1796 = vadd.f32 %v1127, %v1655
        %v1797 = vadd.f32 %v1132, %v1660
        %v1798 = vadd.f32 %v1137, %v1665
        %v1799 = vadd.f32 %v1142, %v1670
        %v1800 = vadd.f32 %v1147, %v1675
        %v1801 = vadd.f32 %v1152, %v1680
        %v1802 = vadd.f32 %v1157, %v1685
        %v1803 = vadd.f32 %v1162, %v1690
        %v1804 = vadd.f32 %v1167, %v1695
        %v1805 = vadd.f32 %v1172, %v1700
        %v1806 = vadd.f32 %v1177, %v1705
        %v1807 = vadd.f32 %v1182, %v1710
        %v1808 = vadd.f32 %v1187, %v1715
        %v1809 = vadd.f32 %v1192, %v1720
        %v1810 = vadd.f32 %v1197, %v1725
        %v1811 = vadd.f32 %v1202, %v1730
        %v1812 = vadd.f32 %v1207, %v1735
        %v1813 = vadd.f32 %v1212, %v1740
        %v1814 = vadd.f32 %v1217, %v1745
        %v1815 = vadd.f32 %v1222, %v1750
        %v1816 = vadd.f32 %v1227, %v1755
        %v1817 = vadd.f32 %v1232, %v1760
        %v1818 = vadd.f32 %v1237, %v1765
        %s1819 = sadd.s32 %s1240, 1
        %s1820 = scalar_lea.vmem %s182, %s1819
        %v1821 = vld [vmem:[%s1820] sm:$0xff]
        %v1822 = vld [vmem:[%s1820 + $0x8] sm:$0xff]
        %v1823 = vld [vmem:[%s1820 + $0x10] sm:$0xff]
        %v1824 = vld [vmem:[%s1820 + $0x18] sm:$0xff]
        %v1825 = vld [vmem:[%s1820 + $0x20] sm:$0xff]
        %v1826 = vld [vmem:[%s1820 + $0x28] sm:$0xff]
        %v1827 = vld [vmem:[%s1820 + $0x30] sm:$0xff]
        %v1828 = vld [vmem:[%s1820 + $0x38] sm:$0xff]
        %v1829 = vld [vmem:[%s1820 + $0x40] sm:$0xff]
        %v1830 = vld [vmem:[%s1820 + $0x48] sm:$0xff]
        %v1831 = vld [vmem:[%s1820 + $0x50] sm:$0xff]
        %v1832 = vld [vmem:[%s1820 + $0x58] sm:$0xff]
        %v1833 = vld [vmem:[%s1820 + $0x60] sm:$0xff]
        %v1834 = vld [vmem:[%s1820 + $0x68] sm:$0xff]
        %v1835 = vld [vmem:[%s1820 + $0x70] sm:$0xff]
        %v1836 = vld [vmem:[%s1820 + $0x78] sm:$0xff]
        %v1837 = vld [vmem:[%s1820 + $0x80] sm:$0xff]
        %v1838 = vld [vmem:[%s1820 + $0x88] sm:$0xff]
        %v1839 = vld [vmem:[%s1820 + $0x90] sm:$0xff]
        %v1840 = vld [vmem:[%s1820 + $0x98] sm:$0xff]
        %v1841 = vld [vmem:[%s1820 + $0xa0] sm:$0xff]
        %v1842 = vld [vmem:[%s1820 + $0xa8] sm:$0xff]
        %v1843 = vld [vmem:[%s1820 + $0xb0] sm:$0xff]
        %v1844 = vld [vmem:[%s1820 + $0xb8] sm:$0xff]
        %v1845 = vld [vmem:[%s1820 + $0xc0] sm:$0xff]
        %v1846 = vld [vmem:[%s1820 + $0xc8] sm:$0xff]
        %v1847 = vld [vmem:[%s1820 + $0xd0] sm:$0xff]
        %v1848 = vld [vmem:[%s1820 + $0xd8] sm:$0xff]
        %v1849 = vld [vmem:[%s1820 + $0xe0] sm:$0xff]
        %v1850 = vld [vmem:[%s1820 + $0xe8] sm:$0xff]
        %v1851 = vld [vmem:[%s1820 + $0xf0] sm:$0xff]
        %v1852 = vld [vmem:[%s1820 + $0xf8] sm:$0xff]
        %v1853 = vld [vmem:[%s1820 + $0x100] sm:$0xff]
        %v1854 = vld [vmem:[%s1820 + $0x108] sm:$0xff]
        %v1855 = vld [vmem:[%s1820 + $0x110] sm:$0xff]
        %v1856 = vld [vmem:[%s1820 + $0x118] sm:$0xff]
        %v1857 = vld [vmem:[%s1820 + $0x120] sm:$0xff]
        %v1858 = vld [vmem:[%s1820 + $0x128] sm:$0xff]
        %v1859 = vld [vmem:[%s1820 + $0x130] sm:$0xff]
        %v1860 = vld [vmem:[%s1820 + $0x138] sm:$0xff]
        %v1861 = vld [vmem:[%s1820 + $0x140] sm:$0xff]
        %v1862 = vld [vmem:[%s1820 + $0x148] sm:$0xff]
        %v1863 = vld [vmem:[%s1820 + $0x150] sm:$0xff]
        %v1864 = vld [vmem:[%s1820 + $0x158] sm:$0xff]
        %v1865 = vld [vmem:[%s1820 + $0x160] sm:$0xff]
        %v1866 = vld [vmem:[%s1820 + $0x168] sm:$0xff]
        %v1867 = vld [vmem:[%s1820 + $0x170] sm:$0xff]
        %v1868 = vld [vmem:[%s1820 + $0x178] sm:$0xff]
        %v1869 = vld [vmem:[%s1820 + $0x180] sm:$0xff]
        %v1870 = vld [vmem:[%s1820 + $0x188] sm:$0xff]
        %v1871 = vld [vmem:[%s1820 + $0x190] sm:$0xff]
        %s1872 = scalar_lea.vmem %s1, 24
        %v1873 = vld [vmem:[%s1872] sm:$0xff]
        %v1875 = vsel %vm293, %v1821, 0
        %v1878 = vsel %vm293, %v1822, 0
        %v1881 = vsel %vm293, %v1823, 0
        %v1884 = vsel %vm293, %v1824, 0
        %v1887 = vsel %vm293, %v1825, 0
        %v1890 = vsel %vm293, %v1826, 0
        %v1893 = vsel %vm293, %v1827, 0
        %v1896 = vsel %vm293, %v1828, 0
        %v1899 = vsel %vm293, %v1829, 0
        %v1902 = vsel %vm293, %v1830, 0
        %v1905 = vsel %vm293, %v1831, 0
        %v1908 = vsel %vm293, %v1832, 0
        %v1911 = vsel %vm293, %v1833, 0
        %v1914 = vsel %vm293, %v1834, 0
        %v1917 = vsel %vm293, %v1835, 0
        %v1920 = vsel %vm293, %v1836, 0
        %v1923 = vsel %vm293, %v1837, 0
        %v1926 = vsel %vm293, %v1838, 0
        %v1929 = vsel %vm293, %v1839, 0
        %v1932 = vsel %vm293, %v1840, 0
        %v1935 = vsel %vm293, %v1841, 0
        %v1938 = vsel %vm293, %v1842, 0
        %v1941 = vsel %vm293, %v1843, 0
        %v1944 = vsel %vm293, %v1844, 0
        %v1947 = vsel %vm293, %v1845, 0
        %v1950 = vsel %vm293, %v1846, 0
        %v1953 = vsel %vm293, %v1847, 0
        %v1956 = vsel %vm293, %v1848, 0
        %v1959 = vsel %vm293, %v1849, 0
        %v1962 = vsel %vm293, %v1850, 0
        %v1965 = vsel %vm293, %v1851, 0
        %v1968 = vsel %vm293, %v1852, 0
        %v1971 = vsel %vm293, %v1853, 0
        %v1974 = vsel %vm293, %v1854, 0
        %v1977 = vsel %vm293, %v1855, 0
        %v1980 = vsel %vm293, %v1856, 0
        %v1983 = vsel %vm293, %v1857, 0
        %v1986 = vsel %vm293, %v1858, 0
        %v1989 = vsel %vm293, %v1859, 0
        %v1992 = vsel %vm293, %v1860, 0
        %v1995 = vsel %vm293, %v1861, 0
        %v1998 = vsel %vm293, %v1862, 0
        %v2001 = vsel %vm293, %v1863, 0
        %v2004 = vsel %vm293, %v1864, 0
        %v2007 = vsel %vm293, %v1865, 0
        %v2010 = vsel %vm293, %v1866, 0
        %v2013 = vsel %vm293, %v1867, 0
        %v2016 = vsel %vm293, %v1868, 0
        %v2019 = vsel %vm293, %v1869, 0
        %v2022 = vsel %vm293, %v1870, 0
        %v2025 = vsel %vm293, %v1871, 0
        %2027 = vmatprep.subr.mxu0 0.0
        %2028 = vmatpush1.msra.mxu0 %v1873
        %2029 = vmatprep.subr.mxu0 0.0
        %2030 = vmatpush1.msra.mxu0 0.0
        %2031 = vmatprep.subr.mxu0 0.0
        %2032 = vmatpush1.msra.mxu0 0.0
        %2033 = vmatprep.subr.mxu0 0.0
        %2034 = vmatpush1.msra.mxu0 0.0
        %2035 = vmatprep.subr.mxu0 0.0
        %2036 = vmatpush1.msra.mxu0 0.0
        %2037 = vmatprep.subr.mxu0 0.0
        %2038 = vmatpush1.msra.mxu0 0.0
        %2039 = vmatprep.subr.mxu0 0.0
        %2040 = vmatpush1.msra.mxu0 0.0
        %2041 = vmatprep.subr.mxu0 0.0
        %2042 = vmatpush1.msra.mxu0 0.0
        %2043 = vmatprep.subr.mxu0 0.0
        %2044 = vmatpush1.msra.mxu0 0.0
        %2045 = vmatprep.subr.mxu0 0.0
        %2046 = vmatpush1.msra.mxu0 0.0
        %2047 = vmatprep.subr.mxu0 0.0
        %2048 = vmatpush1.msra.mxu0 0.0
        %2049 = vmatprep.subr.mxu0 0.0
        %2050 = vmatpush1.msra.mxu0 0.0
        %2051 = vmatprep.subr.mxu0 0.0
        %2052 = vmatpush1.msra.mxu0 0.0
        %2053 = vmatprep.subr.mxu0 0.0
        %2054 = vmatpush1.msra.mxu0 0.0
        %2055 = vmatprep.subr.mxu0 0.0
        %2056 = vmatpush1.msra.mxu0 0.0
        %2057 = vmatprep.subr.mxu0 0.0
        %2058 = vmatpush1.msra.mxu0 0.0
        %2059 = vmatprep.subr.mxu0 0.0
        %2060 = vmatpush1.msra.mxu0 0.0
        %2061 = vmatprep.subr.mxu0 0.0
        %2062 = vmatpush1.msra.mxu0 0.0
        %2063 = vmatprep.subr.mxu0 0.0
        %2064 = vmatpush1.msra.mxu0 0.0
        %2065 = vmatprep.subr.mxu0 0.0
        %2066 = vmatpush1.msra.mxu0 0.0
        %2067 = vmatprep.subr.mxu0 0.0
        %2068 = vmatpush1.msra.mxu0 0.0
        %2069 = vmatprep.subr.mxu0 0.0
        %2070 = vmatpush1.msra.mxu0 0.0
        %2071 = vmatprep.subr.mxu0 0.0
        %2072 = vmatpush1.msra.mxu0 0.0
        %2073 = vmatprep.subr.mxu0 0.0
        %2074 = vmatpush1.msra.mxu0 0.0
        %2075 = vmatprep.subr.mxu0 0.0
        %2076 = vmatpush1.msra.mxu0 0.0
        %2077 = vmatprep.subr.mxu0 0.0
        %2078 = vmatpush1.msra.mxu0 0.0
        %2079 = vmatprep.subr.mxu0 0.0
        %2080 = vmatpush1.msra.mxu0 0.0
        %2081 = vmatprep.subr.mxu0 0.0
        %2082 = vmatpush1.msra.mxu0 0.0
        %2083 = vmatprep.subr.mxu0 0.0
        %2084 = vmatpush1.msra.mxu0 0.0
        %2085 = vmatprep.subr.mxu0 0.0
        %2086 = vmatpush1.msra.mxu0 0.0
        %2087 = vmatprep.subr.mxu0 0.0
        %2088 = vmatpush1.msra.mxu0 0.0
        %2089 = vmatprep.subr.mxu0 0.0
        %2090 = vmatpush1.msra.mxu0 0.0
        %2091 = vmatprep.mubr.f32.mxu0 0.0
        %2092 = vmatmul.mubr.f32.gmra.mrb[0].mxu0 %v1875
        %v2093 = vpop.f32.mrb[0].mxu0
        %v2094 = vadd.f32 0.0, %v2093
        %v2095 = vpop.f32.mrb[0].mxu0
        %2096 = vmatprep.mubr.f32.mxu0 0.0
        %2097 = vmatmul.mubr.f32.gmra.mrb[0].mxu0 %v1878
        %v2098 = vpop.f32.mrb[0].mxu0
        %v2099 = vadd.f32 0.0, %v2098
        %v2100 = vpop.f32.mrb[0].mxu0
        %2101 = vmatprep.mubr.f32.mxu0 0.0
        %2102 = vmatmul.mubr.f32.gmra.mrb[0].mxu0 %v1881
        %v2103 = vpop.f32.mrb[0].mxu0
        %v2104 = vadd.f32 0.0, %v2103
        %v2105 = vpop.f32.mrb[0].mxu0
        %2106 = vmatprep.mubr.f32.mxu0 0.0
        %2107 = vmatmul.mubr.f32.gmra.mrb[0].mxu0 %v1884
        %v2108 = vpop.f32.mrb[0].mxu0
        %v2109 = vadd.f32 0.0, %v2108
        %v2110 = vpop.f32.mrb[0].mxu0
        %2111 = vmatprep.mubr.f32.mxu0 0.0
        %2112 = vmatmul.mubr.f32.gmra.mrb[0].mxu0 %v1887
        %v2113 = vpop.f32.mrb[0].mxu0
        %v2114 = vadd.f32 0.0, %v2113
        %v2115 = vpop.f32.mrb[0].mxu0
        %2116 = vmatprep.mubr.f32.mxu0 0.0
        %2117 = vmatmul.mubr.f32.gmra.mrb[0].mxu0 %v1890
        %v2118 = vpop.f32.mrb[0].mxu0
        %v2119 = vadd.f32 0.0, %v2118
        %v2120 = vpop.f32.mrb[0].mxu0
        %2121 = vmatprep.mubr.f32.mxu0 0.0
        %2122 = vmatmul.mubr.f32.gmra.mrb[0].mxu0 %v1893
        %v2123 = vpop.f32.mrb[0].mxu0
        %v2124 = vadd.f32 0.0, %v2123
        %v2125 = vpop.f32.mrb[0].mxu0
        %2126 = vmatprep.mubr.f32.mxu0 0.0
        %2127 = vmatmul.mubr.f32.gmra.mrb[0].mxu0 %v1896
        %v2128 = vpop.f32.mrb[0].mxu0
        %v2129 = vadd.f32 0.0, %v2128
        %v2130 = vpop.f32.mrb[0].mxu0
        %2131 = vmatprep.mubr.f32.mxu0 0.0
        %2132 = vmatmul.mubr.f32.gmra.mrb[0].mxu0 %v1899
        %v2133 = vpop.f32.mrb[0].mxu0
        %v2134 = vadd.f32 0.0, %v2133
        %v2135 = vpop.f32.mrb[0].mxu0
        %2136 = vmatprep.mubr.f32.mxu0 0.0
        %2137 = vmatmul.mubr.f32.gmra.mrb[0].mxu0 %v1902
        %v2138 = vpop.f32.mrb[0].mxu0
        %v2139 = vadd.f32 0.0, %v2138
        %v2140 = vpop.f32.mrb[0].mxu0
        %2141 = vmatprep.mubr.f32.mxu0 0.0
        %2142 = vmatmul.mubr.f32.gmra.mrb[0].mxu0 %v1905
        %v2143 = vpop.f32.mrb[0].mxu0
        %v2144 = vadd.f32 0.0, %v2143
        %v2145 = vpop.f32.mrb[0].mxu0
        %2146 = vmatprep.mubr.f32.mxu0 0.0
        %2147 = vmatmul.mubr.f32.gmra.mrb[0].mxu0 %v1908
        %v2148 = vpop.f32.mrb[0].mxu0
        %v2149 = vadd.f32 0.0, %v2148
        %v2150 = vpop.f32.mrb[0].mxu0
        %2151 = vmatprep.mubr.f32.mxu0 0.0
        %2152 = vmatmul.mubr.f32.gmra.mrb[0].mxu0 %v1911
        %v2153 = vpop.f32.mrb[0].mxu0
        %v2154 = vadd.f32 0.0, %v2153
        %v2155 = vpop.f32.mrb[0].mxu0
        %2156 = vmatprep.mubr.f32.mxu0 0.0
        %2157 = vmatmul.mubr.f32.gmra.mrb[0].mxu0 %v1914
        %v2158 = vpop.f32.mrb[0].mxu0
        %v2159 = vadd.f32 0.0, %v2158
        %v2160 = vpop.f32.mrb[0].mxu0
        %2161 = vmatprep.mubr.f32.mxu0 0.0
        %2162 = vmatmul.mubr.f32.gmra.mrb[0].mxu0 %v1917
        %v2163 = vpop.f32.mrb[0].mxu0
        %v2164 = vadd.f32 0.0, %v2163
        %v2165 = vpop.f32.mrb[0].mxu0
        %2166 = vmatprep.mubr.f32.mxu0 0.0
        %2167 = vmatmul.mubr.f32.gmra.mrb[0].mxu0 %v1920
        %v2168 = vpop.f32.mrb[0].mxu0
        %v2169 = vadd.f32 0.0, %v2168
        %v2170 = vpop.f32.mrb[0].mxu0
        %2171 = vmatprep.mubr.f32.mxu0 0.0
        %2172 = vmatmul.mubr.f32.gmra.mrb[0].mxu0 %v1923
        %v2173 = vpop.f32.mrb[0].mxu0
        %v2174 = vadd.f32 0.0, %v2173
        %v2175 = vpop.f32.mrb[0].mxu0
        %2176 = vmatprep.mubr.f32.mxu0 0.0
        %2177 = vmatmul.mubr.f32.gmra.mrb[0].mxu0 %v1926
        %v2178 = vpop.f32.mrb[0].mxu0
        %v2179 = vadd.f32 0.0, %v2178
        %v2180 = vpop.f32.mrb[0].mxu0
        %2181 = vmatprep.mubr.f32.mxu0 0.0
        %2182 = vmatmul.mubr.f32.gmra.mrb[0].mxu0 %v1929
        %v2183 = vpop.f32.mrb[0].mxu0
        %v2184 = vadd.f32 0.0, %v2183
        %v2185 = vpop.f32.mrb[0].mxu0
        %2186 = vmatprep.mubr.f32.mxu0 0.0
        %2187 = vmatmul.mubr.f32.gmra.mrb[0].mxu0 %v1932
        %v2188 = vpop.f32.mrb[0].mxu0
        %v2189 = vadd.f32 0.0, %v2188
        %v2190 = vpop.f32.mrb[0].mxu0
        %2191 = vmatprep.mubr.f32.mxu0 0.0
        %2192 = vmatmul.mubr.f32.gmra.mrb[0].mxu0 %v1935
        %v2193 = vpop.f32.mrb[0].mxu0
        %v2194 = vadd.f32 0.0, %v2193
        %v2195 = vpop.f32.mrb[0].mxu0
        %2196 = vmatprep.mubr.f32.mxu0 0.0
        %2197 = vmatmul.mubr.f32.gmra.mrb[0].mxu0 %v1938
        %v2198 = vpop.f32.mrb[0].mxu0
        %v2199 = vadd.f32 0.0, %v2198
        %v2200 = vpop.f32.mrb[0].mxu0
        %2201 = vmatprep.mubr.f32.mxu0 0.0
        %2202 = vmatmul.mubr.f32.gmra.mrb[0].mxu0 %v1941
        %v2203 = vpop.f32.mrb[0].mxu0
        %v2204 = vadd.f32 0.0, %v2203
        %v2205 = vpop.f32.mrb[0].mxu0
        %2206 = vmatprep.mubr.f32.mxu0 0.0
        %2207 = vmatmul.mubr.f32.gmra.mrb[0].mxu0 %v1944
        %v2208 = vpop.f32.mrb[0].mxu0
        %v2209 = vadd.f32 0.0, %v2208
        %v2210 = vpop.f32.mrb[0].mxu0
        %2211 = vmatprep.mubr.f32.mxu0 0.0
        %2212 = vmatmul.mubr.f32.gmra.mrb[0].mxu0 %v1947
        %v2213 = vpop.f32.mrb[0].mxu0
        %v2214 = vadd.f32 0.0, %v2213
        %v2215 = vpop.f32.mrb[0].mxu0
        %2216 = vmatprep.mubr.f32.mxu0 0.0
        %2217 = vmatmul.mubr.f32.gmra.mrb[0].mxu0 %v1950
        %v2218 = vpop.f32.mrb[0].mxu0
        %v2219 = vadd.f32 0.0, %v2218
        %v2220 = vpop.f32.mrb[0].mxu0
        %2221 = vmatprep.mubr.f32.mxu0 0.0
        %2222 = vmatmul.mubr.f32.gmra.mrb[0].mxu0 %v1953
        %v2223 = vpop.f32.mrb[0].mxu0
        %v2224 = vadd.f32 0.0, %v2223
        %v2225 = vpop.f32.mrb[0].mxu0
        %2226 = vmatprep.mubr.f32.mxu0 0.0
        %2227 = vmatmul.mubr.f32.gmra.mrb[0].mxu0 %v1956
        %v2228 = vpop.f32.mrb[0].mxu0
        %v2229 = vadd.f32 0.0, %v2228
        %v2230 = vpop.f32.mrb[0].mxu0
        %2231 = vmatprep.mubr.f32.mxu0 0.0
        %2232 = vmatmul.mubr.f32.gmra.mrb[0].mxu0 %v1959
        %v2233 = vpop.f32.mrb[0].mxu0
        %v2234 = vadd.f32 0.0, %v2233
        %v2235 = vpop.f32.mrb[0].mxu0
        %2236 = vmatprep.mubr.f32.mxu0 0.0
        %2237 = vmatmul.mubr.f32.gmra.mrb[0].mxu0 %v1962
        %v2238 = vpop.f32.mrb[0].mxu0
        %v2239 = vadd.f32 0.0, %v2238
        %v2240 = vpop.f32.mrb[0].mxu0
        %2241 = vmatprep.mubr.f32.mxu0 0.0
        %2242 = vmatmul.mubr.f32.gmra.mrb[0].mxu0 %v1965
        %v2243 = vpop.f32.mrb[0].mxu0
        %v2244 = vadd.f32 0.0, %v2243
        %v2245 = vpop.f32.mrb[0].mxu0
        %2246 = vmatprep.mubr.f32.mxu0 0.0
        %2247 = vmatmul.mubr.f32.gmra.mrb[0].mxu0 %v1968
        %v2248 = vpop.f32.mrb[0].mxu0
        %v2249 = vadd.f32 0.0, %v2248
        %v2250 = vpop.f32.mrb[0].mxu0
        %2251 = vmatprep.mubr.f32.mxu0 0.0
        %2252 = vmatmul.mubr.f32.gmra.mrb[0].mxu0 %v1971
        %v2253 = vpop.f32.mrb[0].mxu0
        %v2254 = vadd.f32 0.0, %v2253
        %v2255 = vpop.f32.mrb[0].mxu0
        %2256 = vmatprep.mubr.f32.mxu0 0.0
        %2257 = vmatmul.mubr.f32.gmra.mrb[0].mxu0 %v1974
        %v2258 = vpop.f32.mrb[0].mxu0
        %v2259 = vadd.f32 0.0, %v2258
        %v2260 = vpop.f32.mrb[0].mxu0
        %2261 = vmatprep.mubr.f32.mxu0 0.0
        %2262 = vmatmul.mubr.f32.gmra.mrb[0].mxu0 %v1977
        %v2263 = vpop.f32.mrb[0].mxu0
        %v2264 = vadd.f32 0.0, %v2263
        %v2265 = vpop.f32.mrb[0].mxu0
        %2266 = vmatprep.mubr.f32.mxu0 0.0
        %2267 = vmatmul.mubr.f32.gmra.mrb[0].mxu0 %v1980
        %v2268 = vpop.f32.mrb[0].mxu0
        %v2269 = vadd.f32 0.0, %v2268
        %v2270 = vpop.f32.mrb[0].mxu0
        %2271 = vmatprep.mubr.f32.mxu0 0.0
        %2272 = vmatmul.mubr.f32.gmra.mrb[0].mxu0 %v1983
        %v2273 = vpop.f32.mrb[0].mxu0
        %v2274 = vadd.f32 0.0, %v2273
        %v2275 = vpop.f32.mrb[0].mxu0
        %2276 = vmatprep.mubr.f32.mxu0 0.0
        %2277 = vmatmul.mubr.f32.gmra.mrb[0].mxu0 %v1986
        %v2278 = vpop.f32.mrb[0].mxu0
        %v2279 = vadd.f32 0.0, %v2278
        %v2280 = vpop.f32.mrb[0].mxu0
        %2281 = vmatprep.mubr.f32.mxu0 0.0
        %2282 = vmatmul.mubr.f32.gmra.mrb[0].mxu0 %v1989
        %v2283 = vpop.f32.mrb[0].mxu0
        %v2284 = vadd.f32 0.0, %v2283
        %v2285 = vpop.f32.mrb[0].mxu0
        %2286 = vmatprep.mubr.f32.mxu0 0.0
        %2287 = vmatmul.mubr.f32.gmra.mrb[0].mxu0 %v1992
        %v2288 = vpop.f32.mrb[0].mxu0
        %v2289 = vadd.f32 0.0, %v2288
        %v2290 = vpop.f32.mrb[0].mxu0
        %2291 = vmatprep.mubr.f32.mxu0 0.0
        %2292 = vmatmul.mubr.f32.gmra.mrb[0].mxu0 %v1995
        %v2293 = vpop.f32.mrb[0].mxu0
        %v2294 = vadd.f32 0.0, %v2293
        %v2295 = vpop.f32.mrb[0].mxu0
        %2296 = vmatprep.mubr.f32.mxu0 0.0
        %2297 = vmatmul.mubr.f32.gmra.mrb[0].mxu0 %v1998
        %v2298 = vpop.f32.mrb[0].mxu0
        %v2299 = vadd.f32 0.0, %v2298
        %v2300 = vpop.f32.mrb[0].mxu0
        %2301 = vmatprep.mubr.f32.mxu0 0.0
        %2302 = vmatmul.mubr.f32.gmra.mrb[0].mxu0 %v2001
        %v2303 = vpop.f32.mrb[0].mxu0
        %v2304 = vadd.f32 0.0, %v2303
        %v2305 = vpop.f32.mrb[0].mxu0
        %2306 = vmatprep.mubr.f32.mxu0 0.0
        %2307 = vmatmul.mubr.f32.gmra.mrb[0].mxu0 %v2004
        %v2308 = vpop.f32.mrb[0].mxu0
        %v2309 = vadd.f32 0.0, %v2308
        %v2310 = vpop.f32.mrb[0].mxu0
        %2311 = vmatprep.mubr.f32.mxu0 0.0
        %2312 = vmatmul.mubr.f32.gmra.mrb[0].mxu0 %v2007
        %v2313 = vpop.f32.mrb[0].mxu0
        %v2314 = vadd.f32 0.0, %v2313
        %v2315 = vpop.f32.mrb[0].mxu0
        %2316 = vmatprep.mubr.f32.mxu0 0.0
        %2317 = vmatmul.mubr.f32.gmra.mrb[0].mxu0 %v2010
        %v2318 = vpop.f32.mrb[0].mxu0
        %v2319 = vadd.f32 0.0, %v2318
        %v2320 = vpop.f32.mrb[0].mxu0
        %2321 = vmatprep.mubr.f32.mxu0 0.0
        %2322 = vmatmul.mubr.f32.gmra.mrb[0].mxu0 %v2013
        %v2323 = vpop.f32.mrb[0].mxu0
        %v2324 = vadd.f32 0.0, %v2323
        %v2325 = vpop.f32.mrb[0].mxu0
        %2326 = vmatprep.mubr.f32.mxu0 0.0
        %2327 = vmatmul.mubr.f32.gmra.mrb[0].mxu0 %v2016
        %v2328 = vpop.f32.mrb[0].mxu0
        %v2329 = vadd.f32 0.0, %v2328
        %v2330 = vpop.f32.mrb[0].mxu0
        %2331 = vmatprep.mubr.f32.mxu0 0.0
        %2332 = vmatmul.mubr.f32.gmra.mrb[0].mxu0 %v2019
        %v2333 = vpop.f32.mrb[0].mxu0
        %v2334 = vadd.f32 0.0, %v2333
        %v2335 = vpop.f32.mrb[0].mxu0
        %2336 = vmatprep.mubr.f32.mxu0 0.0
        %2337 = vmatmul.mubr.f32.gmra.mrb[0].mxu0 %v2022
        %v2338 = vpop.f32.mrb[0].mxu0
        %v2339 = vadd.f32 0.0, %v2338
        %v2340 = vpop.f32.mrb[0].mxu0
        %2341 = vmatprep.mubr.f32.mxu0 0.0
        %2342 = vmatmul.mubr.f32.gmra.mrb[0].mxu0 %v2025
        %v2343 = vpop.f32.mrb[0].mxu0
        %v2344 = vadd.f32 0.0, %v2343
        %v2345 = vpop.f32.mrb[0].mxu0
        %2346 = vdwg.mxu0
        %v2347 = vadd.f32 %v1768, %v2094
        %v2348 = vadd.f32 %v1769, %v2099
        %v2349 = vadd.f32 %v1770, %v2104
        %v2350 = vadd.f32 %v1771, %v2109
        %v2351 = vadd.f32 %v1772, %v2114
        %v2352 = vadd.f32 %v1773, %v2119
        %v2353 = vadd.f32 %v1774, %v2124
        %v2354 = vadd.f32 %v1775, %v2129
        %v2355 = vadd.f32 %v1776, %v2134
        %v2356 = vadd.f32 %v1777, %v2139
        %v2357 = vadd.f32 %v1778, %v2144
        %v2358 = vadd.f32 %v1779, %v2149
        %v2359 = vadd.f32 %v1780, %v2154
        %v2360 = vadd.f32 %v1781, %v2159
        %v2361 = vadd.f32 %v1782, %v2164
        %v2362 = vadd.f32 %v1783, %v2169
        %v2363 = vadd.f32 %v1784, %v2174
        %v2364 = vadd.f32 %v1785, %v2179
        %v2365 = vadd.f32 %v1786, %v2184
        %v2366 = vadd.f32 %v1787, %v2189
        %v2367 = vadd.f32 %v1788, %v2194
        %v2368 = vadd.f32 %v1789, %v2199
        %v2369 = vadd.f32 %v1790, %v2204
        %v2370 = vadd.f32 %v1791, %v2209
        %v2371 = vadd.f32 %v1792, %v2214
        %v2372 = vadd.f32 %v1793, %v2219
        %v2373 = vadd.f32 %v1794, %v2224
        %v2374 = vadd.f32 %v1795, %v2229
        %v2375 = vadd.f32 %v1796, %v2234
        %v2376 = vadd.f32 %v1797, %v2239
        %v2377 = vadd.f32 %v1798, %v2244
        %v2378 = vadd.f32 %v1799, %v2249
        %v2379 = vadd.f32 %v1800, %v2254
        %v2380 = vadd.f32 %v1801, %v2259
        %v2381 = vadd.f32 %v1802, %v2264
        %v2382 = vadd.f32 %v1803, %v2269
        %v2383 = vadd.f32 %v1804, %v2274
        %v2384 = vadd.f32 %v1805, %v2279
        %v2385 = vadd.f32 %v1806, %v2284
        %v2386 = vadd.f32 %v1807, %v2289
        %v2387 = vadd.f32 %v1808, %v2294
        %v2388 = vadd.f32 %v1809, %v2299
        %v2389 = vadd.f32 %v1810, %v2304
        %v2390 = vadd.f32 %v1811, %v2309
        %v2391 = vadd.f32 %v1812, %v2314
        %v2392 = vadd.f32 %v1813, %v2319
        %v2393 = vadd.f32 %v1814, %v2324
        %v2394 = vadd.f32 %v1815, %v2329
        %v2395 = vadd.f32 %v1816, %v2334
        %v2396 = vadd.f32 %v1817, %v2339
        %v2397 = vadd.f32 %v1818, %v2344
        %v2398 = vld [vmem:[%s2] sm:$0x1]
        %v2400 = vlaneseq
        %v2401 = vshrl.u32 %v2400, 7
        %v2402 = vsub.s32 0, %v2401
        %v2403 = vrot.slane %v2398, %v2402
        %v2405 = vadd.f32 %v2347, %v2403
        %v2406 = vadd.f32 %v2348, %v2403
        %v2407 = vadd.f32 %v2349, %v2403
        %v2408 = vadd.f32 %v2350, %v2403
        %v2409 = vadd.f32 %v2351, %v2403
        %v2410 = vadd.f32 %v2352, %v2403
        %v2411 = vadd.f32 %v2353, %v2403
        %v2412 = vadd.f32 %v2354, %v2403
        %v2413 = vadd.f32 %v2355, %v2403
        %v2414 = vadd.f32 %v2356, %v2403
        %v2415 = vadd.f32 %v2357, %v2403
        %v2416 = vadd.f32 %v2358, %v2403
        %v2417 = vadd.f32 %v2359, %v2403
        %v2418 = vadd.f32 %v2360, %v2403
        %v2419 = vadd.f32 %v2361, %v2403
        %v2420 = vadd.f32 %v2362, %v2403
        %v2421 = vadd.f32 %v2363, %v2403
        %v2422 = vadd.f32 %v2364, %v2403
        %v2423 = vadd.f32 %v2365, %v2403
        %v2424 = vadd.f32 %v2366, %v2403
        %v2425 = vadd.f32 %v2367, %v2403
        %v2426 = vadd.f32 %v2368, %v2403
        %v2427 = vadd.f32 %v2369, %v2403
        %v2428 = vadd.f32 %v2370, %v2403
        %v2429 = vadd.f32 %v2371, %v2403
        %v2430 = vadd.f32 %v2372, %v2403
        %v2431 = vadd.f32 %v2373, %v2403
        %v2432 = vadd.f32 %v2374, %v2403
        %v2433 = vadd.f32 %v2375, %v2403
        %v2434 = vadd.f32 %v2376, %v2403
        %v2435 = vadd.f32 %v2377, %v2403
        %v2436 = vadd.f32 %v2378, %v2403
        %v2437 = vadd.f32 %v2379, %v2403
        %v2438 = vadd.f32 %v2380, %v2403
        %v2439 = vadd.f32 %v2381, %v2403
        %v2440 = vadd.f32 %v2382, %v2403
        %v2441 = vadd.f32 %v2383, %v2403
        %v2442 = vadd.f32 %v2384, %v2403
        %v2443 = vadd.f32 %v2385, %v2403
        %v2444 = vadd.f32 %v2386, %v2403
        %v2445 = vadd.f32 %v2387, %v2403
        %v2446 = vadd.f32 %v2388, %v2403
        %v2447 = vadd.f32 %v2389, %v2403
        %v2448 = vadd.f32 %v2390, %v2403
        %v2449 = vadd.f32 %v2391, %v2403
        %v2450 = vadd.f32 %v2392, %v2403
        %v2451 = vadd.f32 %v2393, %v2403
        %v2452 = vadd.f32 %v2394, %v2403
        %v2453 = vadd.f32 %v2395, %v2403
        %v2454 = vadd.f32 %v2396, %v2403
        %v2455 = vadd.f32 %v2397, %v2403
        %2456 = vst [vmem:[%s177] sm:$0xff] %v2405
        %2457 = vst [vmem:[%s177 + $0x8] sm:$0xff] %v2406
        %2458 = vst [vmem:[%s177 + $0x10] sm:$0xff] %v2407
        %2459 = vst [vmem:[%s177 + $0x18] sm:$0xff] %v2408
        %2460 = vst [vmem:[%s177 + $0x20] sm:$0xff] %v2409
        %2461 = vst [vmem:[%s177 + $0x28] sm:$0xff] %v2410
        %2462 = vst [vmem:[%s177 + $0x30] sm:$0xff] %v2411
        %2463 = vst [vmem:[%s177 + $0x38] sm:$0xff] %v2412
        %2464 = vst [vmem:[%s177 + $0x40] sm:$0xff] %v2413
        %2465 = vst [vmem:[%s177 + $0x48] sm:$0xff] %v2414
        %2466 = vst [vmem:[%s177 + $0x50] sm:$0xff] %v2415
        %2467 = vst [vmem:[%s177 + $0x58] sm:$0xff] %v2416
        %2468 = vst [vmem:[%s177 + $0x60] sm:$0xff] %v2417
        %2469 = vst [vmem:[%s177 + $0x68] sm:$0xff] %v2418
        %2470 = vst [vmem:[%s177 + $0x70] sm:$0xff] %v2419
        %2471 = vst [vmem:[%s177 + $0x78] sm:$0xff] %v2420
        %2472 = vst [vmem:[%s177 + $0x80] sm:$0xff] %v2421
        %2473 = vst [vmem:[%s177 + $0x88] sm:$0xff] %v2422
        %2474 = vst [vmem:[%s177 + $0x90] sm:$0xff] %v2423
        %2475 = vst [vmem:[%s177 + $0x98] sm:$0xff] %v2424
        %2476 = vst [vmem:[%s177 + $0xa0] sm:$0xff] %v2425
        %2477 = vst [vmem:[%s177 + $0xa8] sm:$0xff] %v2426
        %2478 = vst [vmem:[%s177 + $0xb0] sm:$0xff] %v2427
        %2479 = vst [vmem:[%s177 + $0xb8] sm:$0xff] %v2428
        %2480 = vst [vmem:[%s177 + $0xc0] sm:$0xff] %v2429
        %2481 = vst [vmem:[%s177 + $0xc8] sm:$0xff] %v2430
        %2482 = vst [vmem:[%s177 + $0xd0] sm:$0xff] %v2431
        %2483 = vst [vmem:[%s177 + $0xd8] sm:$0xff] %v2432
        %2484 = vst [vmem:[%s177 + $0xe0] sm:$0xff] %v2433
        %2485 = vst [vmem:[%s177 + $0xe8] sm:$0xff] %v2434
        %2486 = vst [vmem:[%s177 + $0xf0] sm:$0xff] %v2435
        %2487 = vst [vmem:[%s177 + $0xf8] sm:$0xff] %v2436
        %2488 = vst [vmem:[%s177 + $0x100] sm:$0xff] %v2437
        %2489 = vst [vmem:[%s177 + $0x108] sm:$0xff] %v2438
        %2490 = vst [vmem:[%s177 + $0x110] sm:$0xff] %v2439
        %2491 = vst [vmem:[%s177 + $0x118] sm:$0xff] %v2440
        %2492 = vst [vmem:[%s177 + $0x120] sm:$0xff] %v2441
        %2493 = vst [vmem:[%s177 + $0x128] sm:$0xff] %v2442
        %2494 = vst [vmem:[%s177 + $0x130] sm:$0xff] %v2443
        %2495 = vst [vmem:[%s177 + $0x138] sm:$0xff] %v2444
        %2496 = vst [vmem:[%s177 + $0x140] sm:$0xff] %v2445
        %2497 = vst [vmem:[%s177 + $0x148] sm:$0xff] %v2446
        %2498 = vst [vmem:[%s177 + $0x150] sm:$0xff] %v2447
        %2499 = vst [vmem:[%s177 + $0x158] sm:$0xff] %v2448
        %2500 = vst [vmem:[%s177 + $0x160] sm:$0xff] %v2449
        %2501 = vst [vmem:[%s177 + $0x168] sm:$0xff] %v2450
        %2502 = vst [vmem:[%s177 + $0x170] sm:$0xff] %v2451
        %2503 = vst [vmem:[%s177 + $0x178] sm:$0xff] %v2452
        %2504 = vst [vmem:[%s177 + $0x180] sm:$0xff] %v2453
        %2505 = vst [vmem:[%s177 + $0x188] sm:$0xff] %v2454
        %2506 = vst [vmem:[%s177 + $0x190] sm:$0xff] %v2455
        %s2507 = sand.u32 %s107, 1
        %s2508 = scalar_lea.sflag [#allocation3], %s2507
        %s2509 = sand.u32 %s107, 1
        %s2510 = smul.addr %s2509, 408
        %s2511 = scalar_lea.vmem [#allocation2], %s2510
        // Predicated region
        $region33: #{tpu_custom_call.1} parent=31 // pred_check
          %p2512 = pneg %p117
        $region34: #{tpu_custom_call.1} parent=31 // pred_check_branch
          %2514 = sbr.rel (%p2512) target = $region36
        $region35: #{tpu_custom_call.1} parent=31 // pred_region
          %s2515 = smul.u32 51, %s22
          %s2517 = ssub.s32 6528, 6528
          %2518 = vsyncadd %s2508, %s2517
          %s2519 = smul.addr %s21, 51
          %s2520 = sadd.s32 %s2515, %s2519
          %s2521 = smul.addr %s2520, 128
          %s2522 = scalar_lea.hbm %s3, %s2521
          %s2523 = sshll.u32 %s2511, 4
          %s2524 = int_to_ptr.vmem [resolvable:$true] %s2523
          %2529 = dma.vmem_to_hbm [thread:$0]  %s2524, 6528, %s2522, %s2508, 128, 128, 8
        $region36: #{tpu_custom_call.1} parent=31 // pred_fallthru
          _
      $region32: #{tpu_custom_call.1} parent=5 // pred_fallthru
        _
      %p2530 = scmp.le.s32.totalorder 2, %s12
      // Predicated region
      $region37: #{tpu_custom_call.1} parent=5 // pred_check
        %p2531 = pneg %p2530
      $region38: #{tpu_custom_call.1} parent=5 // pred_check_branch
        %2533 = sbr.rel (%p2531) target = $region40
      $region39: #{tpu_custom_call.1} parent=5 // pred_region
        %s2534 = ssub.s32 %s12, 2
        // Predicated region
        $region41: #{tpu_custom_call.1} parent=39 // pred_check
          %p2535 = pneg %p123
        $region42: #{tpu_custom_call.1} parent=39 // pred_check_branch
          %2537 = sbr.rel (%p2535) target = $region44
        $region43: #{tpu_custom_call.1} parent=39 // pred_region
          %s2538 = sand.u32 %s108, 1
          %s2539 = scalar_lea.sflag [#allocation3], %s2538
          %s2540 = sand.u32 %s108, 1
          %s2541 = smul.addr %s2540, 408
          %s2542 = scalar_lea.vmem [#allocation2], %s2541
          %2543 = dma.done %s2539, 6528
        $region44: #{tpu_custom_call.1} parent=39 // pred_fallthru
          _
      $region40: #{tpu_custom_call.1} parent=5 // pred_fallthru
        _
    $region6: #{tpu_custom_call.1} parent=1 // loop_footer
      %s16 = sadd.s32 1, %s12
    $region7: #{tpu_custom_call.1} parent=1 // loop_footer_branch
      %11 = sbr.rel target = $region3
    $region8: #{tpu_custom_call.1} parent=1 // loop_exit
      _
    %2544 = vsyncpa [#allocation3], 1
    %s2545 = scalar_lea.sflag [#allocation3], 1
    %2546 = vsyncpa %s2545, 1

// kernel: tpu_custom_call.1
$region0: #{tpu_custom_call.1}
  #allocation0 [shape = 'u32[]', space=smem, size = 0x4, offset = 0x4, fixed_abs, tag = 'smem constant byte address 0x4 - core index']
  #allocation1 [shape = 'u32[144,128]{1,0:T(1,128)}', space=vmem, size = 0x12000, scoped, tag = 'internal scratch']
  %s0 = inlined_call_operand.vmem [shape: f32[2,456,8], index: 0, kind: input, shape index: {}]
  %s1 = inlined_call_operand.vmem [shape: f32[4,8,128], index: 1, kind: input, shape index: {}]
  %s2 = inlined_call_operand.vmem [shape: f32[1,128], index: 2, kind: input, shape index: {}]
  %s3 = inlined_call_operand.hbm [shape: f32[2,408,128], index: 3, kind: output, shape index: {}]
  %s4 = sld [smem:[#allocation0]]
  $region45: #{tpu_custom_call.1} parent=0
    _
  %s6 = ssub.s32 1, %s4
  %s7 = scalar_select 0, %s6, %s4
  $region1: #{tpu_custom_call.1} parent=0
    #allocation2 [shape = 'u8[417792]{0}', space=vmem, size = 0x66000, scoped, tag = 'output window, operand 0']
    #allocation3 [shape = 's32[2]{0}', space=sflag, size = 0x8, scoped, tag = 'scoped memory for tpu_custom_call.1']
    %8 = vsyncpa [#allocation3], 0
    %s9 = scalar_lea.sflag [#allocation3], 1
    %10 = vsyncpa %s9, 0
    loop: start=0, step=1, limit=4
    $region2: #{tpu_custom_call.1} parent=1 // loop_pre_header
      _
    $region3: #{tpu_custom_call.1} parent=1 // loop_header
      %s12 = sphi 0, %s16
      %p13 = scmp.ge.s32.totalorder %s12, 4
      %s19 = sphi 0, %s31
      %s20 = sphi 0, %s27
      %s21 = sphi 0, %s19
      %s22 = sphi 0, %s20
      %s23 = sphi 0, %s21
      %s24 = sphi 0, %s22
      %s34 = sphi 0, %s36
      %s37 = sphi 0, %s34
      %s38 = sphi 0, %s37
      %s54 = sphi 0, %s38
      %s58 = sphi 0, %s58
      %s60 = sphi 0, %s58
      %s61 = sphi 0, %s60
      %s75 = sphi 0, %s61
      %s79 = sphi 0, %s79
      %s81 = sphi 0, %s79
      %s82 = sphi 0, %s81
      %s96 = sphi 0, %s82
      %s104 = sphi 0, %s106
      %s107 = sphi 0, %s104
      %s108 = sphi 0, %s107
      %s124 = sphi 0, %s108
    $region4: #{tpu_custom_call.1} parent=1 // loop_header_branch
      %15 = sbr.rel (%p13) target = $region8
    $region5: #{tpu_custom_call.1} parent=1 // loop_body
      %s17 = ssub.s32 %s12, 1
      %s18 = ssub.s32 %s12, 2
      %s25 = sadd.s32 1, %s20
      %p26 = scmp.ge.s32.totalorder %s25, 1
      %s27 = scalar_select %p26, 0, %s25
      %s28 = sadd.s32 1, %s19
      %s29 = scalar_select %p26, %s28, %s19
      %p30 = scmp.ge.s32.totalorder %s29, 2
      %s31 = scalar_select %p30, 0, %s29
      %s32 = ssub.s32 %s19, %s31
      %p33 = scmp.eq.s32.totalorder %s32, 0
      %s35 = sadd.s32 %s34, 1
      %s36 = scalar_select %p33, %s34, %s35
      %p39 = pneg %p33
      %p40 = scmp.eq.s32.totalorder %s12, 1
      %p41 = por %p39, %p40
      %p42 = scmp.ne.s32.totalorder %s34, %s37
      %p43 = scmp.eq.s32.totalorder %s12, 0
      %p44 = por %p42, %p43
      %p45 = scmp.ne.s32.totalorder %s34, %s37
      %p46 = scmp.eq.s32.totalorder %s17, 1
      %p47 = por %p45, %p46
      %p48 = scmp.ne.s32.totalorder %s37, %s38
      %p49 = scmp.eq.s32.totalorder %s17, 0
      %p50 = por %p48, %p49
      %p51 = scmp.ne.s32.totalorder %s37, %s38
      %p52 = scmp.eq.s32.totalorder %s18, 1
      %p53 = por %p51, %p52
      %p55 = scmp.ne.s32.totalorder %s38, %s54
      %p56 = scmp.eq.s32.totalorder %s18, 0
      %p57 = por %p55, %p56
      %s59 = sadd.s32 %s58, 1
      %p62 = scmp.eq.s32.totalorder %s12, 1
      %p63 = scmp.ne.s32.totalorder %s58, %s60
      %p64 = scmp.eq.s32.totalorder %s12, 0
      %p65 = por %p63, %p64
      %p66 = scmp.ne.s32.totalorder %s58, %s60
      %p67 = scmp.eq.s32.totalorder %s17, 1
      %p68 = por %p66, %p67
      %p69 = scmp.ne.s32.totalorder %s60, %s61
      %p70 = scmp.eq.s32.totalorder %s17, 0
      %p71 = por %p69, %p70
      %p72 = scmp.ne.s32.totalorder %s60, %s61
      %p73 = scmp.eq.s32.totalorder %s18, 1
      %p74 = por %p72, %p73
      %p76 = scmp.ne.s32.totalorder %s61, %s75
      %p77 = scmp.eq.s32.totalorder %s18, 0
      %p78 = por %p76, %p77
      %s80 = sadd.s32 %s79, 1
      %p83 = scmp.eq.s32.totalorder %s12, 1
      %p84 = scmp.ne.s32.totalorder %s79, %s81
      %p85 = scmp.eq.s32.totalorder %s12, 0
      %p86 = por %p84, %p85
      %p87 = scmp.ne.s32.totalorder %s79, %s81
      %p88 = scmp.eq.s32.totalorder %s17, 1
      %p89 = por %p87, %p88
      %p90 = scmp.ne.s32.totalorder %s81, %s82
      %p91 = scmp.eq.s32.totalorder %s17, 0
      %p92 = por %p90, %p91
      %p93 = scmp.ne.s32.totalorder %s81, %s82
      %p94 = scmp.eq.s32.totalorder %s18, 1
      %p95 = por %p93, %p94
      %p97 = scmp.ne.s32.totalorder %s82, %s96
      %p98 = scmp.eq.s32.totalorder %s18, 0
      %p99 = por %p97, %p98
      %s100 = ssub.s32 %s19, %s31
      %s101 = ssub.s32 %s20, %s27
      %s102 = sor.u32 %s100, %s101
      %p103 = scmp.eq.s32.totalorder %s102, 0
      %s105 = sadd.s32 %s104, 1
      %s106 = scalar_select %p103, %s104, %s105
      %p109 = pneg %p103
      %p110 = scmp.eq.s32.totalorder %s12, 1
      %p111 = por %p109, %p110
      %p112 = scmp.ne.s32.totalorder %s104, %s107
      %p113 = scmp.eq.s32.totalorder %s12, 0
      %p114 = por %p112, %p113
      %p115 = scmp.ne.s32.totalorder %s104, %s107
      %p116 = scmp.eq.s32.totalorder %s17, 1
      %p117 = por %p115, %p116
      %p118 = scmp.ne.s32.totalorder %s107, %s108
      %p119 = scmp.eq.s32.totalorder %s17, 0
      %p120 = por %p118, %p119
      %p121 = scmp.ne.s32.totalorder %s107, %s108
      %p122 = scmp.eq.s32.totalorder %s18, 1
      %p123 = por %p121, %p122
      %p125 = scmp.ne.s32.totalorder %s108, %s124
      %p126 = scmp.eq.s32.totalorder %s18, 0
      %p127 = por %p125, %p126
      %p128 = scmp.le.s32.totalorder 1, %s12
      %p129 = scmp.lt.s32.totalorder %s12, 3
      %p130 = pnand %p128, %p129
      %p131 = pneg %p130
      // Predicated region
      $region9: #{tpu_custom_call.1} parent=5 // pred_check
        _
      $region10: #{tpu_custom_call.1} parent=5 // pred_check_branch
        %133 = sbr.rel (%p130) target = $region12
      $region11: #{tpu_custom_call.1} parent=5 // pred_region
        %s134 = ssub.s32 %s12, 1
        // Predicated region
        $region13: #{tpu_custom_call.1} parent=11 // pred_check
          %p135 = pneg %p71
        $region14: #{tpu_custom_call.1} parent=11 // pred_check_branch
          %137 = sbr.rel (%p135) target = $region16
        $region15: #{tpu_custom_call.1} parent=11 // pred_region
          _
        $region16: #{tpu_custom_call.1} parent=11 // pred_fallthru
          _
        // Predicated region
        $region17: #{tpu_custom_call.1} parent=11 // pred_check
          %p138 = pneg %p92
        $region18: #{tpu_custom_call.1} parent=11 // pred_check_branch
          %140 = sbr.rel (%p138) target = $region20
        $region19: #{tpu_custom_call.1} parent=11 // pred_region
          _
        $region20: #{tpu_custom_call.1} parent=11 // pred_fallthru
          _
      $region12: #{tpu_custom_call.1} parent=5 // pred_fallthru
        _
      %p141 = scmp.lt.s32.totalorder %s12, 2
      // Predicated region
      $region21: #{tpu_custom_call.1} parent=5 // pred_check
        %p142 = pneg %p141
      $region22: #{tpu_custom_call.1} parent=5 // pred_check_branch
        %144 = sbr.rel (%p142) target = $region24
      $region23: #{tpu_custom_call.1} parent=5 // pred_region
        // Predicated region
        $region25: #{tpu_custom_call.1} parent=23 // pred_check
          %p145 = pneg %p44
        $region26: #{tpu_custom_call.1} parent=23 // pred_check_branch
          %147 = sbr.rel (%p145) target = $region28
        $region27: #{tpu_custom_call.1} parent=23 // pred_region
          %p148 = scmp.lt.s32.totalorder %s19, 1
          %s149 = scalar_select %p148, %s19, 1
          %s150 = smul.addr %s149, 57
          %s151 = smul.addr %s150, 8
          %s152 = scalar_lea.vmem %s0, %s151
        $region28: #{tpu_custom_call.1} parent=23 // pred_fallthru
          _
      $region24: #{tpu_custom_call.1} parent=5 // pred_fallthru
        _
      %p153 = scmp.le.s32.totalorder 1, %s12
      %p154 = scmp.lt.s32.totalorder %s12, 3
      %p155 = pnand %p153, %p154
      %p156 = pneg %p155
      // Predicated region
      $region29: #{tpu_custom_call.1} parent=5 // pred_check
        _
      $region30: #{tpu_custom_call.1} parent=5 // pred_check_branch
        %158 = sbr.rel (%p155) target = $region32
      $region31: #{tpu_custom_call.1} parent=5 // pred_region
        %s159 = ssub.s32 %s12, 1
        %p160 = scmp.lt.s32.totalorder %s21, 1
        %s161 = scalar_select %p160, %s21, 1
        %s162 = smul.addr %s161, 57
        %s163 = smul.addr %s162, 8
        %s164 = scalar_lea.vmem %s0, %s163
        %p165 = pneg %p50
        %p166 = pneg %p47
        %p167 = pneg %p71
        %p168 = pneg %p68
        %p169 = pneg %p92
        %p170 = pneg %p89
        %p171 = pneg %p120
        %p172 = pneg %p117
        %s173 = sand.u32 %s107, 1
        %s174 = scalar_lea.sflag [#allocation3], %s173
        %s175 = sand.u32 %s107, 1
        %s176 = smul.addr %s175, 408
        %s177 = scalar_lea.vmem [#allocation2], %s176
        %p178 = scmp.lt.s32.totalorder %s21, 1
        %s179 = scalar_select %p178, %s21, 1
        %s180 = smul.addr %s179, 57
        %s181 = smul.addr %s180, 8
        %s182 = scalar_lea.vmem %s0, %s181
        %s183 = smul.u32 51, %s22
        %s184 = smul.u32 %s22, 408
        %s185 = scalar_lea.vmem %s182, %s184
        %v186 = vld [vmem:[%s185] sm:$0xff]
        %v187 = vld [vmem:[%s185 + $0x8] sm:$0xff]
        %v188 = vld [vmem:[%s185 + $0x10] sm:$0xff]
        %v189 = vld [vmem:[%s185 + $0x18] sm:$0xff]
        %v190 = vld [vmem:[%s185 + $0x20] sm:$0xff]
        %v191 = vld [vmem:[%s185 + $0x28] sm:$0xff]
        %v192 = vld [vmem:[%s185 + $0x30] sm:$0xff]
        %v193 = vld [vmem:[%s185 + $0x38] sm:$0xff]
        %v194 = vld [vmem:[%s185 + $0x40] sm:$0xff]
        %v195 = vld [vmem:[%s185 + $0x48] sm:$0xff]
        %v196 = vld [vmem:[%s185 + $0x50] sm:$0xff]
        %v197 = vld [vmem:[%s185 + $0x58] sm:$0xff]
        %v198 = vld [vmem:[%s185 + $0x60] sm:$0xff]
        %v199 = vld [vmem:[%s185 + $0x68] sm:$0xff]
        %v200 = vld [vmem:[%s185 + $0x70] sm:$0xff]
        %v201 = vld [vmem:[%s185 + $0x78] sm:$0xff]
        %v202 = vld [vmem:[%s185 + $0x80] sm:$0xff]
        %v203 = vld [vmem:[%s185 + $0x88] sm:$0xff]
        %v204 = vld [vmem:[%s185 + $0x90] sm:$0xff]
        %v205 = vld [vmem:[%s185 + $0x98] sm:$0xff]
        %v206 = vld [vmem:[%s185 + $0xa0] sm:$0xff]
        %v207 = vld [vmem:[%s185 + $0xa8] sm:$0xff]
        %v208 = vld [vmem:[%s185 + $0xb0] sm:$0xff]
        %v209 = vld [vmem:[%s185 + $0xb8] sm:$0xff]
        %v210 = vld [vmem:[%s185 + $0xc0] sm:$0xff]
        %v211 = vld [vmem:[%s185 + $0xc8] sm:$0xff]
        %v212 = vld [vmem:[%s185 + $0xd0] sm:$0xff]
        %v213 = vld [vmem:[%s185 + $0xd8] sm:$0xff]
        %v214 = vld [vmem:[%s185 + $0xe0] sm:$0xff]
        %v215 = vld [vmem:[%s185 + $0xe8] sm:$0xff]
        %v216 = vld [vmem:[%s185 + $0xf0] sm:$0xff]
        %v217 = vld [vmem:[%s185 + $0xf8] sm:$0xff]
        %v218 = vld [vmem:[%s185 + $0x100] sm:$0xff]
        %v219 = vld [vmem:[%s185 + $0x108] sm:$0xff]
        %v220 = vld [vmem:[%s185 + $0x110] sm:$0xff]
        %v221 = vld [vmem:[%s185 + $0x118] sm:$0xff]
        %v222 = vld [vmem:[%s185 + $0x120] sm:$0xff]
        %v223 = vld [vmem:[%s185 + $0x128] sm:$0xff]
        %v224 = vld [vmem:[%s185 + $0x130] sm:$0xff]
        %v225 = vld [vmem:[%s185 + $0x138] sm:$0xff]
        %v226 = vld [vmem:[%s185 + $0x140] sm:$0xff]
        %v227 = vld [vmem:[%s185 + $0x148] sm:$0xff]
        %v228 = vld [vmem:[%s185 + $0x150] sm:$0xff]
        %v229 = vld [vmem:[%s185 + $0x158] sm:$0xff]
        %v230 = vld [vmem:[%s185 + $0x160] sm:$0xff]
        %v231 = vld [vmem:[%s185 + $0x168] sm:$0xff]
        %v232 = vld [vmem:[%s185 + $0x170] sm:$0xff]
        %v233 = vld [vmem:[%s185 + $0x178] sm:$0xff]
        %v234 = vld [vmem:[%s185 + $0x180] sm:$0xff]
        %v235 = vld [vmem:[%s185 + $0x188] sm:$0xff]
        %v236 = vld [vmem:[%s185 + $0x190] sm:$0xff]
        %v237 = vld [vmem:[%s1] sm:$0xff]
        %s238 = sadd.s32 %s184, 1
        %s239 = scalar_lea.vmem %s182, %s238
        %v240 = vld [vmem:[%s239] sm:$0xff]
        %v241 = vld [vmem:[%s239 + $0x8] sm:$0xff]
        %v242 = vld [vmem:[%s239 + $0x10] sm:$0xff]
        %v243 = vld [vmem:[%s239 + $0x18] sm:$0xff]
        %v244 = vld [vmem:[%s239 + $0x20] sm:$0xff]
        %v245 = vld [vmem:[%s239 + $0x28] sm:$0xff]
        %v246 = vld [vmem:[%s239 + $0x30] sm:$0xff]
        %v247 = vld [vmem:[%s239 + $0x38] sm:$0xff]
        %v248 = vld [vmem:[%s239 + $0x40] sm:$0xff]
        %v249 = vld [vmem:[%s239 + $0x48] sm:$0xff]
        %v250 = vld [vmem:[%s239 + $0x50] sm:$0xff]
        %v251 = vld [vmem:[%s239 + $0x58] sm:$0xff]
        %v252 = vld [vmem:[%s239 + $0x60] sm:$0xff]
        %v253 = vld [vmem:[%s239 + $0x68] sm:$0xff]
        %v254 = vld [vmem:[%s239 + $0x70] sm:$0xff]
        %v255 = vld [vmem:[%s239 + $0x78] sm:$0xff]
        %v256 = vld [vmem:[%s239 + $0x80] sm:$0xff]
        %v257 = vld [vmem:[%s239 + $0x88] sm:$0xff]
        %v258 = vld [vmem:[%s239 + $0x90] sm:$0xff]
        %v259 = vld [vmem:[%s239 + $0x98] sm:$0xff]
        %v260 = vld [vmem:[%s239 + $0xa0] sm:$0xff]
        %v261 = vld [vmem:[%s239 + $0xa8] sm:$0xff]
        %v262 = vld [vmem:[%s239 + $0xb0] sm:$0xff]
        %v263 = vld [vmem:[%s239 + $0xb8] sm:$0xff]
        %v264 = vld [vmem:[%s239 + $0xc0] sm:$0xff]
        %v265 = vld [vmem:[%s239 + $0xc8] sm:$0xff]
        %v266 = vld [vmem:[%s239 + $0xd0] sm:$0xff]
        %v267 = vld [vmem:[%s239 + $0xd8] sm:$0xff]
        %v268 = vld [vmem:[%s239 + $0xe0] sm:$0xff]
        %v269 = vld [vmem:[%s239 + $0xe8] sm:$0xff]
        %v270 = vld [vmem:[%s239 + $0xf0] sm:$0xff]
        %v271 = vld [vmem:[%s239 + $0xf8] sm:$0xff]
        %v272 = vld [vmem:[%s239 + $0x100] sm:$0xff]
        %v273 = vld [vmem:[%s239 + $0x108] sm:$0xff]
        %v274 = vld [vmem:[%s239 + $0x110] sm:$0xff]
        %v275 = vld [vmem:[%s239 + $0x118] sm:$0xff]
        %v276 = vld [vmem:[%s239 + $0x120] sm:$0xff]
        %v277 = vld [vmem:[%s239 + $0x128] sm:$0xff]
        %v278 = vld [vmem:[%s239 + $0x130] sm:$0xff]
        %v279 = vld [vmem:[%s239 + $0x138] sm:$0xff]
        %v280 = vld [vmem:[%s239 + $0x140] sm:$0xff]
        %v281 = vld [vmem:[%s239 + $0x148] sm:$0xff]
        %v282 = vld [vmem:[%s239 + $0x150] sm:$0xff]
        %v283 = vld [vmem:[%s239 + $0x158] sm:$0xff]
        %v284 = vld [vmem:[%s239 + $0x160] sm:$0xff]
        %v285 = vld [vmem:[%s239 + $0x168] sm:$0xff]
        %v286 = vld [vmem:[%s239 + $0x170] sm:$0xff]
        %v287 = vld [vmem:[%s239 + $0x178] sm:$0xff]
        %v288 = vld [vmem:[%s239 + $0x180] sm:$0xff]
        %v289 = vld [vmem:[%s239 + $0x188] sm:$0xff]
        %v290 = vld [vmem:[%s239 + $0x190] sm:$0xff]
        %s291 = scalar_lea.vmem %s1, 8
        %v292 = vld [vmem:[%s291] sm:$0xff]
        %vm293 = vcmask 64512
        %v295 = vsel %vm293, %v240, 0
        %v298 = vsel %vm293, %v241, 0
        %v301 = vsel %vm293, %v242, 0
        %v304 = vsel %vm293, %v243, 0
        %v307 = vsel %vm293, %v244, 0
        %v310 = vsel %vm293, %v245, 0
        %v313 = vsel %vm293, %v246, 0
        %v316 = vsel %vm293, %v247, 0
        %v319 = vsel %vm293, %v248, 0
        %v322 = vsel %vm293, %v249, 0
        %v325 = vsel %vm293, %v250, 0
        %v328 = vsel %vm293, %v251, 0
        %v331 = vsel %vm293, %v252, 0
        %v334 = vsel %vm293, %v253, 0
        %v337 = vsel %vm293, %v254, 0
        %v340 = vsel %vm293, %v255, 0
        %v343 = vsel %vm293, %v256, 0
        %v346 = vsel %vm293, %v257, 0
        %v349 = vsel %vm293, %v258, 0
        %v352 = vsel %vm293, %v259, 0
        %v355 = vsel %vm293, %v260, 0
        %v358 = vsel %vm293, %v261, 0
        %v361 = vsel %vm293, %v262, 0
        %v364 = vsel %vm293, %v263, 0
        %v367 = vsel %vm293, %v264, 0
        %v370 = vsel %vm293, %v265, 0
        %v373 = vsel %vm293, %v266, 0
        %v376 = vsel %vm293, %v267, 0
        %v379 = vsel %vm293, %v268, 0
        %v382 = vsel %vm293, %v269, 0
        %v385 = vsel %vm293, %v270, 0
        %v388 = vsel %vm293, %v271, 0
        %v391 = vsel %vm293, %v272, 0
        %v394 = vsel %vm293, %v273, 0
        %v397 = vsel %vm293, %v274, 0
        %v400 = vsel %vm293, %v275, 0
        %v403 = vsel %vm293, %v276, 0
        %v406 = vsel %vm293, %v277, 0
        %v409 = vsel %vm293, %v278, 0
        %v412 = vsel %vm293, %v279, 0
        %v415 = vsel %vm293, %v280, 0
        %v418 = vsel %vm293, %v281, 0
        %v421 = vsel %vm293, %v282, 0
        %v424 = vsel %vm293, %v283, 0
        %v427 = vsel %vm293, %v284, 0
        %v430 = vsel %vm293, %v285, 0
        %v433 = vsel %vm293, %v286, 0
        %v436 = vsel %vm293, %v287, 0
        %v439 = vsel %vm293, %v288, 0
        %v442 = vsel %vm293, %v289, 0
        %v445 = vsel %vm293, %v290, 0
        %447 = vmatprep.subr.mxu0 0.0
        %448 = vmatpush1.msra.mxu0 %v292
        %449 = vmatprep.subr.mxu0 0.0
        %450 = vmatpush1.msra.mxu0 0.0
        %451 = vmatprep.subr.mxu0 0.0
        %452 = vmatpush1.msra.mxu0 0.0
        %453 = vmatprep.subr.mxu0 0.0
        %454 = vmatpush1.msra.mxu0 0.0
        %455 = vmatprep.subr.mxu0 0.0
        %456 = vmatpush1.msra.mxu0 0.0
        %457 = vmatprep.subr.mxu0 0.0
        %458 = vmatpush1.msra.mxu0 0.0
        %459 = vmatprep.subr.mxu0 0.0
        %460 = vmatpush1.msra.mxu0 0.0
        %461 = vmatprep.subr.mxu0 0.0
        %462 = vmatpush1.msra.mxu0 0.0
        %463 = vmatprep.subr.mxu0 0.0
        %464 = vmatpush1.msra.mxu0 0.0
        %465 = vmatprep.subr.mxu0 0.0
        %466 = vmatpush1.msra.mxu0 0.0
        %467 = vmatprep.subr.mxu0 0.0
        %468 = vmatpush1.msra.mxu0 0.0
        %469 = vmatprep.subr.mxu0 0.0
        %470 = vmatpush1.msra.mxu0 0.0
        %471 = vmatprep.subr.mxu0 0.0
        %472 = vmatpush1.msra.mxu0 0.0
        %473 = vmatprep.subr.mxu0 0.0
        %474 = vmatpush1.msra.mxu0 0.0
        %475 = vmatprep.subr.mxu0 0.0
        %476 = vmatpush1.msra.mxu0 0.0
        %477 = vmatprep.subr.mxu0 0.0
        %478 = vmatpush1.msra.mxu0 0.0
        %479 = vmatprep.subr.mxu0 0.0
        %480 = vmatpush1.msra.mxu0 0.0
        %481 = vmatprep.subr.mxu0 0.0
        %482 = vmatpush1.msra.mxu0 0.0
        %483 = vmatprep.subr.mxu0 0.0
        %484 = vmatpush1.msra.mxu0 0.0
        %485 = vmatprep.subr.mxu0 0.0
        %486 = vmatpush1.msra.mxu0 0.0
        %487 = vmatprep.subr.mxu0 0.0
        %488 = vmatpush1.msra.mxu0 0.0
        %489 = vmatprep.subr.mxu0 0.0
        %490 = vmatpush1.msra.mxu0 0.0
        %491 = vmatprep.subr.mxu0 0.0
        %492 = vmatpush1.msra.mxu0 0.0
        %493 = vmatprep.subr.mxu0 0.0
        %494 = vmatpush1.msra.mxu0 0.0
        %495 = vmatprep.subr.mxu0 0.0
        %496 = vmatpush1.msra.mxu0 0.0
        %497 = vmatprep.subr.mxu0 0.0
        %498 = vmatpush1.msra.mxu0 0.0
        %499 = vmatprep.subr.mxu0 0.0
        %500 = vmatpush1.msra.mxu0 0.0
        %501 = vmatprep.subr.mxu0 0.0
        %502 = vmatpush1.msra.mxu0 0.0
        %503 = vmatprep.subr.mxu0 0.0
        %504 = vmatpush1.msra.mxu0 0.0
        %505 = vmatprep.subr.mxu0 0.0
        %506 = vmatpush1.msra.mxu0 0.0
        %507 = vmatprep.subr.mxu0 0.0
        %508 = vmatpush1.msra.mxu0 0.0
        %509 = vmatprep.subr.mxu0 0.0
        %510 = vmatpush1.msra.mxu0 0.0
        %511 = vmatprep.mubr.f32.mxu0 0.0
        %512 = vmatmul.mubr.f32.gmra.mrb[0].mxu0 %v295
        %v513 = vpop.f32.mrb[0].mxu0
        %v514 = vadd.f32 0.0, %v513
        %v515 = vpop.f32.mrb[0].mxu0
        %516 = vmatprep.mubr.f32.mxu0 0.0
        %517 = vmatmul.mubr.f32.gmra.mrb[0].mxu0 %v298
        %v518 = vpop.f32.mrb[0].mxu0
        %v519 = vadd.f32 0.0, %v518
        %v520 = vpop.f32.mrb[0].mxu0
        %521 = vmatprep.mubr.f32.mxu0 0.0
        %522 = vmatmul.mubr.f32.gmra.mrb[0].mxu0 %v301
        %v523 = vpop.f32.mrb[0].mxu0
        %v524 = vadd.f32 0.0, %v523
        %v525 = vpop.f32.mrb[0].mxu0
        %526 = vmatprep.mubr.f32.mxu0 0.0
        %527 = vmatmul.mubr.f32.gmra.mrb[0].mxu0 %v304
        %v528 = vpop.f32.mrb[0].mxu0
        %v529 = vadd.f32 0.0, %v528
        %v530 = vpop.f32.mrb[0].mxu0
        %531 = vmatprep.mubr.f32.mxu0 0.0
        %532 = vmatmul.mubr.f32.gmra.mrb[0].mxu0 %v307
        %v533 = vpop.f32.mrb[0].mxu0
        %v534 = vadd.f32 0.0, %v533
        %v535 = vpop.f32.mrb[0].mxu0
        %536 = vmatprep.mubr.f32.mxu0 0.0
        %537 = vmatmul.mubr.f32.gmra.mrb[0].mxu0 %v310
        %v538 = vpop.f32.mrb[0].mxu0
        %v539 = vadd.f32 0.0, %v538
        %v540 = vpop.f32.mrb[0].mxu0
        %541 = vmatprep.mubr.f32.mxu0 0.0
        %542 = vmatmul.mubr.f32.gmra.mrb[0].mxu0 %v313
        %v543 = vpop.f32.mrb[0].mxu0
        %v544 = vadd.f32 0.0, %v543
        %v545 = vpop.f32.mrb[0].mxu0
        %546 = vmatprep.mubr.f32.mxu0 0.0
        %547 = vmatmul.mubr.f32.gmra.mrb[0].mxu0 %v316
        %v548 = vpop.f32.mrb[0].mxu0
        %v549 = vadd.f32 0.0, %v548
        %v550 = vpop.f32.mrb[0].mxu0
        %551 = vmatprep.mubr.f32.mxu0 0.0
        %552 = vmatmul.mubr.f32.gmra.mrb[0].mxu0 %v319
        %v553 = vpop.f32.mrb[0].mxu0
        %v554 = vadd.f32 0.0, %v553
        %v555 = vpop.f32.mrb[0].mxu0
        %556 = vmatprep.mubr.f32.mxu0 0.0
        %557 = vmatmul.mubr.f32.gmra.mrb[0].mxu0 %v322
        %v558 = vpop.f32.mrb[0].mxu0
        %v559 = vadd.f32 0.0, %v558
        %v560 = vpop.f32.mrb[0].mxu0
        %561 = vmatprep.mubr.f32.mxu0 0.0
        %562 = vmatmul.mubr.f32.gmra.mrb[0].mxu0 %v325
        %v563 = vpop.f32.mrb[0].mxu0
        %v564 = vadd.f32 0.0, %v563
        %v565 = vpop.f32.mrb[0].mxu0
        %566 = vmatprep.mubr.f32.mxu0 0.0
        %567 = vmatmul.mubr.f32.gmra.mrb[0].mxu0 %v328
        %v568 = vpop.f32.mrb[0].mxu0
        %v569 = vadd.f32 0.0, %v568
        %v570 = vpop.f32.mrb[0].mxu0
        %571 = vmatprep.mubr.f32.mxu0 0.0
        %572 = vmatmul.mubr.f32.gmra.mrb[0].mxu0 %v331
        %v573 = vpop.f32.mrb[0].mxu0
        %v574 = vadd.f32 0.0, %v573
        %v575 = vpop.f32.mrb[0].mxu0
        %576 = vmatprep.mubr.f32.mxu0 0.0
        %577 = vmatmul.mubr.f32.gmra.mrb[0].mxu0 %v334
        %v578 = vpop.f32.mrb[0].mxu0
        %v579 = vadd.f32 0.0, %v578
        %v580 = vpop.f32.mrb[0].mxu0
        %581 = vmatprep.mubr.f32.mxu0 0.0
        %582 = vmatmul.mubr.f32.gmra.mrb[0].mxu0 %v337
        %v583 = vpop.f32.mrb[0].mxu0
        %v584 = vadd.f32 0.0, %v583
        %v585 = vpop.f32.mrb[0].mxu0
        %586 = vmatprep.mubr.f32.mxu0 0.0
        %587 = vmatmul.mubr.f32.gmra.mrb[0].mxu0 %v340
        %v588 = vpop.f32.mrb[0].mxu0
        %v589 = vadd.f32 0.0, %v588
        %v590 = vpop.f32.mrb[0].mxu0
        %591 = vmatprep.mubr.f32.mxu0 0.0
        %592 = vmatmul.mubr.f32.gmra.mrb[0].mxu0 %v343
        %v593 = vpop.f32.mrb[0].mxu0
        %v594 = vadd.f32 0.0, %v593
        %v595 = vpop.f32.mrb[0].mxu0
        %596 = vmatprep.mubr.f32.mxu0 0.0
        %597 = vmatmul.mubr.f32.gmra.mrb[0].mxu0 %v346
        %v598 = vpop.f32.mrb[0].mxu0
        %v599 = vadd.f32 0.0, %v598
        %v600 = vpop.f32.mrb[0].mxu0
        %601 = vmatprep.mubr.f32.mxu0 0.0
        %602 = vmatmul.mubr.f32.gmra.mrb[0].mxu0 %v349
        %v603 = vpop.f32.mrb[0].mxu0
        %v604 = vadd.f32 0.0, %v603
        %v605 = vpop.f32.mrb[0].mxu0
        %606 = vmatprep.mubr.f32.mxu0 0.0
        %607 = vmatmul.mubr.f32.gmra.mrb[0].mxu0 %v352
        %v608 = vpop.f32.mrb[0].mxu0
        %v609 = vadd.f32 0.0, %v608
        %v610 = vpop.f32.mrb[0].mxu0
        %611 = vmatprep.mubr.f32.mxu0 0.0
        %612 = vmatmul.mubr.f32.gmra.mrb[0].mxu0 %v355
        %v613 = vpop.f32.mrb[0].mxu0
        %v614 = vadd.f32 0.0, %v613
        %v615 = vpop.f32.mrb[0].mxu0
        %616 = vmatprep.mubr.f32.mxu0 0.0
        %617 = vmatmul.mubr.f32.gmra.mrb[0].mxu0 %v358
        %v618 = vpop.f32.mrb[0].mxu0
        %v619 = vadd.f32 0.0, %v618
        %v620 = vpop.f32.mrb[0].mxu0
        %621 = vmatprep.mubr.f32.mxu0 0.0
        %622 = vmatmul.mubr.f32.gmra.mrb[0].mxu0 %v361
        %v623 = vpop.f32.mrb[0].mxu0
        %v624 = vadd.f32 0.0, %v623
        %v625 = vpop.f32.mrb[0].mxu0
        %626 = vmatprep.mubr.f32.mxu0 0.0
        %627 = vmatmul.mubr.f32.gmra.mrb[0].mxu0 %v364
        %v628 = vpop.f32.mrb[0].mxu0
        %v629 = vadd.f32 0.0, %v628
        %v630 = vpop.f32.mrb[0].mxu0
        %631 = vmatprep.mubr.f32.mxu0 0.0
        %632 = vmatmul.mubr.f32.gmra.mrb[0].mxu0 %v367
        %v633 = vpop.f32.mrb[0].mxu0
        %v634 = vadd.f32 0.0, %v633
        %v635 = vpop.f32.mrb[0].mxu0
        %636 = vmatprep.mubr.f32.mxu0 0.0
        %637 = vmatmul.mubr.f32.gmra.mrb[0].mxu0 %v370
        %v638 = vpop.f32.mrb[0].mxu0
        %v639 = vadd.f32 0.0, %v638
        %v640 = vpop.f32.mrb[0].mxu0
        %641 = vmatprep.mubr.f32.mxu0 0.0
        %642 = vmatmul.mubr.f32.gmra.mrb[0].mxu0 %v373
        %v643 = vpop.f32.mrb[0].mxu0
        %v644 = vadd.f32 0.0, %v643
        %v645 = vpop.f32.mrb[0].mxu0
        %646 = vmatprep.mubr.f32.mxu0 0.0
        %647 = vmatmul.mubr.f32.gmra.mrb[0].mxu0 %v376
        %v648 = vpop.f32.mrb[0].mxu0
        %v649 = vadd.f32 0.0, %v648
        %v650 = vpop.f32.mrb[0].mxu0
        %651 = vmatprep.mubr.f32.mxu0 0.0
        %652 = vmatmul.mubr.f32.gmra.mrb[0].mxu0 %v379
        %v653 = vpop.f32.mrb[0].mxu0
        %v654 = vadd.f32 0.0, %v653
        %v655 = vpop.f32.mrb[0].mxu0
        %656 = vmatprep.mubr.f32.mxu0 0.0
        %657 = vmatmul.mubr.f32.gmra.mrb[0].mxu0 %v382
        %v658 = vpop.f32.mrb[0].mxu0
        %v659 = vadd.f32 0.0, %v658
        %v660 = vpop.f32.mrb[0].mxu0
        %661 = vmatprep.mubr.f32.mxu0 0.0
        %662 = vmatmul.mubr.f32.gmra.mrb[0].mxu0 %v385
        %v663 = vpop.f32.mrb[0].mxu0
        %v664 = vadd.f32 0.0, %v663
        %v665 = vpop.f32.mrb[0].mxu0
        %666 = vmatprep.mubr.f32.mxu0 0.0
        %667 = vmatmul.mubr.f32.gmra.mrb[0].mxu0 %v388
        %v668 = vpop.f32.mrb[0].mxu0
        %v669 = vadd.f32 0.0, %v668
        %v670 = vpop.f32.mrb[0].mxu0
        %671 = vmatprep.mubr.f32.mxu0 0.0
        %672 = vmatmul.mubr.f32.gmra.mrb[0].mxu0 %v391
        %v673 = vpop.f32.mrb[0].mxu0
        %v674 = vadd.f32 0.0, %v673
        %v675 = vpop.f32.mrb[0].mxu0
        %676 = vmatprep.mubr.f32.mxu0 0.0
        %677 = vmatmul.mubr.f32.gmra.mrb[0].mxu0 %v394
        %v678 = vpop.f32.mrb[0].mxu0
        %v679 = vadd.f32 0.0, %v678
        %v680 = vpop.f32.mrb[0].mxu0
        %681 = vmatprep.mubr.f32.mxu0 0.0
        %682 = vmatmul.mubr.f32.gmra.mrb[0].mxu0 %v397
        %v683 = vpop.f32.mrb[0].mxu0
        %v684 = vadd.f32 0.0, %v683
        %v685 = vpop.f32.mrb[0].mxu0
        %686 = vmatprep.mubr.f32.mxu0 0.0
        %687 = vmatmul.mubr.f32.gmra.mrb[0].mxu0 %v400
        %v688 = vpop.f32.mrb[0].mxu0
        %v689 = vadd.f32 0.0, %v688
        %v690 = vpop.f32.mrb[0].mxu0
        %691 = vmatprep.mubr.f32.mxu0 0.0
        %692 = vmatmul.mubr.f32.gmra.mrb[0].mxu0 %v403
        %v693 = vpop.f32.mrb[0].mxu0
        %v694 = vadd.f32 0.0, %v693
        %v695 = vpop.f32.mrb[0].mxu0
        %696 = vmatprep.mubr.f32.mxu0 0.0
        %697 = vmatmul.mubr.f32.gmra.mrb[0].mxu0 %v406
        %v698 = vpop.f32.mrb[0].mxu0
        %v699 = vadd.f32 0.0, %v698
        %v700 = vpop.f32.mrb[0].mxu0
        %701 = vmatprep.mubr.f32.mxu0 0.0
        %702 = vmatmul.mubr.f32.gmra.mrb[0].mxu0 %v409
        %v703 = vpop.f32.mrb[0].mxu0
        %v704 = vadd.f32 0.0, %v703
        %v705 = vpop.f32.mrb[0].mxu0
        %706 = vmatprep.mubr.f32.mxu0 0.0
        %707 = vmatmul.mubr.f32.gmra.mrb[0].mxu0 %v412
        %v708 = vpop.f32.mrb[0].mxu0
        %v709 = vadd.f32 0.0, %v708
        %v710 = vpop.f32.mrb[0].mxu0
        %711 = vmatprep.mubr.f32.mxu0 0.0
        %712 = vmatmul.mubr.f32.gmra.mrb[0].mxu0 %v415
        %v713 = vpop.f32.mrb[0].mxu0
        %v714 = vadd.f32 0.0, %v713
        %v715 = vpop.f32.mrb[0].mxu0
        %716 = vmatprep.mubr.f32.mxu0 0.0
        %717 = vmatmul.mubr.f32.gmra.mrb[0].mxu0 %v418
        %v718 = vpop.f32.mrb[0].mxu0
        %v719 = vadd.f32 0.0, %v718
        %v720 = vpop.f32.mrb[0].mxu0
        %721 = vmatprep.mubr.f32.mxu0 0.0
        %722 = vmatmul.mubr.f32.gmra.mrb[0].mxu0 %v421
        %v723 = vpop.f32.mrb[0].mxu0
        %v724 = vadd.f32 0.0, %v723
        %v725 = vpop.f32.mrb[0].mxu0
        %726 = vmatprep.mubr.f32.mxu0 0.0
        %727 = vmatmul.mubr.f32.gmra.mrb[0].mxu0 %v424
        %v728 = vpop.f32.mrb[0].mxu0
        %v729 = vadd.f32 0.0, %v728
        %v730 = vpop.f32.mrb[0].mxu0
        %731 = vmatprep.mubr.f32.mxu0 0.0
        %732 = vmatmul.mubr.f32.gmra.mrb[0].mxu0 %v427
        %v733 = vpop.f32.mrb[0].mxu0
        %v734 = vadd.f32 0.0, %v733
        %v735 = vpop.f32.mrb[0].mxu0
        %736 = vmatprep.mubr.f32.mxu0 0.0
        %737 = vmatmul.mubr.f32.gmra.mrb[0].mxu0 %v430
        %v738 = vpop.f32.mrb[0].mxu0
        %v739 = vadd.f32 0.0, %v738
        %v740 = vpop.f32.mrb[0].mxu0
        %741 = vmatprep.mubr.f32.mxu0 0.0
        %742 = vmatmul.mubr.f32.gmra.mrb[0].mxu0 %v433
        %v743 = vpop.f32.mrb[0].mxu0
        %v744 = vadd.f32 0.0, %v743
        %v745 = vpop.f32.mrb[0].mxu0
        %746 = vmatprep.mubr.f32.mxu0 0.0
        %747 = vmatmul.mubr.f32.gmra.mrb[0].mxu0 %v436
        %v748 = vpop.f32.mrb[0].mxu0
        %v749 = vadd.f32 0.0, %v748
        %v750 = vpop.f32.mrb[0].mxu0
        %751 = vmatprep.mubr.f32.mxu0 0.0
        %752 = vmatmul.mubr.f32.gmra.mrb[0].mxu0 %v439
        %v753 = vpop.f32.mrb[0].mxu0
        %v754 = vadd.f32 0.0, %v753
        %v755 = vpop.f32.mrb[0].mxu0
        %756 = vmatprep.mubr.f32.mxu0 0.0
        %757 = vmatmul.mubr.f32.gmra.mrb[0].mxu0 %v442
        %v758 = vpop.f32.mrb[0].mxu0
        %v759 = vadd.f32 0.0, %v758
        %v760 = vpop.f32.mrb[0].mxu0
        %761 = vmatprep.mubr.f32.mxu0 0.0
        %762 = vmatmul.mubr.f32.gmra.mrb[0].mxu0 %v445
        %v763 = vpop.f32.mrb[0].mxu0
        %v764 = vadd.f32 0.0, %v763
        %v765 = vpop.f32.mrb[0].mxu0
        %766 = vdwg.mxu0
        %v768 = vsel %vm293, %v186, 0
        %v771 = vsel %vm293, %v187, 0
        %v774 = vsel %vm293, %v188, 0
        %v777 = vsel %vm293, %v189, 0
        %v780 = vsel %vm293, %v190, 0
        %v783 = vsel %vm293, %v191, 0
        %v786 = vsel %vm293, %v192, 0
        %v789 = vsel %vm293, %v193, 0
        %v792 = vsel %vm293, %v194, 0
        %v795 = vsel %vm293, %v195, 0
        %v798 = vsel %vm293, %v196, 0
        %v801 = vsel %vm293, %v197, 0
        %v804 = vsel %vm293, %v198, 0
        %v807 = vsel %vm293, %v199, 0
        %v810 = vsel %vm293, %v200, 0
        %v813 = vsel %vm293, %v201, 0
        %v816 = vsel %vm293, %v202, 0
        %v819 = vsel %vm293, %v203, 0
        %v822 = vsel %vm293, %v204, 0
        %v825 = vsel %vm293, %v205, 0
        %v828 = vsel %vm293, %v206, 0
        %v831 = vsel %vm293, %v207, 0
        %v834 = vsel %vm293, %v208, 0
        %v837 = vsel %vm293, %v209, 0
        %v840 = vsel %vm293, %v210, 0
        %v843 = vsel %vm293, %v211, 0
        %v846 = vsel %vm293, %v212, 0
        %v849 = vsel %vm293, %v213, 0
        %v852 = vsel %vm293, %v214, 0
        %v855 = vsel %vm293, %v215, 0
        %v858 = vsel %vm293, %v216, 0
        %v861 = vsel %vm293, %v217, 0
        %v864 = vsel %vm293, %v218, 0
        %v867 = vsel %vm293, %v219, 0
        %v870 = vsel %vm293, %v220, 0
        %v873 = vsel %vm293, %v221, 0
        %v876 = vsel %vm293, %v222, 0
        %v879 = vsel %vm293, %v223, 0
        %v882 = vsel %vm293, %v224, 0
        %v885 = vsel %vm293, %v225, 0
        %v888 = vsel %vm293, %v226, 0
        %v891 = vsel %vm293, %v227, 0
        %v894 = vsel %vm293, %v228, 0
        %v897 = vsel %vm293, %v229, 0
        %v900 = vsel %vm293, %v230, 0
        %v903 = vsel %vm293, %v231, 0
        %v906 = vsel %vm293, %v232, 0
        %v909 = vsel %vm293, %v233, 0
        %v912 = vsel %vm293, %v234, 0
        %v915 = vsel %vm293, %v235, 0
        %v918 = vsel %vm293, %v236, 0
        %920 = vmatprep.subr.mxu0 0.0
        %921 = vmatpush1.msra.mxu0 %v237
        %922 = vmatprep.subr.mxu0 0.0
        %923 = vmatpush1.msra.mxu0 0.0
        %924 = vmatprep.subr.mxu0 0.0
        %925 = vmatpush1.msra.mxu0 0.0
        %926 = vmatprep.subr.mxu0 0.0
        %927 = vmatpush1.msra.mxu0 0.0
        %928 = vmatprep.subr.mxu0 0.0
        %929 = vmatpush1.msra.mxu0 0.0
        %930 = vmatprep.subr.mxu0 0.0
        %931 = vmatpush1.msra.mxu0 0.0
        %932 = vmatprep.subr.mxu0 0.0
        %933 = vmatpush1.msra.mxu0 0.0
        %934 = vmatprep.subr.mxu0 0.0
        %935 = vmatpush1.msra.mxu0 0.0
        %936 = vmatprep.subr.mxu0 0.0
        %937 = vmatpush1.msra.mxu0 0.0
        %938 = vmatprep.subr.mxu0 0.0
        %939 = vmatpush1.msra.mxu0 0.0
        %940 = vmatprep.subr.mxu0 0.0
        %941 = vmatpush1.msra.mxu0 0.0
        %942 = vmatprep.subr.mxu0 0.0
        %943 = vmatpush1.msra.mxu0 0.0
        %944 = vmatprep.subr.mxu0 0.0
        %945 = vmatpush1.msra.mxu0 0.0
        %946 = vmatprep.subr.mxu0 0.0
        %947 = vmatpush1.msra.mxu0 0.0
        %948 = vmatprep.subr.mxu0 0.0
        %949 = vmatpush1.msra.mxu0 0.0
        %950 = vmatprep.subr.mxu0 0.0
        %951 = vmatpush1.msra.mxu0 0.0
        %952 = vmatprep.subr.mxu0 0.0
        %953 = vmatpush1.msra.mxu0 0.0
        %954 = vmatprep.subr.mxu0 0.0
        %955 = vmatpush1.msra.mxu0 0.0
        %956 = vmatprep.subr.mxu0 0.0
        %957 = vmatpush1.msra.mxu0 0.0
        %958 = vmatprep.subr.mxu0 0.0
        %959 = vmatpush1.msra.mxu0 0.0
        %960 = vmatprep.subr.mxu0 0.0
        %961 = vmatpush1.msra.mxu0 0.0
        %962 = vmatprep.subr.mxu0 0.0
        %963 = vmatpush1.msra.mxu0 0.0
        %964 = vmatprep.subr.mxu0 0.0
        %965 = vmatpush1.msra.mxu0 0.0
        %966 = vmatprep.subr.mxu0 0.0
        %967 = vmatpush1.msra.mxu0 0.0
        %968 = vmatprep.subr.mxu0 0.0
        %969 = vmatpush1.msra.mxu0 0.0
        %970 = vmatprep.subr.mxu0 0.0
        %971 = vmatpush1.msra.mxu0 0.0
        %972 = vmatprep.subr.mxu0 0.0
        %973 = vmatpush1.msra.mxu0 0.0
        %974 = vmatprep.subr.mxu0 0.0
        %975 = vmatpush1.msra.mxu0 0.0
        %976 = vmatprep.subr.mxu0 0.0
        %977 = vmatpush1.msra.mxu0 0.0
        %978 = vmatprep.subr.mxu0 0.0
        %979 = vmatpush1.msra.mxu0 0.0
        %980 = vmatprep.subr.mxu0 0.0
        %981 = vmatpush1.msra.mxu0 0.0
        %982 = vmatprep.subr.mxu0 0.0
        %983 = vmatpush1.msra.mxu0 0.0
        %984 = vmatprep.mubr.f32.mxu0 0.0
        %985 = vmatmul.mubr.f32.gmra.mrb[0].mxu0 %v768
        %v986 = vpop.f32.mrb[0].mxu0
        %v987 = vadd.f32 %v514, %v986
        %v988 = vpop.f32.mrb[0].mxu0
        %989 = vmatprep.mubr.f32.mxu0 0.0
        %990 = vmatmul.mubr.f32.gmra.mrb[0].mxu0 %v771
        %v991 = vpop.f32.mrb[0].mxu0
        %v992 = vadd.f32 %v519, %v991
        %v993 = vpop.f32.mrb[0].mxu0
        %994 = vmatprep.mubr.f32.mxu0 0.0
        %995 = vmatmul.mubr.f32.gmra.mrb[0].mxu0 %v774
        %v996 = vpop.f32.mrb[0].mxu0
        %v997 = vadd.f32 %v524, %v996
        %v998 = vpop.f32.mrb[0].mxu0
        %999 = vmatprep.mubr.f32.mxu0 0.0
        %1000 = vmatmul.mubr.f32.gmra.mrb[0].mxu0 %v777
        %v1001 = vpop.f32.mrb[0].mxu0
        %v1002 = vadd.f32 %v529, %v1001
        %v1003 = vpop.f32.mrb[0].mxu0
        %1004 = vmatprep.mubr.f32.mxu0 0.0
        %1005 = vmatmul.mubr.f32.gmra.mrb[0].mxu0 %v780
        %v1006 = vpop.f32.mrb[0].mxu0
        %v1007 = vadd.f32 %v534, %v1006
        %v1008 = vpop.f32.mrb[0].mxu0
        %1009 = vmatprep.mubr.f32.mxu0 0.0
        %1010 = vmatmul.mubr.f32.gmra.mrb[0].mxu0 %v783
        %v1011 = vpop.f32.mrb[0].mxu0
        %v1012 = vadd.f32 %v539, %v1011
        %v1013 = vpop.f32.mrb[0].mxu0
        %1014 = vmatprep.mubr.f32.mxu0 0.0
        %1015 = vmatmul.mubr.f32.gmra.mrb[0].mxu0 %v786
        %v1016 = vpop.f32.mrb[0].mxu0
        %v1017 = vadd.f32 %v544, %v1016
        %v1018 = vpop.f32.mrb[0].mxu0
        %1019 = vmatprep.mubr.f32.mxu0 0.0
        %1020 = vmatmul.mubr.f32.gmra.mrb[0].mxu0 %v789
        %v1021 = vpop.f32.mrb[0].mxu0
        %v1022 = vadd.f32 %v549, %v1021
        %v1023 = vpop.f32.mrb[0].mxu0
        %1024 = vmatprep.mubr.f32.mxu0 0.0
        %1025 = vmatmul.mubr.f32.gmra.mrb[0].mxu0 %v792
        %v1026 = vpop.f32.mrb[0].mxu0
        %v1027 = vadd.f32 %v554, %v1026
        %v1028 = vpop.f32.mrb[0].mxu0
        %1029 = vmatprep.mubr.f32.mxu0 0.0
        %1030 = vmatmul.mubr.f32.gmra.mrb[0].mxu0 %v795
        %v1031 = vpop.f32.mrb[0].mxu0
        %v1032 = vadd.f32 %v559, %v1031
        %v1033 = vpop.f32.mrb[0].mxu0
        %1034 = vmatprep.mubr.f32.mxu0 0.0
        %1035 = vmatmul.mubr.f32.gmra.mrb[0].mxu0 %v798
        %v1036 = vpop.f32.mrb[0].mxu0
        %v1037 = vadd.f32 %v564, %v1036
        %v1038 = vpop.f32.mrb[0].mxu0
        %1039 = vmatprep.mubr.f32.mxu0 0.0
        %1040 = vmatmul.mubr.f32.gmra.mrb[0].mxu0 %v801
        %v1041 = vpop.f32.mrb[0].mxu0
        %v1042 = vadd.f32 %v569, %v1041
        %v1043 = vpop.f32.mrb[0].mxu0
        %1044 = vmatprep.mubr.f32.mxu0 0.0
        %1045 = vmatmul.mubr.f32.gmra.mrb[0].mxu0 %v804
        %v1046 = vpop.f32.mrb[0].mxu0
        %v1047 = vadd.f32 %v574, %v1046
        %v1048 = vpop.f32.mrb[0].mxu0
        %1049 = vmatprep.mubr.f32.mxu0 0.0
        %1050 = vmatmul.mubr.f32.gmra.mrb[0].mxu0 %v807
        %v1051 = vpop.f32.mrb[0].mxu0
        %v1052 = vadd.f32 %v579, %v1051
        %v1053 = vpop.f32.mrb[0].mxu0
        %1054 = vmatprep.mubr.f32.mxu0 0.0
        %1055 = vmatmul.mubr.f32.gmra.mrb[0].mxu0 %v810
        %v1056 = vpop.f32.mrb[0].mxu0
        %v1057 = vadd.f32 %v584, %v1056
        %v1058 = vpop.f32.mrb[0].mxu0
        %1059 = vmatprep.mubr.f32.mxu0 0.0
        %1060 = vmatmul.mubr.f32.gmra.mrb[0].mxu0 %v813
        %v1061 = vpop.f32.mrb[0].mxu0
        %v1062 = vadd.f32 %v589, %v1061
        %v1063 = vpop.f32.mrb[0].mxu0
        %1064 = vmatprep.mubr.f32.mxu0 0.0
        %1065 = vmatmul.mubr.f32.gmra.mrb[0].mxu0 %v816
        %v1066 = vpop.f32.mrb[0].mxu0
        %v1067 = vadd.f32 %v594, %v1066
        %v1068 = vpop.f32.mrb[0].mxu0
        %1069 = vmatprep.mubr.f32.mxu0 0.0
        %1070 = vmatmul.mubr.f32.gmra.mrb[0].mxu0 %v819
        %v1071 = vpop.f32.mrb[0].mxu0
        %v1072 = vadd.f32 %v599, %v1071
        %v1073 = vpop.f32.mrb[0].mxu0
        %1074 = vmatprep.mubr.f32.mxu0 0.0
        %1075 = vmatmul.mubr.f32.gmra.mrb[0].mxu0 %v822
        %v1076 = vpop.f32.mrb[0].mxu0
        %v1077 = vadd.f32 %v604, %v1076
        %v1078 = vpop.f32.mrb[0].mxu0
        %1079 = vmatprep.mubr.f32.mxu0 0.0
        %1080 = vmatmul.mubr.f32.gmra.mrb[0].mxu0 %v825
        %v1081 = vpop.f32.mrb[0].mxu0
        %v1082 = vadd.f32 %v609, %v1081
        %v1083 = vpop.f32.mrb[0].mxu0
        %1084 = vmatprep.mubr.f32.mxu0 0.0
        %1085 = vmatmul.mubr.f32.gmra.mrb[0].mxu0 %v828
        %v1086 = vpop.f32.mrb[0].mxu0
        %v1087 = vadd.f32 %v614, %v1086
        %v1088 = vpop.f32.mrb[0].mxu0
        %1089 = vmatprep.mubr.f32.mxu0 0.0
        %1090 = vmatmul.mubr.f32.gmra.mrb[0].mxu0 %v831
        %v1091 = vpop.f32.mrb[0].mxu0
        %v1092 = vadd.f32 %v619, %v1091
        %v1093 = vpop.f32.mrb[0].mxu0
        %1094 = vmatprep.mubr.f32.mxu0 0.0
        %1095 = vmatmul.mubr.f32.gmra.mrb[0].mxu0 %v834
        %v1096 = vpop.f32.mrb[0].mxu0
        %v1097 = vadd.f32 %v624, %v1096
        %v1098 = vpop.f32.mrb[0].mxu0
        %1099 = vmatprep.mubr.f32.mxu0 0.0
        %1100 = vmatmul.mubr.f32.gmra.mrb[0].mxu0 %v837
        %v1101 = vpop.f32.mrb[0].mxu0
        %v1102 = vadd.f32 %v629, %v1101
        %v1103 = vpop.f32.mrb[0].mxu0
        %1104 = vmatprep.mubr.f32.mxu0 0.0
        %1105 = vmatmul.mubr.f32.gmra.mrb[0].mxu0 %v840
        %v1106 = vpop.f32.mrb[0].mxu0
        %v1107 = vadd.f32 %v634, %v1106
        %v1108 = vpop.f32.mrb[0].mxu0
        %1109 = vmatprep.mubr.f32.mxu0 0.0
        %1110 = vmatmul.mubr.f32.gmra.mrb[0].mxu0 %v843
        %v1111 = vpop.f32.mrb[0].mxu0
        %v1112 = vadd.f32 %v639, %v1111
        %v1113 = vpop.f32.mrb[0].mxu0
        %1114 = vmatprep.mubr.f32.mxu0 0.0
        %1115 = vmatmul.mubr.f32.gmra.mrb[0].mxu0 %v846
        %v1116 = vpop.f32.mrb[0].mxu0
        %v1117 = vadd.f32 %v644, %v1116
        %v1118 = vpop.f32.mrb[0].mxu0
        %1119 = vmatprep.mubr.f32.mxu0 0.0
        %1120 = vmatmul.mubr.f32.gmra.mrb[0].mxu0 %v849
        %v1121 = vpop.f32.mrb[0].mxu0
        %v1122 = vadd.f32 %v649, %v1121
        %v1123 = vpop.f32.mrb[0].mxu0
        %1124 = vmatprep.mubr.f32.mxu0 0.0
        %1125 = vmatmul.mubr.f32.gmra.mrb[0].mxu0 %v852
        %v1126 = vpop.f32.mrb[0].mxu0
        %v1127 = vadd.f32 %v654, %v1126
        %v1128 = vpop.f32.mrb[0].mxu0
        %1129 = vmatprep.mubr.f32.mxu0 0.0
        %1130 = vmatmul.mubr.f32.gmra.mrb[0].mxu0 %v855
        %v1131 = vpop.f32.mrb[0].mxu0
        %v1132 = vadd.f32 %v659, %v1131
        %v1133 = vpop.f32.mrb[0].mxu0
        %1134 = vmatprep.mubr.f32.mxu0 0.0
        %1135 = vmatmul.mubr.f32.gmra.mrb[0].mxu0 %v858
        %v1136 = vpop.f32.mrb[0].mxu0
        %v1137 = vadd.f32 %v664, %v1136
        %v1138 = vpop.f32.mrb[0].mxu0
        %1139 = vmatprep.mubr.f32.mxu0 0.0
        %1140 = vmatmul.mubr.f32.gmra.mrb[0].mxu0 %v861
        %v1141 = vpop.f32.mrb[0].mxu0
        %v1142 = vadd.f32 %v669, %v1141
        %v1143 = vpop.f32.mrb[0].mxu0
        %1144 = vmatprep.mubr.f32.mxu0 0.0
        %1145 = vmatmul.mubr.f32.gmra.mrb[0].mxu0 %v864
        %v1146 = vpop.f32.mrb[0].mxu0
        %v1147 = vadd.f32 %v674, %v1146
        %v1148 = vpop.f32.mrb[0].mxu0
        %1149 = vmatprep.mubr.f32.mxu0 0.0
        %1150 = vmatmul.mubr.f32.gmra.mrb[0].mxu0 %v867
        %v1151 = vpop.f32.mrb[0].mxu0
        %v1152 = vadd.f32 %v679, %v1151
        %v1153 = vpop.f32.mrb[0].mxu0
        %1154 = vmatprep.mubr.f32.mxu0 0.0
        %1155 = vmatmul.mubr.f32.gmra.mrb[0].mxu0 %v870
        %v1156 = vpop.f32.mrb[0].mxu0
        %v1157 = vadd.f32 %v684, %v1156
        %v1158 = vpop.f32.mrb[0].mxu0
        %1159 = vmatprep.mubr.f32.mxu0 0.0
        %1160 = vmatmul.mubr.f32.gmra.mrb[0].mxu0 %v873
        %v1161 = vpop.f32.mrb[0].mxu0
        %v1162 = vadd.f32 %v689, %v1161
        %v1163 = vpop.f32.mrb[0].mxu0
        %1164 = vmatprep.mubr.f32.mxu0 0.0
        %1165 = vmatmul.mubr.f32.gmra.mrb[0].mxu0 %v876
        %v1166 = vpop.f32.mrb[0].mxu0
        %v1167 = vadd.f32 %v694, %v1166
        %v1168 = vpop.f32.mrb[0].mxu0
        %1169 = vmatprep.mubr.f32.mxu0 0.0
        %1170 = vmatmul.mubr.f32.gmra.mrb[0].mxu0 %v879
        %v1171 = vpop.f32.mrb[0].mxu0
        %v1172 = vadd.f32 %v699, %v1171
        %v1173 = vpop.f32.mrb[0].mxu0
        %1174 = vmatprep.mubr.f32.mxu0 0.0
        %1175 = vmatmul.mubr.f32.gmra.mrb[0].mxu0 %v882
        %v1176 = vpop.f32.mrb[0].mxu0
        %v1177 = vadd.f32 %v704, %v1176
        %v1178 = vpop.f32.mrb[0].mxu0
        %1179 = vmatprep.mubr.f32.mxu0 0.0
        %1180 = vmatmul.mubr.f32.gmra.mrb[0].mxu0 %v885
        %v1181 = vpop.f32.mrb[0].mxu0
        %v1182 = vadd.f32 %v709, %v1181
        %v1183 = vpop.f32.mrb[0].mxu0
        %1184 = vmatprep.mubr.f32.mxu0 0.0
        %1185 = vmatmul.mubr.f32.gmra.mrb[0].mxu0 %v888
        %v1186 = vpop.f32.mrb[0].mxu0
        %v1187 = vadd.f32 %v714, %v1186
        %v1188 = vpop.f32.mrb[0].mxu0
        %1189 = vmatprep.mubr.f32.mxu0 0.0
        %1190 = vmatmul.mubr.f32.gmra.mrb[0].mxu0 %v891
        %v1191 = vpop.f32.mrb[0].mxu0
        %v1192 = vadd.f32 %v719, %v1191
        %v1193 = vpop.f32.mrb[0].mxu0
        %1194 = vmatprep.mubr.f32.mxu0 0.0
        %1195 = vmatmul.mubr.f32.gmra.mrb[0].mxu0 %v894
        %v1196 = vpop.f32.mrb[0].mxu0
        %v1197 = vadd.f32 %v724, %v1196
        %v1198 = vpop.f32.mrb[0].mxu0
        %1199 = vmatprep.mubr.f32.mxu0 0.0
        %1200 = vmatmul.mubr.f32.gmra.mrb[0].mxu0 %v897
        %v1201 = vpop.f32.mrb[0].mxu0
        %v1202 = vadd.f32 %v729, %v1201
        %v1203 = vpop.f32.mrb[0].mxu0
        %1204 = vmatprep.mubr.f32.mxu0 0.0
        %1205 = vmatmul.mubr.f32.gmra.mrb[0].mxu0 %v900
        %v1206 = vpop.f32.mrb[0].mxu0
        %v1207 = vadd.f32 %v734, %v1206
        %v1208 = vpop.f32.mrb[0].mxu0
        %1209 = vmatprep.mubr.f32.mxu0 0.0
        %1210 = vmatmul.mubr.f32.gmra.mrb[0].mxu0 %v903
        %v1211 = vpop.f32.mrb[0].mxu0
        %v1212 = vadd.f32 %v739, %v1211
        %v1213 = vpop.f32.mrb[0].mxu0
        %1214 = vmatprep.mubr.f32.mxu0 0.0
        %1215 = vmatmul.mubr.f32.gmra.mrb[0].mxu0 %v906
        %v1216 = vpop.f32.mrb[0].mxu0
        %v1217 = vadd.f32 %v744, %v1216
        %v1218 = vpop.f32.mrb[0].mxu0
        %1219 = vmatprep.mubr.f32.mxu0 0.0
        %1220 = vmatmul.mubr.f32.gmra.mrb[0].mxu0 %v909
        %v1221 = vpop.f32.mrb[0].mxu0
        %v1222 = vadd.f32 %v749, %v1221
        %v1223 = vpop.f32.mrb[0].mxu0
        %1224 = vmatprep.mubr.f32.mxu0 0.0
        %1225 = vmatmul.mubr.f32.gmra.mrb[0].mxu0 %v912
        %v1226 = vpop.f32.mrb[0].mxu0
        %v1227 = vadd.f32 %v754, %v1226
        %v1228 = vpop.f32.mrb[0].mxu0
        %1229 = vmatprep.mubr.f32.mxu0 0.0
        %1230 = vmatmul.mubr.f32.gmra.mrb[0].mxu0 %v915
        %v1231 = vpop.f32.mrb[0].mxu0
        %v1232 = vadd.f32 %v759, %v1231
        %v1233 = vpop.f32.mrb[0].mxu0
        %1234 = vmatprep.mubr.f32.mxu0 0.0
        %1235 = vmatmul.mubr.f32.gmra.mrb[0].mxu0 %v918
        %v1236 = vpop.f32.mrb[0].mxu0
        %v1237 = vadd.f32 %v764, %v1236
        %v1238 = vpop.f32.mrb[0].mxu0
        %1239 = vdwg.mxu0
        %s1240 = sadd.s32 %s184, 24
        %s1241 = scalar_lea.vmem %s182, %s1240
        %v1242 = vld [vmem:[%s1241] sm:$0xff]
        %v1243 = vld [vmem:[%s1241 + $0x8] sm:$0xff]
        %v1244 = vld [vmem:[%s1241 + $0x10] sm:$0xff]
        %v1245 = vld [vmem:[%s1241 + $0x18] sm:$0xff]
        %v1246 = vld [vmem:[%s1241 + $0x20] sm:$0xff]
        %v1247 = vld [vmem:[%s1241 + $0x28] sm:$0xff]
        %v1248 = vld [vmem:[%s1241 + $0x30] sm:$0xff]
        %v1249 = vld [vmem:[%s1241 + $0x38] sm:$0xff]
        %v1250 = vld [vmem:[%s1241 + $0x40] sm:$0xff]
        %v1251 = vld [vmem:[%s1241 + $0x48] sm:$0xff]
        %v1252 = vld [vmem:[%s1241 + $0x50] sm:$0xff]
        %v1253 = vld [vmem:[%s1241 + $0x58] sm:$0xff]
        %v1254 = vld [vmem:[%s1241 + $0x60] sm:$0xff]
        %v1255 = vld [vmem:[%s1241 + $0x68] sm:$0xff]
        %v1256 = vld [vmem:[%s1241 + $0x70] sm:$0xff]
        %v1257 = vld [vmem:[%s1241 + $0x78] sm:$0xff]
        %v1258 = vld [vmem:[%s1241 + $0x80] sm:$0xff]
        %v1259 = vld [vmem:[%s1241 + $0x88] sm:$0xff]
        %v1260 = vld [vmem:[%s1241 + $0x90] sm:$0xff]
        %v1261 = vld [vmem:[%s1241 + $0x98] sm:$0xff]
        %v1262 = vld [vmem:[%s1241 + $0xa0] sm:$0xff]
        %v1263 = vld [vmem:[%s1241 + $0xa8] sm:$0xff]
        %v1264 = vld [vmem:[%s1241 + $0xb0] sm:$0xff]
        %v1265 = vld [vmem:[%s1241 + $0xb8] sm:$0xff]
        %v1266 = vld [vmem:[%s1241 + $0xc0] sm:$0xff]
        %v1267 = vld [vmem:[%s1241 + $0xc8] sm:$0xff]
        %v1268 = vld [vmem:[%s1241 + $0xd0] sm:$0xff]
        %v1269 = vld [vmem:[%s1241 + $0xd8] sm:$0xff]
        %v1270 = vld [vmem:[%s1241 + $0xe0] sm:$0xff]
        %v1271 = vld [vmem:[%s1241 + $0xe8] sm:$0xff]
        %v1272 = vld [vmem:[%s1241 + $0xf0] sm:$0xff]
        %v1273 = vld [vmem:[%s1241 + $0xf8] sm:$0xff]
        %v1274 = vld [vmem:[%s1241 + $0x100] sm:$0xff]
        %v1275 = vld [vmem:[%s1241 + $0x108] sm:$0xff]
        %v1276 = vld [vmem:[%s1241 + $0x110] sm:$0xff]
        %v1277 = vld [vmem:[%s1241 + $0x118] sm:$0xff]
        %v1278 = vld [vmem:[%s1241 + $0x120] sm:$0xff]
        %v1279 = vld [vmem:[%s1241 + $0x128] sm:$0xff]
        %v1280 = vld [vmem:[%s1241 + $0x130] sm:$0xff]
        %v1281 = vld [vmem:[%s1241 + $0x138] sm:$0xff]
        %v1282 = vld [vmem:[%s1241 + $0x140] sm:$0xff]
        %v1283 = vld [vmem:[%s1241 + $0x148] sm:$0xff]
        %v1284 = vld [vmem:[%s1241 + $0x150] sm:$0xff]
        %v1285 = vld [vmem:[%s1241 + $0x158] sm:$0xff]
        %v1286 = vld [vmem:[%s1241 + $0x160] sm:$0xff]
        %v1287 = vld [vmem:[%s1241 + $0x168] sm:$0xff]
        %v1288 = vld [vmem:[%s1241 + $0x170] sm:$0xff]
        %v1289 = vld [vmem:[%s1241 + $0x178] sm:$0xff]
        %v1290 = vld [vmem:[%s1241 + $0x180] sm:$0xff]
        %v1291 = vld [vmem:[%s1241 + $0x188] sm:$0xff]
        %v1292 = vld [vmem:[%s1241 + $0x190] sm:$0xff]
        %s1293 = scalar_lea.vmem %s1, 16
        %v1294 = vld [vmem:[%s1293] sm:$0xff]
        %v1296 = vsel %vm293, %v1242, 0
        %v1299 = vsel %vm293, %v1243, 0
        %v1302 = vsel %vm293, %v1244, 0
        %v1305 = vsel %vm293, %v1245, 0
        %v1308 = vsel %vm293, %v1246, 0
        %v1311 = vsel %vm293, %v1247, 0
        %v1314 = vsel %vm293, %v1248, 0
        %v1317 = vsel %vm293, %v1249, 0
        %v1320 = vsel %vm293, %v1250, 0
        %v1323 = vsel %vm293, %v1251, 0
        %v1326 = vsel %vm293, %v1252, 0
        %v1329 = vsel %vm293, %v1253, 0
        %v1332 = vsel %vm293, %v1254, 0
        %v1335 = vsel %vm293, %v1255, 0
        %v1338 = vsel %vm293, %v1256, 0
        %v1341 = vsel %vm293, %v1257, 0
        %v1344 = vsel %vm293, %v1258, 0
        %v1347 = vsel %vm293, %v1259, 0
        %v1350 = vsel %vm293, %v1260, 0
        %v1353 = vsel %vm293, %v1261, 0
        %v1356 = vsel %vm293, %v1262, 0
        %v1359 = vsel %vm293, %v1263, 0
        %v1362 = vsel %vm293, %v1264, 0
        %v1365 = vsel %vm293, %v1265, 0
        %v1368 = vsel %vm293, %v1266, 0
        %v1371 = vsel %vm293, %v1267, 0
        %v1374 = vsel %vm293, %v1268, 0
        %v1377 = vsel %vm293, %v1269, 0
        %v1380 = vsel %vm293, %v1270, 0
        %v1383 = vsel %vm293, %v1271, 0
        %v1386 = vsel %vm293, %v1272, 0
        %v1389 = vsel %vm293, %v1273, 0
        %v1392 = vsel %vm293, %v1274, 0
        %v1395 = vsel %vm293, %v1275, 0
        %v1398 = vsel %vm293, %v1276, 0
        %v1401 = vsel %vm293, %v1277, 0
        %v1404 = vsel %vm293, %v1278, 0
        %v1407 = vsel %vm293, %v1279, 0
        %v1410 = vsel %vm293, %v1280, 0
        %v1413 = vsel %vm293, %v1281, 0
        %v1416 = vsel %vm293, %v1282, 0
        %v1419 = vsel %vm293, %v1283, 0
        %v1422 = vsel %vm293, %v1284, 0
        %v1425 = vsel %vm293, %v1285, 0
        %v1428 = vsel %vm293, %v1286, 0
        %v1431 = vsel %vm293, %v1287, 0
        %v1434 = vsel %vm293, %v1288, 0
        %v1437 = vsel %vm293, %v1289, 0
        %v1440 = vsel %vm293, %v1290, 0
        %v1443 = vsel %vm293, %v1291, 0
        %v1446 = vsel %vm293, %v1292, 0
        %1448 = vmatprep.subr.mxu0 0.0
        %1449 = vmatpush1.msra.mxu0 %v1294
        %1450 = vmatprep.subr.mxu0 0.0
        %1451 = vmatpush1.msra.mxu0 0.0
        %1452 = vmatprep.subr.mxu0 0.0
        %1453 = vmatpush1.msra.mxu0 0.0
        %1454 = vmatprep.subr.mxu0 0.0
        %1455 = vmatpush1.msra.mxu0 0.0
        %1456 = vmatprep.subr.mxu0 0.0
        %1457 = vmatpush1.msra.mxu0 0.0
        %1458 = vmatprep.subr.mxu0 0.0
        %1459 = vmatpush1.msra.mxu0 0.0
        %1460 = vmatprep.subr.mxu0 0.0
        %1461 = vmatpush1.msra.mxu0 0.0
        %1462 = vmatprep.subr.mxu0 0.0
        %1463 = vmatpush1.msra.mxu0 0.0
        %1464 = vmatprep.subr.mxu0 0.0
        %1465 = vmatpush1.msra.mxu0 0.0
        %1466 = vmatprep.subr.mxu0 0.0
        %1467 = vmatpush1.msra.mxu0 0.0
        %1468 = vmatprep.subr.mxu0 0.0
        %1469 = vmatpush1.msra.mxu0 0.0
        %1470 = vmatprep.subr.mxu0 0.0
        %1471 = vmatpush1.msra.mxu0 0.0
        %1472 = vmatprep.subr.mxu0 0.0
        %1473 = vmatpush1.msra.mxu0 0.0
        %1474 = vmatprep.subr.mxu0 0.0
        %1475 = vmatpush1.msra.mxu0 0.0
        %1476 = vmatprep.subr.mxu0 0.0
        %1477 = vmatpush1.msra.mxu0 0.0
        %1478 = vmatprep.subr.mxu0 0.0
        %1479 = vmatpush1.msra.mxu0 0.0
        %1480 = vmatprep.subr.mxu0 0.0
        %1481 = vmatpush1.msra.mxu0 0.0
        %1482 = vmatprep.subr.mxu0 0.0
        %1483 = vmatpush1.msra.mxu0 0.0
        %1484 = vmatprep.subr.mxu0 0.0
        %1485 = vmatpush1.msra.mxu0 0.0
        %1486 = vmatprep.subr.mxu0 0.0
        %1487 = vmatpush1.msra.mxu0 0.0
        %1488 = vmatprep.subr.mxu0 0.0
        %1489 = vmatpush1.msra.mxu0 0.0
        %1490 = vmatprep.subr.mxu0 0.0
        %1491 = vmatpush1.msra.mxu0 0.0
        %1492 = vmatprep.subr.mxu0 0.0
        %1493 = vmatpush1.msra.mxu0 0.0
        %1494 = vmatprep.subr.mxu0 0.0
        %1495 = vmatpush1.msra.mxu0 0.0
        %1496 = vmatprep.subr.mxu0 0.0
        %1497 = vmatpush1.msra.mxu0 0.0
        %1498 = vmatprep.subr.mxu0 0.0
        %1499 = vmatpush1.msra.mxu0 0.0
        %1500 = vmatprep.subr.mxu0 0.0
        %1501 = vmatpush1.msra.mxu0 0.0
        %1502 = vmatprep.subr.mxu0 0.0
        %1503 = vmatpush1.msra.mxu0 0.0
        %1504 = vmatprep.subr.mxu0 0.0
        %1505 = vmatpush1.msra.mxu0 0.0
        %1506 = vmatprep.subr.mxu0 0.0
        %1507 = vmatpush1.msra.mxu0 0.0
        %1508 = vmatprep.subr.mxu0 0.0
        %1509 = vmatpush1.msra.mxu0 0.0
        %1510 = vmatprep.subr.mxu0 0.0
        %1511 = vmatpush1.msra.mxu0 0.0
        %1512 = vmatprep.mubr.f32.mxu0 0.0
        %1513 = vmatmul.mubr.f32.gmra.mrb[0].mxu0 %v1296
        %v1514 = vpop.f32.mrb[0].mxu0
        %v1515 = vadd.f32 0.0, %v1514
        %v1516 = vpop.f32.mrb[0].mxu0
        %1517 = vmatprep.mubr.f32.mxu0 0.0
        %1518 = vmatmul.mubr.f32.gmra.mrb[0].mxu0 %v1299
        %v1519 = vpop.f32.mrb[0].mxu0
        %v1520 = vadd.f32 0.0, %v1519
        %v1521 = vpop.f32.mrb[0].mxu0
        %1522 = vmatprep.mubr.f32.mxu0 0.0
        %1523 = vmatmul.mubr.f32.gmra.mrb[0].mxu0 %v1302
        %v1524 = vpop.f32.mrb[0].mxu0
        %v1525 = vadd.f32 0.0, %v1524
        %v1526 = vpop.f32.mrb[0].mxu0
        %1527 = vmatprep.mubr.f32.mxu0 0.0
        %1528 = vmatmul.mubr.f32.gmra.mrb[0].mxu0 %v1305
        %v1529 = vpop.f32.mrb[0].mxu0
        %v1530 = vadd.f32 0.0, %v1529
        %v1531 = vpop.f32.mrb[0].mxu0
        %1532 = vmatprep.mubr.f32.mxu0 0.0
        %1533 = vmatmul.mubr.f32.gmra.mrb[0].mxu0 %v1308
        %v1534 = vpop.f32.mrb[0].mxu0
        %v1535 = vadd.f32 0.0, %v1534
        %v1536 = vpop.f32.mrb[0].mxu0
        %1537 = vmatprep.mubr.f32.mxu0 0.0
        %1538 = vmatmul.mubr.f32.gmra.mrb[0].mxu0 %v1311
        %v1539 = vpop.f32.mrb[0].mxu0
        %v1540 = vadd.f32 0.0, %v1539
        %v1541 = vpop.f32.mrb[0].mxu0
        %1542 = vmatprep.mubr.f32.mxu0 0.0
        %1543 = vmatmul.mubr.f32.gmra.mrb[0].mxu0 %v1314
        %v1544 = vpop.f32.mrb[0].mxu0
        %v1545 = vadd.f32 0.0, %v1544
        %v1546 = vpop.f32.mrb[0].mxu0
        %1547 = vmatprep.mubr.f32.mxu0 0.0
        %1548 = vmatmul.mubr.f32.gmra.mrb[0].mxu0 %v1317
        %v1549 = vpop.f32.mrb[0].mxu0
        %v1550 = vadd.f32 0.0, %v1549
        %v1551 = vpop.f32.mrb[0].mxu0
        %1552 = vmatprep.mubr.f32.mxu0 0.0
        %1553 = vmatmul.mubr.f32.gmra.mrb[0].mxu0 %v1320
        %v1554 = vpop.f32.mrb[0].mxu0
        %v1555 = vadd.f32 0.0, %v1554
        %v1556 = vpop.f32.mrb[0].mxu0
        %1557 = vmatprep.mubr.f32.mxu0 0.0
        %1558 = vmatmul.mubr.f32.gmra.mrb[0].mxu0 %v1323
        %v1559 = vpop.f32.mrb[0].mxu0
        %v1560 = vadd.f32 0.0, %v1559
        %v1561 = vpop.f32.mrb[0].mxu0
        %1562 = vmatprep.mubr.f32.mxu0 0.0
        %1563 = vmatmul.mubr.f32.gmra.mrb[0].mxu0 %v1326
        %v1564 = vpop.f32.mrb[0].mxu0
        %v1565 = vadd.f32 0.0, %v1564
        %v1566 = vpop.f32.mrb[0].mxu0
        %1567 = vmatprep.mubr.f32.mxu0 0.0
        %1568 = vmatmul.mubr.f32.gmra.mrb[0].mxu0 %v1329
        %v1569 = vpop.f32.mrb[0].mxu0
        %v1570 = vadd.f32 0.0, %v1569
        %v1571 = vpop.f32.mrb[0].mxu0
        %1572 = vmatprep.mubr.f32.mxu0 0.0
        %1573 = vmatmul.mubr.f32.gmra.mrb[0].mxu0 %v1332
        %v1574 = vpop.f32.mrb[0].mxu0
        %v1575 = vadd.f32 0.0, %v1574
        %v1576 = vpop.f32.mrb[0].mxu0
        %1577 = vmatprep.mubr.f32.mxu0 0.0
        %1578 = vmatmul.mubr.f32.gmra.mrb[0].mxu0 %v1335
        %v1579 = vpop.f32.mrb[0].mxu0
        %v1580 = vadd.f32 0.0, %v1579
        %v1581 = vpop.f32.mrb[0].mxu0
        %1582 = vmatprep.mubr.f32.mxu0 0.0
        %1583 = vmatmul.mubr.f32.gmra.mrb[0].mxu0 %v1338
        %v1584 = vpop.f32.mrb[0].mxu0
        %v1585 = vadd.f32 0.0, %v1584
        %v1586 = vpop.f32.mrb[0].mxu0
        %1587 = vmatprep.mubr.f32.mxu0 0.0
        %1588 = vmatmul.mubr.f32.gmra.mrb[0].mxu0 %v1341
        %v1589 = vpop.f32.mrb[0].mxu0
        %v1590 = vadd.f32 0.0, %v1589
        %v1591 = vpop.f32.mrb[0].mxu0
        %1592 = vmatprep.mubr.f32.mxu0 0.0
        %1593 = vmatmul.mubr.f32.gmra.mrb[0].mxu0 %v1344
        %v1594 = vpop.f32.mrb[0].mxu0
        %v1595 = vadd.f32 0.0, %v1594
        %v1596 = vpop.f32.mrb[0].mxu0
        %1597 = vmatprep.mubr.f32.mxu0 0.0
        %1598 = vmatmul.mubr.f32.gmra.mrb[0].mxu0 %v1347
        %v1599 = vpop.f32.mrb[0].mxu0
        %v1600 = vadd.f32 0.0, %v1599
        %v1601 = vpop.f32.mrb[0].mxu0
        %1602 = vmatprep.mubr.f32.mxu0 0.0
        %1603 = vmatmul.mubr.f32.gmra.mrb[0].mxu0 %v1350
        %v1604 = vpop.f32.mrb[0].mxu0
        %v1605 = vadd.f32 0.0, %v1604
        %v1606 = vpop.f32.mrb[0].mxu0
        %1607 = vmatprep.mubr.f32.mxu0 0.0
        %1608 = vmatmul.mubr.f32.gmra.mrb[0].mxu0 %v1353
        %v1609 = vpop.f32.mrb[0].mxu0
        %v1610 = vadd.f32 0.0, %v1609
        %v1611 = vpop.f32.mrb[0].mxu0
        %1612 = vmatprep.mubr.f32.mxu0 0.0
        %1613 = vmatmul.mubr.f32.gmra.mrb[0].mxu0 %v1356
        %v1614 = vpop.f32.mrb[0].mxu0
        %v1615 = vadd.f32 0.0, %v1614
        %v1616 = vpop.f32.mrb[0].mxu0
        %1617 = vmatprep.mubr.f32.mxu0 0.0
        %1618 = vmatmul.mubr.f32.gmra.mrb[0].mxu0 %v1359
        %v1619 = vpop.f32.mrb[0].mxu0
        %v1620 = vadd.f32 0.0, %v1619
        %v1621 = vpop.f32.mrb[0].mxu0
        %1622 = vmatprep.mubr.f32.mxu0 0.0
        %1623 = vmatmul.mubr.f32.gmra.mrb[0].mxu0 %v1362
        %v1624 = vpop.f32.mrb[0].mxu0
        %v1625 = vadd.f32 0.0, %v1624
        %v1626 = vpop.f32.mrb[0].mxu0
        %1627 = vmatprep.mubr.f32.mxu0 0.0
        %1628 = vmatmul.mubr.f32.gmra.mrb[0].mxu0 %v1365
        %v1629 = vpop.f32.mrb[0].mxu0
        %v1630 = vadd.f32 0.0, %v1629
        %v1631 = vpop.f32.mrb[0].mxu0
        %1632 = vmatprep.mubr.f32.mxu0 0.0
        %1633 = vmatmul.mubr.f32.gmra.mrb[0].mxu0 %v1368
        %v1634 = vpop.f32.mrb[0].mxu0
        %v1635 = vadd.f32 0.0, %v1634
        %v1636 = vpop.f32.mrb[0].mxu0
        %1637 = vmatprep.mubr.f32.mxu0 0.0
        %1638 = vmatmul.mubr.f32.gmra.mrb[0].mxu0 %v1371
        %v1639 = vpop.f32.mrb[0].mxu0
        %v1640 = vadd.f32 0.0, %v1639
        %v1641 = vpop.f32.mrb[0].mxu0
        %1642 = vmatprep.mubr.f32.mxu0 0.0
        %1643 = vmatmul.mubr.f32.gmra.mrb[0].mxu0 %v1374
        %v1644 = vpop.f32.mrb[0].mxu0
        %v1645 = vadd.f32 0.0, %v1644
        %v1646 = vpop.f32.mrb[0].mxu0
        %1647 = vmatprep.mubr.f32.mxu0 0.0
        %1648 = vmatmul.mubr.f32.gmra.mrb[0].mxu0 %v1377
        %v1649 = vpop.f32.mrb[0].mxu0
        %v1650 = vadd.f32 0.0, %v1649
        %v1651 = vpop.f32.mrb[0].mxu0
        %1652 = vmatprep.mubr.f32.mxu0 0.0
        %1653 = vmatmul.mubr.f32.gmra.mrb[0].mxu0 %v1380
        %v1654 = vpop.f32.mrb[0].mxu0
        %v1655 = vadd.f32 0.0, %v1654
        %v1656 = vpop.f32.mrb[0].mxu0
        %1657 = vmatprep.mubr.f32.mxu0 0.0
        %1658 = vmatmul.mubr.f32.gmra.mrb[0].mxu0 %v1383
        %v1659 = vpop.f32.mrb[0].mxu0
        %v1660 = vadd.f32 0.0, %v1659
        %v1661 = vpop.f32.mrb[0].mxu0
        %1662 = vmatprep.mubr.f32.mxu0 0.0
        %1663 = vmatmul.mubr.f32.gmra.mrb[0].mxu0 %v1386
        %v1664 = vpop.f32.mrb[0].mxu0
        %v1665 = vadd.f32 0.0, %v1664
        %v1666 = vpop.f32.mrb[0].mxu0
        %1667 = vmatprep.mubr.f32.mxu0 0.0
        %1668 = vmatmul.mubr.f32.gmra.mrb[0].mxu0 %v1389
        %v1669 = vpop.f32.mrb[0].mxu0
        %v1670 = vadd.f32 0.0, %v1669
        %v1671 = vpop.f32.mrb[0].mxu0
        %1672 = vmatprep.mubr.f32.mxu0 0.0
        %1673 = vmatmul.mubr.f32.gmra.mrb[0].mxu0 %v1392
        %v1674 = vpop.f32.mrb[0].mxu0
        %v1675 = vadd.f32 0.0, %v1674
        %v1676 = vpop.f32.mrb[0].mxu0
        %1677 = vmatprep.mubr.f32.mxu0 0.0
        %1678 = vmatmul.mubr.f32.gmra.mrb[0].mxu0 %v1395
        %v1679 = vpop.f32.mrb[0].mxu0
        %v1680 = vadd.f32 0.0, %v1679
        %v1681 = vpop.f32.mrb[0].mxu0
        %1682 = vmatprep.mubr.f32.mxu0 0.0
        %1683 = vmatmul.mubr.f32.gmra.mrb[0].mxu0 %v1398
        %v1684 = vpop.f32.mrb[0].mxu0
        %v1685 = vadd.f32 0.0, %v1684
        %v1686 = vpop.f32.mrb[0].mxu0
        %1687 = vmatprep.mubr.f32.mxu0 0.0
        %1688 = vmatmul.mubr.f32.gmra.mrb[0].mxu0 %v1401
        %v1689 = vpop.f32.mrb[0].mxu0
        %v1690 = vadd.f32 0.0, %v1689
        %v1691 = vpop.f32.mrb[0].mxu0
        %1692 = vmatprep.mubr.f32.mxu0 0.0
        %1693 = vmatmul.mubr.f32.gmra.mrb[0].mxu0 %v1404
        %v1694 = vpop.f32.mrb[0].mxu0
        %v1695 = vadd.f32 0.0, %v1694
        %v1696 = vpop.f32.mrb[0].mxu0
        %1697 = vmatprep.mubr.f32.mxu0 0.0
        %1698 = vmatmul.mubr.f32.gmra.mrb[0].mxu0 %v1407
        %v1699 = vpop.f32.mrb[0].mxu0
        %v1700 = vadd.f32 0.0, %v1699
        %v1701 = vpop.f32.mrb[0].mxu0
        %1702 = vmatprep.mubr.f32.mxu0 0.0
        %1703 = vmatmul.mubr.f32.gmra.mrb[0].mxu0 %v1410
        %v1704 = vpop.f32.mrb[0].mxu0
        %v1705 = vadd.f32 0.0, %v1704
        %v1706 = vpop.f32.mrb[0].mxu0
        %1707 = vmatprep.mubr.f32.mxu0 0.0
        %1708 = vmatmul.mubr.f32.gmra.mrb[0].mxu0 %v1413
        %v1709 = vpop.f32.mrb[0].mxu0
        %v1710 = vadd.f32 0.0, %v1709
        %v1711 = vpop.f32.mrb[0].mxu0
        %1712 = vmatprep.mubr.f32.mxu0 0.0
        %1713 = vmatmul.mubr.f32.gmra.mrb[0].mxu0 %v1416
        %v1714 = vpop.f32.mrb[0].mxu0
        %v1715 = vadd.f32 0.0, %v1714
        %v1716 = vpop.f32.mrb[0].mxu0
        %1717 = vmatprep.mubr.f32.mxu0 0.0
        %1718 = vmatmul.mubr.f32.gmra.mrb[0].mxu0 %v1419
        %v1719 = vpop.f32.mrb[0].mxu0
        %v1720 = vadd.f32 0.0, %v1719
        %v1721 = vpop.f32.mrb[0].mxu0
        %1722 = vmatprep.mubr.f32.mxu0 0.0
        %1723 = vmatmul.mubr.f32.gmra.mrb[0].mxu0 %v1422
        %v1724 = vpop.f32.mrb[0].mxu0
        %v1725 = vadd.f32 0.0, %v1724
        %v1726 = vpop.f32.mrb[0].mxu0
        %1727 = vmatprep.mubr.f32.mxu0 0.0
        %1728 = vmatmul.mubr.f32.gmra.mrb[0].mxu0 %v1425
        %v1729 = vpop.f32.mrb[0].mxu0
        %v1730 = vadd.f32 0.0, %v1729
        %v1731 = vpop.f32.mrb[0].mxu0
        %1732 = vmatprep.mubr.f32.mxu0 0.0
        %1733 = vmatmul.mubr.f32.gmra.mrb[0].mxu0 %v1428
        %v1734 = vpop.f32.mrb[0].mxu0
        %v1735 = vadd.f32 0.0, %v1734
        %v1736 = vpop.f32.mrb[0].mxu0
        %1737 = vmatprep.mubr.f32.mxu0 0.0
        %1738 = vmatmul.mubr.f32.gmra.mrb[0].mxu0 %v1431
        %v1739 = vpop.f32.mrb[0].mxu0
        %v1740 = vadd.f32 0.0, %v1739
        %v1741 = vpop.f32.mrb[0].mxu0
        %1742 = vmatprep.mubr.f32.mxu0 0.0
        %1743 = vmatmul.mubr.f32.gmra.mrb[0].mxu0 %v1434
        %v1744 = vpop.f32.mrb[0].mxu0
        %v1745 = vadd.f32 0.0, %v1744
        %v1746 = vpop.f32.mrb[0].mxu0
        %1747 = vmatprep.mubr.f32.mxu0 0.0
        %1748 = vmatmul.mubr.f32.gmra.mrb[0].mxu0 %v1437
        %v1749 = vpop.f32.mrb[0].mxu0
        %v1750 = vadd.f32 0.0, %v1749
        %v1751 = vpop.f32.mrb[0].mxu0
        %1752 = vmatprep.mubr.f32.mxu0 0.0
        %1753 = vmatmul.mubr.f32.gmra.mrb[0].mxu0 %v1440
        %v1754 = vpop.f32.mrb[0].mxu0
        %v1755 = vadd.f32 0.0, %v1754
        %v1756 = vpop.f32.mrb[0].mxu0
        %1757 = vmatprep.mubr.f32.mxu0 0.0
        %1758 = vmatmul.mubr.f32.gmra.mrb[0].mxu0 %v1443
        %v1759 = vpop.f32.mrb[0].mxu0
        %v1760 = vadd.f32 0.0, %v1759
        %v1761 = vpop.f32.mrb[0].mxu0
        %1762 = vmatprep.mubr.f32.mxu0 0.0
        %1763 = vmatmul.mubr.f32.gmra.mrb[0].mxu0 %v1446
        %v1764 = vpop.f32.mrb[0].mxu0
        %v1765 = vadd.f32 0.0, %v1764
        %v1766 = vpop.f32.mrb[0].mxu0
        %1767 = vdwg.mxu0
        %v1768 = vadd.f32 %v987, %v1515
        %v1769 = vadd.f32 %v992, %v1520
        %v1770 = vadd.f32 %v997, %v1525
        %v1771 = vadd.f32 %v1002, %v1530
        %v1772 = vadd.f32 %v1007, %v1535
        %v1773 = vadd.f32 %v1012, %v1540
        %v1774 = vadd.f32 %v1017, %v1545
        %v1775 = vadd.f32 %v1022, %v1550
        %v1776 = vadd.f32 %v1027, %v1555
        %v1777 = vadd.f32 %v1032, %v1560
        %v1778 = vadd.f32 %v1037, %v1565
        %v1779 = vadd.f32 %v1042, %v1570
        %v1780 = vadd.f32 %v1047, %v1575
        %v1781 = vadd.f32 %v1052, %v1580
        %v1782 = vadd.f32 %v1057, %v1585
        %v1783 = vadd.f32 %v1062, %v1590
        %v1784 = vadd.f32 %v1067, %v1595
        %v1785 = vadd.f32 %v1072, %v1600
        %v1786 = vadd.f32 %v1077, %v1605
        %v1787 = vadd.f32 %v1082, %v1610
        %v1788 = vadd.f32 %v1087, %v1615
        %v1789 = vadd.f32 %v1092, %v1620
        %v1790 = vadd.f32 %v1097, %v1625
        %v1791 = vadd.f32 %v1102, %v1630
        %v1792 = vadd.f32 %v1107, %v1635
        %v1793 = vadd.f32 %v1112, %v1640
        %v1794 = vadd.f32 %v1117, %v1645
        %v1795 = vadd.f32 %v1122, %v1650
        %v1796 = vadd.f32 %v1127, %v1655
        %v1797 = vadd.f32 %v1132, %v1660
        %v1798 = vadd.f32 %v1137, %v1665
        %v1799 = vadd.f32 %v1142, %v1670
        %v1800 = vadd.f32 %v1147, %v1675
        %v1801 = vadd.f32 %v1152, %v1680
        %v1802 = vadd.f32 %v1157, %v1685
        %v1803 = vadd.f32 %v1162, %v1690
        %v1804 = vadd.f32 %v1167, %v1695
        %v1805 = vadd.f32 %v1172, %v1700
        %v1806 = vadd.f32 %v1177, %v1705
        %v1807 = vadd.f32 %v1182, %v1710
        %v1808 = vadd.f32 %v1187, %v1715
        %v1809 = vadd.f32 %v1192, %v1720
        %v1810 = vadd.f32 %v1197, %v1725
        %v1811 = vadd.f32 %v1202, %v1730
        %v1812 = vadd.f32 %v1207, %v1735
        %v1813 = vadd.f32 %v1212, %v1740
        %v1814 = vadd.f32 %v1217, %v1745
        %v1815 = vadd.f32 %v1222, %v1750
        %v1816 = vadd.f32 %v1227, %v1755
        %v1817 = vadd.f32 %v1232, %v1760
        %v1818 = vadd.f32 %v1237, %v1765
        %s1819 = sadd.s32 %s1240, 1
        %s1820 = scalar_lea.vmem %s182, %s1819
        %v1821 = vld [vmem:[%s1820] sm:$0xff]
        %v1822 = vld [vmem:[%s1820 + $0x8] sm:$0xff]
        %v1823 = vld [vmem:[%s1820 + $0x10] sm:$0xff]
        %v1824 = vld [vmem:[%s1820 + $0x18] sm:$0xff]
        %v1825 = vld [vmem:[%s1820 + $0x20] sm:$0xff]
        %v1826 = vld [vmem:[%s1820 + $0x28] sm:$0xff]
        %v1827 = vld [vmem:[%s1820 + $0x30] sm:$0xff]
        %v1828 = vld [vmem:[%s1820 + $0x38] sm:$0xff]
        %v1829 = vld [vmem:[%s1820 + $0x40] sm:$0xff]
        %v1830 = vld [vmem:[%s1820 + $0x48] sm:$0xff]
        %v1831 = vld [vmem:[%s1820 + $0x50] sm:$0xff]
        %v1832 = vld [vmem:[%s1820 + $0x58] sm:$0xff]
        %v1833 = vld [vmem:[%s1820 + $0x60] sm:$0xff]
        %v1834 = vld [vmem:[%s1820 + $0x68] sm:$0xff]
        %v1835 = vld [vmem:[%s1820 + $0x70] sm:$0xff]
        %v1836 = vld [vmem:[%s1820 + $0x78] sm:$0xff]
        %v1837 = vld [vmem:[%s1820 + $0x80] sm:$0xff]
        %v1838 = vld [vmem:[%s1820 + $0x88] sm:$0xff]
        %v1839 = vld [vmem:[%s1820 + $0x90] sm:$0xff]
        %v1840 = vld [vmem:[%s1820 + $0x98] sm:$0xff]
        %v1841 = vld [vmem:[%s1820 + $0xa0] sm:$0xff]
        %v1842 = vld [vmem:[%s1820 + $0xa8] sm:$0xff]
        %v1843 = vld [vmem:[%s1820 + $0xb0] sm:$0xff]
        %v1844 = vld [vmem:[%s1820 + $0xb8] sm:$0xff]
        %v1845 = vld [vmem:[%s1820 + $0xc0] sm:$0xff]
        %v1846 = vld [vmem:[%s1820 + $0xc8] sm:$0xff]
        %v1847 = vld [vmem:[%s1820 + $0xd0] sm:$0xff]
        %v1848 = vld [vmem:[%s1820 + $0xd8] sm:$0xff]
        %v1849 = vld [vmem:[%s1820 + $0xe0] sm:$0xff]
        %v1850 = vld [vmem:[%s1820 + $0xe8] sm:$0xff]
        %v1851 = vld [vmem:[%s1820 + $0xf0] sm:$0xff]
        %v1852 = vld [vmem:[%s1820 + $0xf8] sm:$0xff]
        %v1853 = vld [vmem:[%s1820 + $0x100] sm:$0xff]
        %v1854 = vld [vmem:[%s1820 + $0x108] sm:$0xff]
        %v1855 = vld [vmem:[%s1820 + $0x110] sm:$0xff]
        %v1856 = vld [vmem:[%s1820 + $0x118] sm:$0xff]
        %v1857 = vld [vmem:[%s1820 + $0x120] sm:$0xff]
        %v1858 = vld [vmem:[%s1820 + $0x128] sm:$0xff]
        %v1859 = vld [vmem:[%s1820 + $0x130] sm:$0xff]
        %v1860 = vld [vmem:[%s1820 + $0x138] sm:$0xff]
        %v1861 = vld [vmem:[%s1820 + $0x140] sm:$0xff]
        %v1862 = vld [vmem:[%s1820 + $0x148] sm:$0xff]
        %v1863 = vld [vmem:[%s1820 + $0x150] sm:$0xff]
        %v1864 = vld [vmem:[%s1820 + $0x158] sm:$0xff]
        %v1865 = vld [vmem:[%s1820 + $0x160] sm:$0xff]
        %v1866 = vld [vmem:[%s1820 + $0x168] sm:$0xff]
        %v1867 = vld [vmem:[%s1820 + $0x170] sm:$0xff]
        %v1868 = vld [vmem:[%s1820 + $0x178] sm:$0xff]
        %v1869 = vld [vmem:[%s1820 + $0x180] sm:$0xff]
        %v1870 = vld [vmem:[%s1820 + $0x188] sm:$0xff]
        %v1871 = vld [vmem:[%s1820 + $0x190] sm:$0xff]
        %s1872 = scalar_lea.vmem %s1, 24
        %v1873 = vld [vmem:[%s1872] sm:$0xff]
        %v1875 = vsel %vm293, %v1821, 0
        %v1878 = vsel %vm293, %v1822, 0
        %v1881 = vsel %vm293, %v1823, 0
        %v1884 = vsel %vm293, %v1824, 0
        %v1887 = vsel %vm293, %v1825, 0
        %v1890 = vsel %vm293, %v1826, 0
        %v1893 = vsel %vm293, %v1827, 0
        %v1896 = vsel %vm293, %v1828, 0
        %v1899 = vsel %vm293, %v1829, 0
        %v1902 = vsel %vm293, %v1830, 0
        %v1905 = vsel %vm293, %v1831, 0
        %v1908 = vsel %vm293, %v1832, 0
        %v1911 = vsel %vm293, %v1833, 0
        %v1914 = vsel %vm293, %v1834, 0
        %v1917 = vsel %vm293, %v1835, 0
        %v1920 = vsel %vm293, %v1836, 0
        %v1923 = vsel %vm293, %v1837, 0
        %v1926 = vsel %vm293, %v1838, 0
        %v1929 = vsel %vm293, %v1839, 0
        %v1932 = vsel %vm293, %v1840, 0
        %v1935 = vsel %vm293, %v1841, 0
        %v1938 = vsel %vm293, %v1842, 0
        %v1941 = vsel %vm293, %v1843, 0
        %v1944 = vsel %vm293, %v1844, 0
        %v1947 = vsel %vm293, %v1845, 0
        %v1950 = vsel %vm293, %v1846, 0
        %v1953 = vsel %vm293, %v1847, 0
        %v1956 = vsel %vm293, %v1848, 0
        %v1959 = vsel %vm293, %v1849, 0
        %v1962 = vsel %vm293, %v1850, 0
        %v1965 = vsel %vm293, %v1851, 0
        %v1968 = vsel %vm293, %v1852, 0
        %v1971 = vsel %vm293, %v1853, 0
        %v1974 = vsel %vm293, %v1854, 0
        %v1977 = vsel %vm293, %v1855, 0
        %v1980 = vsel %vm293, %v1856, 0
        %v1983 = vsel %vm293, %v1857, 0
        %v1986 = vsel %vm293, %v1858, 0
        %v1989 = vsel %vm293, %v1859, 0
        %v1992 = vsel %vm293, %v1860, 0
        %v1995 = vsel %vm293, %v1861, 0
        %v1998 = vsel %vm293, %v1862, 0
        %v2001 = vsel %vm293, %v1863, 0
        %v2004 = vsel %vm293, %v1864, 0
        %v2007 = vsel %vm293, %v1865, 0
        %v2010 = vsel %vm293, %v1866, 0
        %v2013 = vsel %vm293, %v1867, 0
        %v2016 = vsel %vm293, %v1868, 0
        %v2019 = vsel %vm293, %v1869, 0
        %v2022 = vsel %vm293, %v1870, 0
        %v2025 = vsel %vm293, %v1871, 0
        %2027 = vmatprep.subr.mxu0 0.0
        %2028 = vmatpush1.msra.mxu0 %v1873
        %2029 = vmatprep.subr.mxu0 0.0
        %2030 = vmatpush1.msra.mxu0 0.0
        %2031 = vmatprep.subr.mxu0 0.0
        %2032 = vmatpush1.msra.mxu0 0.0
        %2033 = vmatprep.subr.mxu0 0.0
        %2034 = vmatpush1.msra.mxu0 0.0
        %2035 = vmatprep.subr.mxu0 0.0
        %2036 = vmatpush1.msra.mxu0 0.0
        %2037 = vmatprep.subr.mxu0 0.0
        %2038 = vmatpush1.msra.mxu0 0.0
        %2039 = vmatprep.subr.mxu0 0.0
        %2040 = vmatpush1.msra.mxu0 0.0
        %2041 = vmatprep.subr.mxu0 0.0
        %2042 = vmatpush1.msra.mxu0 0.0
        %2043 = vmatprep.subr.mxu0 0.0
        %2044 = vmatpush1.msra.mxu0 0.0
        %2045 = vmatprep.subr.mxu0 0.0
        %2046 = vmatpush1.msra.mxu0 0.0
        %2047 = vmatprep.subr.mxu0 0.0
        %2048 = vmatpush1.msra.mxu0 0.0
        %2049 = vmatprep.subr.mxu0 0.0
        %2050 = vmatpush1.msra.mxu0 0.0
        %2051 = vmatprep.subr.mxu0 0.0
        %2052 = vmatpush1.msra.mxu0 0.0
        %2053 = vmatprep.subr.mxu0 0.0
        %2054 = vmatpush1.msra.mxu0 0.0
        %2055 = vmatprep.subr.mxu0 0.0
        %2056 = vmatpush1.msra.mxu0 0.0
        %2057 = vmatprep.subr.mxu0 0.0
        %2058 = vmatpush1.msra.mxu0 0.0
        %2059 = vmatprep.subr.mxu0 0.0
        %2060 = vmatpush1.msra.mxu0 0.0
        %2061 = vmatprep.subr.mxu0 0.0
        %2062 = vmatpush1.msra.mxu0 0.0
        %2063 = vmatprep.subr.mxu0 0.0
        %2064 = vmatpush1.msra.mxu0 0.0
        %2065 = vmatprep.subr.mxu0 0.0
        %2066 = vmatpush1.msra.mxu0 0.0
        %2067 = vmatprep.subr.mxu0 0.0
        %2068 = vmatpush1.msra.mxu0 0.0
        %2069 = vmatprep.subr.mxu0 0.0
        %2070 = vmatpush1.msra.mxu0 0.0
        %2071 = vmatprep.subr.mxu0 0.0
        %2072 = vmatpush1.msra.mxu0 0.0
        %2073 = vmatprep.subr.mxu0 0.0
        %2074 = vmatpush1.msra.mxu0 0.0
        %2075 = vmatprep.subr.mxu0 0.0
        %2076 = vmatpush1.msra.mxu0 0.0
        %2077 = vmatprep.subr.mxu0 0.0
        %2078 = vmatpush1.msra.mxu0 0.0
        %2079 = vmatprep.subr.mxu0 0.0
        %2080 = vmatpush1.msra.mxu0 0.0
        %2081 = vmatprep.subr.mxu0 0.0
        %2082 = vmatpush1.msra.mxu0 0.0
        %2083 = vmatprep.subr.mxu0 0.0
        %2084 = vmatpush1.msra.mxu0 0.0
        %2085 = vmatprep.subr.mxu0 0.0
        %2086 = vmatpush1.msra.mxu0 0.0
        %2087 = vmatprep.subr.mxu0 0.0
        %2088 = vmatpush1.msra.mxu0 0.0
        %2089 = vmatprep.subr.mxu0 0.0
        %2090 = vmatpush1.msra.mxu0 0.0
        %2091 = vmatprep.mubr.f32.mxu0 0.0
        %2092 = vmatmul.mubr.f32.gmra.mrb[0].mxu0 %v1875
        %v2093 = vpop.f32.mrb[0].mxu0
        %v2094 = vadd.f32 0.0, %v2093
        %v2095 = vpop.f32.mrb[0].mxu0
        %2096 = vmatprep.mubr.f32.mxu0 0.0
        %2097 = vmatmul.mubr.f32.gmra.mrb[0].mxu0 %v1878
        %v2098 = vpop.f32.mrb[0].mxu0
        %v2099 = vadd.f32 0.0, %v2098
        %v2100 = vpop.f32.mrb[0].mxu0
        %2101 = vmatprep.mubr.f32.mxu0 0.0
        %2102 = vmatmul.mubr.f32.gmra.mrb[0].mxu0 %v1881
        %v2103 = vpop.f32.mrb[0].mxu0
        %v2104 = vadd.f32 0.0, %v2103
        %v2105 = vpop.f32.mrb[0].mxu0
        %2106 = vmatprep.mubr.f32.mxu0 0.0
        %2107 = vmatmul.mubr.f32.gmra.mrb[0].mxu0 %v1884
        %v2108 = vpop.f32.mrb[0].mxu0
        %v2109 = vadd.f32 0.0, %v2108
        %v2110 = vpop.f32.mrb[0].mxu0
        %2111 = vmatprep.mubr.f32.mxu0 0.0
        %2112 = vmatmul.mubr.f32.gmra.mrb[0].mxu0 %v1887
        %v2113 = vpop.f32.mrb[0].mxu0
        %v2114 = vadd.f32 0.0, %v2113
        %v2115 = vpop.f32.mrb[0].mxu0
        %2116 = vmatprep.mubr.f32.mxu0 0.0
        %2117 = vmatmul.mubr.f32.gmra.mrb[0].mxu0 %v1890
        %v2118 = vpop.f32.mrb[0].mxu0
        %v2119 = vadd.f32 0.0, %v2118
        %v2120 = vpop.f32.mrb[0].mxu0
        %2121 = vmatprep.mubr.f32.mxu0 0.0
        %2122 = vmatmul.mubr.f32.gmra.mrb[0].mxu0 %v1893
        %v2123 = vpop.f32.mrb[0].mxu0
        %v2124 = vadd.f32 0.0, %v2123
        %v2125 = vpop.f32.mrb[0].mxu0
        %2126 = vmatprep.mubr.f32.mxu0 0.0
        %2127 = vmatmul.mubr.f32.gmra.mrb[0].mxu0 %v1896
        %v2128 = vpop.f32.mrb[0].mxu0
        %v2129 = vadd.f32 0.0, %v2128
        %v2130 = vpop.f32.mrb[0].mxu0
        %2131 = vmatprep.mubr.f32.mxu0 0.0
        %2132 = vmatmul.mubr.f32.gmra.mrb[0].mxu0 %v1899
        %v2133 = vpop.f32.mrb[0].mxu0
        %v2134 = vadd.f32 0.0, %v2133
        %v2135 = vpop.f32.mrb[0].mxu0
        %2136 = vmatprep.mubr.f32.mxu0 0.0
        %2137 = vmatmul.mubr.f32.gmra.mrb[0].mxu0 %v1902
        %v2138 = vpop.f32.mrb[0].mxu0
        %v2139 = vadd.f32 0.0, %v2138
        %v2140 = vpop.f32.mrb[0].mxu0
        %2141 = vmatprep.mubr.f32.mxu0 0.0
        %2142 = vmatmul.mubr.f32.gmra.mrb[0].mxu0 %v1905
        %v2143 = vpop.f32.mrb[0].mxu0
        %v2144 = vadd.f32 0.0, %v2143
        %v2145 = vpop.f32.mrb[0].mxu0
        %2146 = vmatprep.mubr.f32.mxu0 0.0
        %2147 = vmatmul.mubr.f32.gmra.mrb[0].mxu0 %v1908
        %v2148 = vpop.f32.mrb[0].mxu0
        %v2149 = vadd.f32 0.0, %v2148
        %v2150 = vpop.f32.mrb[0].mxu0
        %2151 = vmatprep.mubr.f32.mxu0 0.0
        %2152 = vmatmul.mubr.f32.gmra.mrb[0].mxu0 %v1911
        %v2153 = vpop.f32.mrb[0].mxu0
        %v2154 = vadd.f32 0.0, %v2153
        %v2155 = vpop.f32.mrb[0].mxu0
        %2156 = vmatprep.mubr.f32.mxu0 0.0
        %2157 = vmatmul.mubr.f32.gmra.mrb[0].mxu0 %v1914
        %v2158 = vpop.f32.mrb[0].mxu0
        %v2159 = vadd.f32 0.0, %v2158
        %v2160 = vpop.f32.mrb[0].mxu0
        %2161 = vmatprep.mubr.f32.mxu0 0.0
        %2162 = vmatmul.mubr.f32.gmra.mrb[0].mxu0 %v1917
        %v2163 = vpop.f32.mrb[0].mxu0
        %v2164 = vadd.f32 0.0, %v2163
        %v2165 = vpop.f32.mrb[0].mxu0
        %2166 = vmatprep.mubr.f32.mxu0 0.0
        %2167 = vmatmul.mubr.f32.gmra.mrb[0].mxu0 %v1920
        %v2168 = vpop.f32.mrb[0].mxu0
        %v2169 = vadd.f32 0.0, %v2168
        %v2170 = vpop.f32.mrb[0].mxu0
        %2171 = vmatprep.mubr.f32.mxu0 0.0
        %2172 = vmatmul.mubr.f32.gmra.mrb[0].mxu0 %v1923
        %v2173 = vpop.f32.mrb[0].mxu0
        %v2174 = vadd.f32 0.0, %v2173
        %v2175 = vpop.f32.mrb[0].mxu0
        %2176 = vmatprep.mubr.f32.mxu0 0.0
        %2177 = vmatmul.mubr.f32.gmra.mrb[0].mxu0 %v1926
        %v2178 = vpop.f32.mrb[0].mxu0
        %v2179 = vadd.f32 0.0, %v2178
        %v2180 = vpop.f32.mrb[0].mxu0
        %2181 = vmatprep.mubr.f32.mxu0 0.0
        %2182 = vmatmul.mubr.f32.gmra.mrb[0].mxu0 %v1929
        %v2183 = vpop.f32.mrb[0].mxu0
        %v2184 = vadd.f32 0.0, %v2183
        %v2185 = vpop.f32.mrb[0].mxu0
        %2186 = vmatprep.mubr.f32.mxu0 0.0
        %2187 = vmatmul.mubr.f32.gmra.mrb[0].mxu0 %v1932
        %v2188 = vpop.f32.mrb[0].mxu0
        %v2189 = vadd.f32 0.0, %v2188
        %v2190 = vpop.f32.mrb[0].mxu0
        %2191 = vmatprep.mubr.f32.mxu0 0.0
        %2192 = vmatmul.mubr.f32.gmra.mrb[0].mxu0 %v1935
        %v2193 = vpop.f32.mrb[0].mxu0
        %v2194 = vadd.f32 0.0, %v2193
        %v2195 = vpop.f32.mrb[0].mxu0
        %2196 = vmatprep.mubr.f32.mxu0 0.0
        %2197 = vmatmul.mubr.f32.gmra.mrb[0].mxu0 %v1938
        %v2198 = vpop.f32.mrb[0].mxu0
        %v2199 = vadd.f32 0.0, %v2198
        %v2200 = vpop.f32.mrb[0].mxu0
        %2201 = vmatprep.mubr.f32.mxu0 0.0
        %2202 = vmatmul.mubr.f32.gmra.mrb[0].mxu0 %v1941
        %v2203 = vpop.f32.mrb[0].mxu0
        %v2204 = vadd.f32 0.0, %v2203
        %v2205 = vpop.f32.mrb[0].mxu0
        %2206 = vmatprep.mubr.f32.mxu0 0.0
        %2207 = vmatmul.mubr.f32.gmra.mrb[0].mxu0 %v1944
        %v2208 = vpop.f32.mrb[0].mxu0
        %v2209 = vadd.f32 0.0, %v2208
        %v2210 = vpop.f32.mrb[0].mxu0
        %2211 = vmatprep.mubr.f32.mxu0 0.0
        %2212 = vmatmul.mubr.f32.gmra.mrb[0].mxu0 %v1947
        %v2213 = vpop.f32.mrb[0].mxu0
        %v2214 = vadd.f32 0.0, %v2213
        %v2215 = vpop.f32.mrb[0].mxu0
        %2216 = vmatprep.mubr.f32.mxu0 0.0
        %2217 = vmatmul.mubr.f32.gmra.mrb[0].mxu0 %v1950
        %v2218 = vpop.f32.mrb[0].mxu0
        %v2219 = vadd.f32 0.0, %v2218
        %v2220 = vpop.f32.mrb[0].mxu0
        %2221 = vmatprep.mubr.f32.mxu0 0.0
        %2222 = vmatmul.mubr.f32.gmra.mrb[0].mxu0 %v1953
        %v2223 = vpop.f32.mrb[0].mxu0
        %v2224 = vadd.f32 0.0, %v2223
        %v2225 = vpop.f32.mrb[0].mxu0
        %2226 = vmatprep.mubr.f32.mxu0 0.0
        %2227 = vmatmul.mubr.f32.gmra.mrb[0].mxu0 %v1956
        %v2228 = vpop.f32.mrb[0].mxu0
        %v2229 = vadd.f32 0.0, %v2228
        %v2230 = vpop.f32.mrb[0].mxu0
        %2231 = vmatprep.mubr.f32.mxu0 0.0
        %2232 = vmatmul.mubr.f32.gmra.mrb[0].mxu0 %v1959
        %v2233 = vpop.f32.mrb[0].mxu0
        %v2234 = vadd.f32 0.0, %v2233
        %v2235 = vpop.f32.mrb[0].mxu0
        %2236 = vmatprep.mubr.f32.mxu0 0.0
        %2237 = vmatmul.mubr.f32.gmra.mrb[0].mxu0 %v1962
        %v2238 = vpop.f32.mrb[0].mxu0
        %v2239 = vadd.f32 0.0, %v2238
        %v2240 = vpop.f32.mrb[0].mxu0
        %2241 = vmatprep.mubr.f32.mxu0 0.0
        %2242 = vmatmul.mubr.f32.gmra.mrb[0].mxu0 %v1965
        %v2243 = vpop.f32.mrb[0].mxu0
        %v2244 = vadd.f32 0.0, %v2243
        %v2245 = vpop.f32.mrb[0].mxu0
        %2246 = vmatprep.mubr.f32.mxu0 0.0
        %2247 = vmatmul.mubr.f32.gmra.mrb[0].mxu0 %v1968
        %v2248 = vpop.f32.mrb[0].mxu0
        %v2249 = vadd.f32 0.0, %v2248
        %v2250 = vpop.f32.mrb[0].mxu0
        %2251 = vmatprep.mubr.f32.mxu0 0.0
        %2252 = vmatmul.mubr.f32.gmra.mrb[0].mxu0 %v1971
        %v2253 = vpop.f32.mrb[0].mxu0
        %v2254 = vadd.f32 0.0, %v2253
        %v2255 = vpop.f32.mrb[0].mxu0
        %2256 = vmatprep.mubr.f32.mxu0 0.0
        %2257 = vmatmul.mubr.f32.gmra.mrb[0].mxu0 %v1974
        %v2258 = vpop.f32.mrb[0].mxu0
        %v2259 = vadd.f32 0.0, %v2258
        %v2260 = vpop.f32.mrb[0].mxu0
        %2261 = vmatprep.mubr.f32.mxu0 0.0
        %2262 = vmatmul.mubr.f32.gmra.mrb[0].mxu0 %v1977
        %v2263 = vpop.f32.mrb[0].mxu0
        %v2264 = vadd.f32 0.0, %v2263
        %v2265 = vpop.f32.mrb[0].mxu0
        %2266 = vmatprep.mubr.f32.mxu0 0.0
        %2267 = vmatmul.mubr.f32.gmra.mrb[0].mxu0 %v1980
        %v2268 = vpop.f32.mrb[0].mxu0
        %v2269 = vadd.f32 0.0, %v2268
        %v2270 = vpop.f32.mrb[0].mxu0
        %2271 = vmatprep.mubr.f32.mxu0 0.0
        %2272 = vmatmul.mubr.f32.gmra.mrb[0].mxu0 %v1983
        %v2273 = vpop.f32.mrb[0].mxu0
        %v2274 = vadd.f32 0.0, %v2273
        %v2275 = vpop.f32.mrb[0].mxu0
        %2276 = vmatprep.mubr.f32.mxu0 0.0
        %2277 = vmatmul.mubr.f32.gmra.mrb[0].mxu0 %v1986
        %v2278 = vpop.f32.mrb[0].mxu0
        %v2279 = vadd.f32 0.0, %v2278
        %v2280 = vpop.f32.mrb[0].mxu0
        %2281 = vmatprep.mubr.f32.mxu0 0.0
        %2282 = vmatmul.mubr.f32.gmra.mrb[0].mxu0 %v1989
        %v2283 = vpop.f32.mrb[0].mxu0
        %v2284 = vadd.f32 0.0, %v2283
        %v2285 = vpop.f32.mrb[0].mxu0
        %2286 = vmatprep.mubr.f32.mxu0 0.0
        %2287 = vmatmul.mubr.f32.gmra.mrb[0].mxu0 %v1992
        %v2288 = vpop.f32.mrb[0].mxu0
        %v2289 = vadd.f32 0.0, %v2288
        %v2290 = vpop.f32.mrb[0].mxu0
        %2291 = vmatprep.mubr.f32.mxu0 0.0
        %2292 = vmatmul.mubr.f32.gmra.mrb[0].mxu0 %v1995
        %v2293 = vpop.f32.mrb[0].mxu0
        %v2294 = vadd.f32 0.0, %v2293
        %v2295 = vpop.f32.mrb[0].mxu0
        %2296 = vmatprep.mubr.f32.mxu0 0.0
        %2297 = vmatmul.mubr.f32.gmra.mrb[0].mxu0 %v1998
        %v2298 = vpop.f32.mrb[0].mxu0
        %v2299 = vadd.f32 0.0, %v2298
        %v2300 = vpop.f32.mrb[0].mxu0
        %2301 = vmatprep.mubr.f32.mxu0 0.0
        %2302 = vmatmul.mubr.f32.gmra.mrb[0].mxu0 %v2001
        %v2303 = vpop.f32.mrb[0].mxu0
        %v2304 = vadd.f32 0.0, %v2303
        %v2305 = vpop.f32.mrb[0].mxu0
        %2306 = vmatprep.mubr.f32.mxu0 0.0
        %2307 = vmatmul.mubr.f32.gmra.mrb[0].mxu0 %v2004
        %v2308 = vpop.f32.mrb[0].mxu0
        %v2309 = vadd.f32 0.0, %v2308
        %v2310 = vpop.f32.mrb[0].mxu0
        %2311 = vmatprep.mubr.f32.mxu0 0.0
        %2312 = vmatmul.mubr.f32.gmra.mrb[0].mxu0 %v2007
        %v2313 = vpop.f32.mrb[0].mxu0
        %v2314 = vadd.f32 0.0, %v2313
        %v2315 = vpop.f32.mrb[0].mxu0
        %2316 = vmatprep.mubr.f32.mxu0 0.0
        %2317 = vmatmul.mubr.f32.gmra.mrb[0].mxu0 %v2010
        %v2318 = vpop.f32.mrb[0].mxu0
        %v2319 = vadd.f32 0.0, %v2318
        %v2320 = vpop.f32.mrb[0].mxu0
        %2321 = vmatprep.mubr.f32.mxu0 0.0
        %2322 = vmatmul.mubr.f32.gmra.mrb[0].mxu0 %v2013
        %v2323 = vpop.f32.mrb[0].mxu0
        %v2324 = vadd.f32 0.0, %v2323
        %v2325 = vpop.f32.mrb[0].mxu0
        %2326 = vmatprep.mubr.f32.mxu0 0.0
        %2327 = vmatmul.mubr.f32.gmra.mrb[0].mxu0 %v2016
        %v2328 = vpop.f32.mrb[0].mxu0
        %v2329 = vadd.f32 0.0, %v2328
        %v2330 = vpop.f32.mrb[0].mxu0
        %2331 = vmatprep.mubr.f32.mxu0 0.0
        %2332 = vmatmul.mubr.f32.gmra.mrb[0].mxu0 %v2019
        %v2333 = vpop.f32.mrb[0].mxu0
        %v2334 = vadd.f32 0.0, %v2333
        %v2335 = vpop.f32.mrb[0].mxu0
        %2336 = vmatprep.mubr.f32.mxu0 0.0
        %2337 = vmatmul.mubr.f32.gmra.mrb[0].mxu0 %v2022
        %v2338 = vpop.f32.mrb[0].mxu0
        %v2339 = vadd.f32 0.0, %v2338
        %v2340 = vpop.f32.mrb[0].mxu0
        %2341 = vmatprep.mubr.f32.mxu0 0.0
        %2342 = vmatmul.mubr.f32.gmra.mrb[0].mxu0 %v2025
        %v2343 = vpop.f32.mrb[0].mxu0
        %v2344 = vadd.f32 0.0, %v2343
        %v2345 = vpop.f32.mrb[0].mxu0
        %2346 = vdwg.mxu0
        %v2347 = vadd.f32 %v1768, %v2094
        %v2348 = vadd.f32 %v1769, %v2099
        %v2349 = vadd.f32 %v1770, %v2104
        %v2350 = vadd.f32 %v1771, %v2109
        %v2351 = vadd.f32 %v1772, %v2114
        %v2352 = vadd.f32 %v1773, %v2119
        %v2353 = vadd.f32 %v1774, %v2124
        %v2354 = vadd.f32 %v1775, %v2129
        %v2355 = vadd.f32 %v1776, %v2134
        %v2356 = vadd.f32 %v1777, %v2139
        %v2357 = vadd.f32 %v1778, %v2144
        %v2358 = vadd.f32 %v1779, %v2149
        %v2359 = vadd.f32 %v1780, %v2154
        %v2360 = vadd.f32 %v1781, %v2159
        %v2361 = vadd.f32 %v1782, %v2164
        %v2362 = vadd.f32 %v1783, %v2169
        %v2363 = vadd.f32 %v1784, %v2174
        %v2364 = vadd.f32 %v1785, %v2179
        %v2365 = vadd.f32 %v1786, %v2184
        %v2366 = vadd.f32 %v1787, %v2189
        %v2367 = vadd.f32 %v1788, %v2194
        %v2368 = vadd.f32 %v1789, %v2199
        %v2369 = vadd.f32 %v1790, %v2204
        %v2370 = vadd.f32 %v1791, %v2209
        %v2371 = vadd.f32 %v1792, %v2214
        %v2372 = vadd.f32 %v1793, %v2219
        %v2373 = vadd.f32 %v1794, %v2224
        %v2374 = vadd.f32 %v1795, %v2229
        %v2375 = vadd.f32 %v1796, %v2234
        %v2376 = vadd.f32 %v1797, %v2239
        %v2377 = vadd.f32 %v1798, %v2244
        %v2378 = vadd.f32 %v1799, %v2249
        %v2379 = vadd.f32 %v1800, %v2254
        %v2380 = vadd.f32 %v1801, %v2259
        %v2381 = vadd.f32 %v1802, %v2264
        %v2382 = vadd.f32 %v1803, %v2269
        %v2383 = vadd.f32 %v1804, %v2274
        %v2384 = vadd.f32 %v1805, %v2279
        %v2385 = vadd.f32 %v1806, %v2284
        %v2386 = vadd.f32 %v1807, %v2289
        %v2387 = vadd.f32 %v1808, %v2294
        %v2388 = vadd.f32 %v1809, %v2299
        %v2389 = vadd.f32 %v1810, %v2304
        %v2390 = vadd.f32 %v1811, %v2309
        %v2391 = vadd.f32 %v1812, %v2314
        %v2392 = vadd.f32 %v1813, %v2319
        %v2393 = vadd.f32 %v1814, %v2324
        %v2394 = vadd.f32 %v1815, %v2329
        %v2395 = vadd.f32 %v1816, %v2334
        %v2396 = vadd.f32 %v1817, %v2339
        %v2397 = vadd.f32 %v1818, %v2344
        %v2398 = vld [vmem:[%s2] sm:$0x1]
        %v2400 = vlaneseq
        %v2401 = vshrl.u32 %v2400, 7
        %v2402 = vsub.s32 0, %v2401
        %v2403 = vrot.slane %v2398, %v2402
        %v2405 = vadd.f32 %v2347, %v2403
        %v2406 = vadd.f32 %v2348, %v2403
        %v2407 = vadd.f32 %v2349, %v2403
        %v2408 = vadd.f32 %v2350, %v2403
        %v2409 = vadd.f32 %v2351, %v2403
        %v2410 = vadd.f32 %v2352, %v2403
        %v2411 = vadd.f32 %v2353, %v2403
        %v2412 = vadd.f32 %v2354, %v2403
        %v2413 = vadd.f32 %v2355, %v2403
        %v2414 = vadd.f32 %v2356, %v2403
        %v2415 = vadd.f32 %v2357, %v2403
        %v2416 = vadd.f32 %v2358, %v2403
        %v2417 = vadd.f32 %v2359, %v2403
        %v2418 = vadd.f32 %v2360, %v2403
        %v2419 = vadd.f32 %v2361, %v2403
        %v2420 = vadd.f32 %v2362, %v2403
        %v2421 = vadd.f32 %v2363, %v2403
        %v2422 = vadd.f32 %v2364, %v2403
        %v2423 = vadd.f32 %v2365, %v2403
        %v2424 = vadd.f32 %v2366, %v2403
        %v2425 = vadd.f32 %v2367, %v2403
        %v2426 = vadd.f32 %v2368, %v2403
        %v2427 = vadd.f32 %v2369, %v2403
        %v2428 = vadd.f32 %v2370, %v2403
        %v2429 = vadd.f32 %v2371, %v2403
        %v2430 = vadd.f32 %v2372, %v2403
        %v2431 = vadd.f32 %v2373, %v2403
        %v2432 = vadd.f32 %v2374, %v2403
        %v2433 = vadd.f32 %v2375, %v2403
        %v2434 = vadd.f32 %v2376, %v2403
        %v2435 = vadd.f32 %v2377, %v2403
        %v2436 = vadd.f32 %v2378, %v2403
        %v2437 = vadd.f32 %v2379, %v2403
        %v2438 = vadd.f32 %v2380, %v2403
        %v2439 = vadd.f32 %v2381, %v2403
        %v2440 = vadd.f32 %v2382, %v2403
        %v2441 = vadd.f32 %v2383, %v2403
        %v2442 = vadd.f32 %v2384, %v2403
        %v2443 = vadd.f32 %v2385, %v2403
        %v2444 = vadd.f32 %v2386, %v2403
        %v2445 = vadd.f32 %v2387, %v2403
        %v2446 = vadd.f32 %v2388, %v2403
        %v2447 = vadd.f32 %v2389, %v2403
        %v2448 = vadd.f32 %v2390, %v2403
        %v2449 = vadd.f32 %v2391, %v2403
        %v2450 = vadd.f32 %v2392, %v2403
        %v2451 = vadd.f32 %v2393, %v2403
        %v2452 = vadd.f32 %v2394, %v2403
        %v2453 = vadd.f32 %v2395, %v2403
        %v2454 = vadd.f32 %v2396, %v2403
        %v2455 = vadd.f32 %v2397, %v2403
        %2456 = vst [vmem:[%s177] sm:$0xff] %v2405
        %2457 = vst [vmem:[%s177 + $0x8] sm:$0xff] %v2406
        %2458 = vst [vmem:[%s177 + $0x10] sm:$0xff] %v2407
        %2459 = vst [vmem:[%s177 + $0x18] sm:$0xff] %v2408
        %2460 = vst [vmem:[%s177 + $0x20] sm:$0xff] %v2409
        %2461 = vst [vmem:[%s177 + $0x28] sm:$0xff] %v2410
        %2462 = vst [vmem:[%s177 + $0x30] sm:$0xff] %v2411
        %2463 = vst [vmem:[%s177 + $0x38] sm:$0xff] %v2412
        %2464 = vst [vmem:[%s177 + $0x40] sm:$0xff] %v2413
        %2465 = vst [vmem:[%s177 + $0x48] sm:$0xff] %v2414
        %2466 = vst [vmem:[%s177 + $0x50] sm:$0xff] %v2415
        %2467 = vst [vmem:[%s177 + $0x58] sm:$0xff] %v2416
        %2468 = vst [vmem:[%s177 + $0x60] sm:$0xff] %v2417
        %2469 = vst [vmem:[%s177 + $0x68] sm:$0xff] %v2418
        %2470 = vst [vmem:[%s177 + $0x70] sm:$0xff] %v2419
        %2471 = vst [vmem:[%s177 + $0x78] sm:$0xff] %v2420
        %2472 = vst [vmem:[%s177 + $0x80] sm:$0xff] %v2421
        %2473 = vst [vmem:[%s177 + $0x88] sm:$0xff] %v2422
        %2474 = vst [vmem:[%s177 + $0x90] sm:$0xff] %v2423
        %2475 = vst [vmem:[%s177 + $0x98] sm:$0xff] %v2424
        %2476 = vst [vmem:[%s177 + $0xa0] sm:$0xff] %v2425
        %2477 = vst [vmem:[%s177 + $0xa8] sm:$0xff] %v2426
        %2478 = vst [vmem:[%s177 + $0xb0] sm:$0xff] %v2427
        %2479 = vst [vmem:[%s177 + $0xb8] sm:$0xff] %v2428
        %2480 = vst [vmem:[%s177 + $0xc0] sm:$0xff] %v2429
        %2481 = vst [vmem:[%s177 + $0xc8] sm:$0xff] %v2430
        %2482 = vst [vmem:[%s177 + $0xd0] sm:$0xff] %v2431
        %2483 = vst [vmem:[%s177 + $0xd8] sm:$0xff] %v2432
        %2484 = vst [vmem:[%s177 + $0xe0] sm:$0xff] %v2433
        %2485 = vst [vmem:[%s177 + $0xe8] sm:$0xff] %v2434
        %2486 = vst [vmem:[%s177 + $0xf0] sm:$0xff] %v2435
        %2487 = vst [vmem:[%s177 + $0xf8] sm:$0xff] %v2436
        %2488 = vst [vmem:[%s177 + $0x100] sm:$0xff] %v2437
        %2489 = vst [vmem:[%s177 + $0x108] sm:$0xff] %v2438
        %2490 = vst [vmem:[%s177 + $0x110] sm:$0xff] %v2439
        %2491 = vst [vmem:[%s177 + $0x118] sm:$0xff] %v2440
        %2492 = vst [vmem:[%s177 + $0x120] sm:$0xff] %v2441
        %2493 = vst [vmem:[%s177 + $0x128] sm:$0xff] %v2442
        %2494 = vst [vmem:[%s177 + $0x130] sm:$0xff] %v2443
        %2495 = vst [vmem:[%s177 + $0x138] sm:$0xff] %v2444
        %2496 = vst [vmem:[%s177 + $0x140] sm:$0xff] %v2445
        %2497 = vst [vmem:[%s177 + $0x148] sm:$0xff] %v2446
        %2498 = vst [vmem:[%s177 + $0x150] sm:$0xff] %v2447
        %2499 = vst [vmem:[%s177 + $0x158] sm:$0xff] %v2448
        %2500 = vst [vmem:[%s177 + $0x160] sm:$0xff] %v2449
        %2501 = vst [vmem:[%s177 + $0x168] sm:$0xff] %v2450
        %2502 = vst [vmem:[%s177 + $0x170] sm:$0xff] %v2451
        %2503 = vst [vmem:[%s177 + $0x178] sm:$0xff] %v2452
        %2504 = vst [vmem:[%s177 + $0x180] sm:$0xff] %v2453
        %2505 = vst [vmem:[%s177 + $0x188] sm:$0xff] %v2454
        %2506 = vst [vmem:[%s177 + $0x190] sm:$0xff] %v2455
        %s2507 = sand.u32 %s107, 1
        %s2508 = scalar_lea.sflag [#allocation3], %s2507
        %s2509 = sand.u32 %s107, 1
        %s2510 = smul.addr %s2509, 408
        %s2511 = scalar_lea.vmem [#allocation2], %s2510
        // Predicated region
        $region33: #{tpu_custom_call.1} parent=31 // pred_check
          %p2512 = pneg %p117
        $region34: #{tpu_custom_call.1} parent=31 // pred_check_branch
          %2514 = sbr.rel (%p2512) target = $region36
        $region35: #{tpu_custom_call.1} parent=31 // pred_region
          %s2515 = smul.u32 51, %s22
          %s2517 = ssub.s32 6528, 6528
          %2518 = vsyncadd %s2508, %s2517
          %s2519 = smul.addr %s21, 51
          %s2520 = sadd.s32 %s2515, %s2519
          %s2521 = smul.addr %s2520, 128
          %s2522 = scalar_lea.hbm %s3, %s2521
          %s2523 = sshll.u32 %s2511, 4
          %s2524 = int_to_ptr.vmem [resolvable:$true] %s2523
          %2529 = dma.vmem_to_hbm [thread:$0]  %s2524, 6528, %s2522, %s2508, 128, 128, 8
        $region36: #{tpu_custom_call.1} parent=31 // pred_fallthru
          _
      $region32: #{tpu_custom_call.1} parent=5 // pred_fallthru
        _
      %p2530 = scmp.le.s32.totalorder 2, %s12
      // Predicated region
      $region37: #{tpu_custom_call.1} parent=5 // pred_check
        %p2531 = pneg %p2530
      $region38: #{tpu_custom_call.1} parent=5 // pred_check_branch
        %2533 = sbr.rel (%p2531) target = $region40
      $region39: #{tpu_custom_call.1} parent=5 // pred_region
        %s2534 = ssub.s32 %s12, 2
        // Predicated region
        $region41: #{tpu_custom_call.1} parent=39 // pred_check
          %p2535 = pneg %p123
        $region42: #{tpu_custom_call.1} parent=39 // pred_check_branch
          %2537 = sbr.rel (%p2535) target = $region44
        $region43: #{tpu_custom_call.1} parent=39 // pred_region
          %s2538 = sand.u32 %s108, 1
          %s2539 = scalar_lea.sflag [#allocation3], %s2538
          %s2540 = sand.u32 %s108, 1
          %s2541 = smul.addr %s2540, 408
          %s2542 = scalar_lea.vmem [#allocation2], %s2541
          %2543 = dma.done %s2539, 6528
        $region44: #{tpu_custom_call.1} parent=39 // pred_fallthru
          _
      $region40: #{tpu_custom_call.1} parent=5 // pred_fallthru
        _
    $region6: #{tpu_custom_call.1} parent=1 // loop_footer
      %s16 = sadd.s32 1, %s12
    $region7: #{tpu_custom_call.1} parent=1 // loop_footer_branch
      %11 = sbr.rel target = $region3
    $region8: #{tpu_custom_call.1} parent=1 // loop_exit
      _
    %2544 = vsyncpa [#allocation3], 1
    %s2545 = scalar_lea.sflag [#allocation3], 1
    %2546 = vsyncpa %s2545, 1

</llo_original>
